<compile_context>
chip_gen: v7x
topology: tpu7x:2x2x1
jax: 0.10.0
libtpu: 0.0.40
codegen_flags: <defaults>
</compile_context>

<pallas_src>
import math

import jax
import jax.numpy as jnp
from jax import lax
from jax.experimental import pallas as pl
from jax.experimental.pallas import tpu as pltpu


_MASK_NEG = -1e30  # finite "minus infinity" for padded key columns


def _layer_norm_f32(x, gamma, beta, eps):
    mu = jnp.mean(x, axis=-1, keepdims=True)
    var = jnp.mean(jnp.square(x - mu), axis=-1, keepdims=True)
    return (x - mu) * lax.rsqrt(var + eps) * gamma + beta


def _make_kernel(d_model, n_head, seq_len, block_l, eps, has_mask):
    D, H = d_model, n_head
    hd = D // H
    L, TL = seq_len, block_l

    def kernel(*refs):
        if has_mask:
            (x_ref, ln1_g, ln1_b, w_q, b_q, w_k, b_k, w_v, b_v,
             w_o, b_o, ln2_g, ln2_b, w_fc, b_fc, w_pr, b_pr,
             mask_ref, o_ref, xn_s, k_s, v_s) = refs
        else:
            (x_ref, ln1_g, ln1_b, w_q, b_q, w_k, b_k, w_v, b_v,
             w_o, b_o, ln2_g, ln2_b, w_fc, b_fc, w_pr, b_pr,
             o_ref, xn_s, k_s, v_s) = refs
            mask_ref = None

        li = pl.program_id(1)
        row0 = pl.multiple_of(li * TL, TL)

        # ---- Once per batch element (li == 0): full-sequence LayerNorm-1 and
        #      K/V projections, cached head-major in VMEM scratch. ----
        @pl.when(li == 0)
        def _():
            x_full = x_ref[...].astype(jnp.float32)                    # (L, D)
            xn = _layer_norm_f32(x_full, ln1_g[0], ln1_b[0], eps)
            xn_b = xn.astype(jnp.bfloat16)
            xn_s[...] = xn_b
            k = jnp.dot(xn_b, w_k[...],
                        preferred_element_type=jnp.float32) + b_k[0]
            v = jnp.dot(xn_b, w_v[...],
                        preferred_element_type=jnp.float32) + b_v[0]
            # head-major cache: one relayout per batch instead of per tile
            k_s[...] = jnp.transpose(k.reshape(L, H, hd), (1, 0, 2)).astype(jnp.bfloat16)
            v_s[...] = jnp.transpose(v.reshape(L, H, hd), (1, 0, 2)).astype(jnp.bfloat16)

        # ---- Q projection for this tile; LN1 output reused from cache.
        #      (1/sqrt(hd) already folded into w_q / b_q.) ----
        xn_q = xn_s[pl.ds(row0, TL), :]                                # (TL, D) bf16
        q = jnp.dot(xn_q, w_q[...],
                    preferred_element_type=jnp.float32) + b_q[0]
        qh = jnp.transpose(q.reshape(TL, H, hd), (1, 0, 2)).astype(jnp.bfloat16)

        kh = k_s[...]                                                  # (H, L, hd) bf16
        vh = v_s[...]

        s = jnp.einsum("hld,hmd->hlm", qh, kh,
                       preferred_element_type=jnp.float32)             # (H,TL,L) f32
        if mask_ref is not None:
            s = s + mask_ref[...][None, :, :].astype(jnp.float32)

        m = jnp.max(s, axis=-1, keepdims=True)
        e = jnp.exp(s - m)                                             # unnormalized
        denom = jnp.sum(e, axis=-1, keepdims=True)                     # (H, TL, 1)

        ctx = jnp.einsum("hlm,hmd->hld", e.astype(jnp.bfloat16), vh,
                         preferred_element_type=jnp.float32)           # (H, TL, hd)
        # Denominator applied after PV: (H,TL,hd) multiply, not (H,TL,L).
        ctx = ctx * pl.reciprocal(denom, approx=True)
        ctx = jnp.transpose(ctx, (1, 0, 2)).reshape(TL, D)

        attn = jnp.dot(ctx.astype(jnp.bfloat16), w_o[...],
                       preferred_element_type=jnp.float32) + b_o[0]
        x_tile = x_ref[pl.ds(row0, TL), :].astype(jnp.float32)
        x1 = x_tile + attn                                             # residual 1

        # ---- LayerNorm 2 + MLP (QuickGELU) ----
        x1n = _layer_norm_f32(x1, ln2_g[0], ln2_b[0], eps)
        h1 = jnp.dot(x1n.astype(jnp.bfloat16), w_fc[...],
                     preferred_element_type=jnp.float32) + b_fc[0]
        h1 = h1 * jax.nn.sigmoid(1.702 * h1)                           # QuickGELU f32
        mlp = jnp.dot(h1.astype(jnp.bfloat16), w_pr[...],
                      preferred_element_type=jnp.float32) + b_pr[0]

        o_ref[...] = (x1 + mlp).astype(o_ref.dtype)                    # residual 2

    return kernel


def _vmem_capacity_bytes():
    try:
        return int(pltpu.get_tpu_info().vmem_capacity_bytes)
    except Exception:
        return 128 * 1024 * 1024


def _pick_tiling(L, vmem_cap):
    """Returns (block_l, padded_L)."""
    big = vmem_cap > (64 << 20)           # 128 MiB parts (v5e / v6e)
    cap = 256 if big else 128             # 64 MiB parts (v7x): keep TL <= 128
    if big and L % 256 == 0:
        return 256, L
    if L % 128 == 0:
        return 128, L
    if L <= cap:
        return L, L                       # single tile, no padding needed
    # long, non-128-multiple sequence: pad to a 128 multiple + key mask
    L_pad = ((L + 127) // 128) * 128
    return 128, L_pad


def _build_and_call(x_nld, params, mask, *, d_model, n_head, block_l, L_pad,
                    vmem_cap, single_buffer_weights):
    N, _, D = x_nld.shape
    H = n_head
    hd = D // H
    num_l = L_pad // block_l
    has_mask = mask is not None

    w_kwargs = {"pipeline_mode": pl.Buffered(1)} if single_buffer_weights else {}

    def rep(shape):   # grid-invariant weight / bias / LN block
        return pl.BlockSpec(shape, lambda b, l: tuple(0 for _ in shape), **w_kwargs)

    in_specs = [
        pl.BlockSpec((None, L_pad, D), lambda b, l: (b, 0, 0)),   # x: full seq / batch
        rep((1, D)), rep((1, D)),                                 # ln1 gamma/beta
        rep((D, D)), rep((1, D)),                                 # q proj (scale folded)
        rep((D, D)), rep((1, D)),                                 # k proj
        rep((D, D)), rep((1, D)),                                 # v proj
        rep((D, D)), rep((1, D)),                                 # out proj
        rep((1, D)), rep((1, D)),                                 # ln2 gamma/beta
        rep((D, 4 * D)), rep((1, 4 * D)),                         # c_fc
        rep((4 * D, D)), rep((1, D)),                             # c_proj
    ]
    args = [
        x_nld,
        params["ln1_g"], params["ln1_b"],
        params["w_q"], params["b_q"],
        params["w_k"], params["b_k"],
        params["w_v"], params["b_v"],
        params["w_out"], params["b_out"],
        params["ln2_g"], params["ln2_b"],
        params["w_fc"], params["b_fc"],
        params["w_pr"], params["b_pr"],
    ]
    if has_mask:
        in_specs.append(pl.BlockSpec((block_l, L_pad), lambda b, l: (l, 0)))
        args.append(mask)

    kernel = _make_kernel(d_model, n_head, L_pad, block_l, 1e-5, has_mask)

    # Generation-aware VMEM request: leave headroom on 64-MiB parts.
    vmem_limit = (48 << 20) if vmem_cap <= (64 << 20) else (100 << 20)

    # Advisory cost hint for XLA scheduling around the custom call.
    flops = int(N * (24 * L_pad * D * D + 4 * L_pad * L_pad * D))
    transcendentals = int(N * (H * L_pad * L_pad + 4 * L_pad * D))
    bytes_accessed = int(2 * x_nld.size * x_nld.dtype.itemsize
                         + sum(a.size * a.dtype.itemsize for a in args[1:]))

    out = pl.pallas_call(
        kernel,
        out_shape=jax.ShapeDtypeStruct((N, L_pad, D), x_nld.dtype),
        grid_spec=pltpu.PrefetchScalarGridSpec(
            num_scalar_prefetch=0,
            grid=(N, num_l),
            in_specs=in_specs,
            out_specs=pl.BlockSpec((None, block_l, D), lambda b, l: (b, l, 0)),
            scratch_shapes=[
                pltpu.VMEM((L_pad, D), jnp.bfloat16),       # LN1(x) cache
                pltpu.VMEM((H, L_pad, hd), jnp.bfloat16),   # K cache (head-major)
                pltpu.VMEM((H, L_pad, hd), jnp.bfloat16),   # V cache (head-major)
            ]),
        compiler_params=pltpu.CompilerParams(
            # l carries the K/V scratch cache -> "arbitrary"; batch feeds megacore.
            dimension_semantics=("parallel", "arbitrary"),
            vmem_limit_bytes=vmem_limit),
        cost_estimate=pl.CostEstimate(
            flops=flops, transcendentals=transcendentals,
            bytes_accessed=bytes_accessed),
    )(*args)
    return out


def residual_attention_block(x_lnd, params, *, d_model, n_head,
                             attn_mask=None, block_l=None):
    """x_lnd: (L, N, D) like the PyTorch module. Returns (L, N, D)."""
    L, N, D = x_lnd.shape
    assert D == d_model
    assert D % n_head == 0, "d_model must be divisible by n_head"
    x = jnp.transpose(x_lnd, (1, 0, 2))                  # -> (N, L, D)

    vmem_cap = _vmem_capacity_bytes()
    if block_l is None:
        block_l, L_pad = _pick_tiling(L, vmem_cap)
    else:
        assert L % block_l == 0
        L_pad = L

    pad = L_pad - L
    mask = None
    if attn_mask is not None or pad > 0:
        base = jnp.zeros((L_pad, L_pad), jnp.float32)
        if attn_mask is not None:
            base = base.at[:L, :L].set(jnp.asarray(attn_mask, jnp.float32))
        if pad > 0:
            base = base.at[:, L:].set(_MASK_NEG)          # mask padded keys
            x = jnp.pad(x, ((0, 0), (0, pad), (0, 0)))
        # Additive mask shipped as bf16 (halves DMA); cast to f32 in-kernel.
        mask = base.astype(jnp.bfloat16)

    try:
        out = _build_and_call(x, params, mask, d_model=d_model, n_head=n_head,
                              block_l=block_l, L_pad=L_pad, vmem_cap=vmem_cap,
                              single_buffer_weights=True)
    except Exception:
        # Fallback if this JAX build rejects pl.Buffered(1) single-buffering.
        out = _build_and_call(x, params, mask, d_model=d_model, n_head=n_head,
                              block_l=block_l, L_pad=L_pad, vmem_cap=vmem_cap,
                              single_buffer_weights=False)

    if pad > 0:
        out = out[:, :L, :]
    return jnp.transpose(out, (1, 0, 2))                 # back to (L, N, D)


def init_params(key, d_model):
    """Raw parameters in the PyTorch module's logical layout (pre-transposed)."""
    D = d_model
    ks = jax.random.split(key, 6)
    std = 0.02
    return {
        "ln1_g": jnp.ones((1, D), jnp.float32),
        "ln1_b": jnp.zeros((1, D), jnp.float32),
        "ln2_g": jnp.ones((1, D), jnp.float32),
        "ln2_b": jnp.zeros((1, D), jnp.float32),
        "w_qkv": std * jax.random.normal(ks[0], (D, 3 * D), jnp.float32),
        "b_qkv": std * jax.random.normal(ks[1], (1, 3 * D), jnp.float32),
        "w_out": std * jax.random.normal(ks[2], (D, D), jnp.float32),
        "b_out": jnp.zeros((1, D), jnp.float32),
        "w_fc": std * jax.random.normal(ks[3], (D, 4 * D), jnp.float32),
        "b_fc": std * jax.random.normal(ks[4], (1, 4 * D), jnp.float32),
        "w_pr": std * jax.random.normal(ks[5], (4 * D, D), jnp.float32),
        "b_pr": jnp.zeros((1, D), jnp.float32),
    }


def prepare_params(raw, *, d_model, n_head, weight_dtype=jnp.bfloat16):
    """One-time constant transform: split qkv, fold 1/sqrt(hd) into Q, cast
    matmul weights to bf16 (biases / LN params stay f32)."""
    D = d_model
    scale = 1.0 / math.sqrt(D // n_head)
    w_qkv = raw["w_qkv"].astype(jnp.float32)
    b_qkv = raw["b_qkv"].astype(jnp.float32)
    return {
        "ln1_g": raw["ln1_g"].astype(jnp.float32),
        "ln1_b": raw["ln1_b"].astype(jnp.float32),
        "ln2_g": raw["ln2_g"].astype(jnp.float32),
        "ln2_b": raw["ln2_b"].astype(jnp.float32),
        "w_q": (w_qkv[:, 0 * D:1 * D] * scale).astype(weight_dtype),
        "b_q": (b_qkv[:, 0 * D:1 * D] * scale).astype(jnp.float32),
        "w_k": w_qkv[:, 1 * D:2 * D].astype(weight_dtype),
        "b_k": b_qkv[:, 1 * D:2 * D].astype(jnp.float32),
        "w_v": w_qkv[:, 2 * D:3 * D].astype(weight_dtype),
        "b_v": b_qkv[:, 2 * D:3 * D].astype(jnp.float32),
        "w_out": raw["w_out"].astype(weight_dtype),
        "b_out": raw["b_out"].astype(jnp.float32),
        "w_fc": raw["w_fc"].astype(weight_dtype),
        "b_fc": raw["b_fc"].astype(jnp.float32),
        "w_pr": raw["w_pr"].astype(weight_dtype),
        "b_pr": raw["b_pr"].astype(jnp.float32),
    }


def _reference_block(x_lnd, params, *, d_model, n_head, attn_mask=None):
    """Pure-JAX reference using the SAME prepared (bf16/f32) parameters."""
    D, H = d_model, n_head
    hd = D // H
    eps = 1e-5

    def ln(v, g, b):
        mu = v.mean(-1, keepdims=True)
        var = ((v - mu) ** 2).mean(-1, keepdims=True)
        return (v - mu) * lax.rsqrt(var + eps) * g + b

    x = jnp.transpose(x_lnd, (1, 0, 2)).astype(jnp.float32)       # (N, L, D)
    N, L, _ = x.shape
    xn = ln(x, params["ln1_g"][0], params["ln1_b"][0])
    q = xn @ params["w_q"].astype(jnp.float32) + params["b_q"][0]
    k = xn @ params["w_k"].astype(jnp.float32) + params["b_k"][0]
    v = xn @ params["w_v"].astype(jnp.float32) + params["b_v"][0]
    q = q.reshape(N, L, H, hd).transpose(0, 2, 1, 3)
    k = k.reshape(N, L, H, hd).transpose(0, 2, 1, 3)
    v = v.reshape(N, L, H, hd).transpose(0, 2, 1, 3)
    s = jnp.einsum("nhld,nhmd->nhlm", q, k)
    if attn_mask is not None:
        s = s + jnp.asarray(attn_mask, jnp.float32)[None, None]
    p = jax.nn.softmax(s, axis=-1)
    ctx = jnp.einsum("nhlm,nhmd->nhld", p, v).transpose(0, 2, 1, 3).reshape(N, L, D)
    attn = ctx @ params["w_out"].astype(jnp.float32) + params["b_out"][0]
    x1 = x + attn
    x1n = ln(x1, params["ln2_g"][0], params["ln2_b"][0])
    h = x1n @ params["w_fc"].astype(jnp.float32) + params["b_fc"][0]
    h = h * jax.nn.sigmoid(1.702 * h)
    mlp = h @ params["w_pr"].astype(jnp.float32) + params["b_pr"][0]
    out = x1 + mlp
    return jnp.transpose(out, (1, 0, 2))


if __name__ == "__main__":
    d_model, n_head = 32, 4
    L, N = 8, 2

    key = jax.random.PRNGKey(0)
    kx, kp = jax.random.split(key)
    x = jax.random.normal(kx, (L, N, d_model), jnp.float32)   # (seq, batch, d)
    params = prepare_params(init_params(kp, d_model),
                            d_model=d_model, n_head=n_head)

    # CLIP-text-style causal additive mask.
    causal = jnp.where(jnp.arange(L)[None, :] > jnp.arange(L)[:, None],
                       jnp.float32(-jnp.inf), jnp.float32(0.0))

    y0 = residual_attention_block(x, params, d_model=d_model, n_head=n_head)
    y1 = residual_attention_block(x, params, d_model=d_model, n_head=n_head,
                                  attn_mask=causal)
    jax.block_until_ready((y0, y1))

    r0 = _reference_block(x, params, d_model=d_model, n_head=n_head)
    r1 = _reference_block(x, params, d_model=d_model, n_head=n_head,
                          attn_mask=causal)

    assert y0.shape == (L, N, d_model) and y1.shape == (L, N, d_model)
    assert bool(jnp.isfinite(y0).all()) and bool(jnp.isfinite(y1).all())
    assert bool(jnp.allclose(y0, r0, atol=5e-2, rtol=5e-2))
    assert bool(jnp.allclose(y1, r1, atol=5e-2, rtol=5e-2))
    print("KERNEL_OK")
</pallas_src>

<mosaic_0001>
module attributes {stable_mosaic.version = 11 : i64} {
  func.func @kernel(%arg0: i32, %arg1: i32, %arg2: memref<1x8x32xf32, #tpu.memory_space<vmem>>, %arg3: memref<1x32xf32, #tpu.memory_space<vmem>>, %arg4: memref<1x32xf32, #tpu.memory_space<vmem>>, %arg5: memref<32x32xbf16, #tpu.memory_space<vmem>>, %arg6: memref<1x32xf32, #tpu.memory_space<vmem>>, %arg7: memref<32x32xbf16, #tpu.memory_space<vmem>>, %arg8: memref<1x32xf32, #tpu.memory_space<vmem>>, %arg9: memref<32x32xbf16, #tpu.memory_space<vmem>>, %arg10: memref<1x32xf32, #tpu.memory_space<vmem>>, %arg11: memref<32x32xbf16, #tpu.memory_space<vmem>>, %arg12: memref<1x32xf32, #tpu.memory_space<vmem>>, %arg13: memref<1x32xf32, #tpu.memory_space<vmem>>, %arg14: memref<1x32xf32, #tpu.memory_space<vmem>>, %arg15: memref<32x128xbf16, #tpu.memory_space<vmem>>, %arg16: memref<1x128xf32, #tpu.memory_space<vmem>>, %arg17: memref<128x32xbf16, #tpu.memory_space<vmem>>, %arg18: memref<1x32xf32, #tpu.memory_space<vmem>>, %arg19: memref<1x8x32xf32, #tpu.memory_space<vmem>>, %arg20: memref<8x32xbf16, #tpu.memory_space<vmem>>, %arg21: memref<4x8x8xbf16, #tpu.memory_space<vmem>>, %arg22: memref<4x8x8xbf16, #tpu.memory_space<vmem>>) attributes {dimension_semantics = [#tpu.dimension_semantics<parallel>, #tpu.dimension_semantics<arbitrary>], iteration_bounds = array<i64: 2, 1>, scalar_prefetch = 0 : i64, scratch_operands = 3 : i64, tpu.core_type = #tpu.core_type<tc>, window_params = [{transform_indices = @transform_0, window_bounds = array<i64: 1, 8, 32>}, {pipeline_mode = #tpu.pipeline_mode<synchronous>, transform_indices = @transform_1, window_bounds = array<i64: 1, 32>}, {pipeline_mode = #tpu.pipeline_mode<synchronous>, transform_indices = @transform_2, window_bounds = array<i64: 1, 32>}, {pipeline_mode = #tpu.pipeline_mode<synchronous>, transform_indices = @transform_3, window_bounds = array<i64: 32, 32>}, {pipeline_mode = #tpu.pipeline_mode<synchronous>, transform_indices = @transform_4, window_bounds = array<i64: 1, 32>}, {pipeline_mode = #tpu.pipeline_mode<synchronous>, transform_indices = @transform_5, window_bounds = array<i64: 32, 32>}, {pipeline_mode = #tpu.pipeline_mode<synchronous>, transform_indices = @transform_6, window_bounds = array<i64: 1, 32>}, {pipeline_mode = #tpu.pipeline_mode<synchronous>, transform_indices = @transform_7, window_bounds = array<i64: 32, 32>}, {pipeline_mode = #tpu.pipeline_mode<synchronous>, transform_indices = @transform_8, window_bounds = array<i64: 1, 32>}, {pipeline_mode = #tpu.pipeline_mode<synchronous>, transform_indices = @transform_9, window_bounds = array<i64: 32, 32>}, {pipeline_mode = #tpu.pipeline_mode<synchronous>, transform_indices = @transform_10, window_bounds = array<i64: 1, 32>}, {pipeline_mode = #tpu.pipeline_mode<synchronous>, transform_indices = @transform_11, window_bounds = array<i64: 1, 32>}, {pipeline_mode = #tpu.pipeline_mode<synchronous>, transform_indices = @transform_12, window_bounds = array<i64: 1, 32>}, {pipeline_mode = #tpu.pipeline_mode<synchronous>, transform_indices = @transform_13, window_bounds = array<i64: 32, 128>}, {pipeline_mode = #tpu.pipeline_mode<synchronous>, transform_indices = @transform_14, window_bounds = array<i64: 1, 128>}, {pipeline_mode = #tpu.pipeline_mode<synchronous>, transform_indices = @transform_15, window_bounds = array<i64: 128, 32>}, {pipeline_mode = #tpu.pipeline_mode<synchronous>, transform_indices = @transform_16, window_bounds = array<i64: 1, 32>}, {transform_indices = @transform_17, window_bounds = array<i64: 1, 8, 32>}]} {
    %c8_i32 = arith.constant 8 : i32
    %0 = arith.muli %arg1, %c8_i32 : i32
    %1 = tpu.assume_multiple %0, 8 : i32
    %c0_i32 = arith.constant 0 : i32
    %2 = arith.cmpi eq, %arg1, %c0_i32 : i32
    %3 = arith.extui %2 : i1 to i32
    %c0_i32_0 = arith.constant 0 : i32
    %4 = arith.cmpi ne, %3, %c0_i32_0 : i32
    scf.if %4 {
      %c0_46 = arith.constant 0 : index
      %c0_47 = arith.constant 0 : index
      %c0_48 = arith.constant 0 : index
      %102 = vector.load %arg2[%c0_46, %c0_47, %c0_48] : memref<1x8x32xf32, #tpu.memory_space<vmem>>, vector<1x8x32xf32>
      %103 = vector.shape_cast %102 : vector<1x8x32xf32> to vector<8x32xf32>
      %c0_49 = arith.constant 0 : index
      %c0_50 = arith.constant 0 : index
      %104 = vector.load %arg3[%c0_49, %c0_50] : memref<1x32xf32, #tpu.memory_space<vmem>>, vector<1x32xf32>
      %105 = vector.shape_cast %104 : vector<1x32xf32> to vector<32xf32>
      %c0_51 = arith.constant 0 : index
      %c0_52 = arith.constant 0 : index
      %106 = vector.load %arg4[%c0_51, %c0_52] : memref<1x32xf32, #tpu.memory_space<vmem>>, vector<1x32xf32>
      %107 = vector.shape_cast %106 : vector<1x32xf32> to vector<32xf32>
      %cst_53 = arith.constant dense<0.000000e+00> : vector<8xf32>
      %108 = vector.multi_reduction <add>, %103, %cst_53 [1] : vector<8x32xf32> to vector<8xf32>
      %109 = vector.shape_cast %108 : vector<8xf32> to vector<8x1xf32>
      %cst_54 = arith.constant 3.200000e+01 : f32
      %110 = vector.broadcast %cst_54 : f32 to vector<8x1xf32>
      %111 = arith.divf %109, %110 : vector<8x1xf32>
      %112 = vector.broadcast %111 : vector<8x1xf32> to vector<8x32xf32>
      %113 = arith.subf %103, %112 : vector<8x32xf32>
      %114 = arith.mulf %113, %113 : vector<8x32xf32>
      %cst_55 = arith.constant dense<0.000000e+00> : vector<8xf32>
      %115 = vector.multi_reduction <add>, %114, %cst_55 [1] : vector<8x32xf32> to vector<8xf32>
      %116 = vector.shape_cast %115 : vector<8xf32> to vector<8x1xf32>
      %cst_56 = arith.constant 3.200000e+01 : f32
      %117 = vector.broadcast %cst_56 : f32 to vector<8x1xf32>
      %118 = arith.divf %116, %117 : vector<8x1xf32>
      %119 = vector.broadcast %111 : vector<8x1xf32> to vector<8x32xf32>
      %120 = arith.subf %103, %119 : vector<8x32xf32>
      %cst_57 = arith.constant 9.99999974E-6 : f32
      %121 = vector.broadcast %cst_57 : f32 to vector<8x1xf32>
      %122 = arith.addf %118, %121 : vector<8x1xf32>
      %123 = math.rsqrt %122 : vector<8x1xf32>
      %124 = vector.broadcast %123 : vector<8x1xf32> to vector<8x32xf32>
      %125 = arith.mulf %120, %124 : vector<8x32xf32>
      %126 = vector.shape_cast %105 : vector<32xf32> to vector<1x32xf32>
      %127 = vector.broadcast %126 : vector<1x32xf32> to vector<8x32xf32>
      %128 = arith.mulf %125, %127 : vector<8x32xf32>
      %129 = vector.shape_cast %107 : vector<32xf32> to vector<1x32xf32>
      %130 = vector.broadcast %129 : vector<1x32xf32> to vector<8x32xf32>
      %131 = arith.addf %128, %130 : vector<8x32xf32>
      %132 = arith.truncf %131 : vector<8x32xf32> to vector<8x32xbf16>
      %c0_58 = arith.constant 0 : index
      %c0_59 = arith.constant 0 : index
      %133 = vector.load %arg20[%c0_58, %c0_59] : memref<8x32xbf16, #tpu.memory_space<vmem>>, vector<8x32xbf16>
      tpu.vector_store %arg20[%c0_58, %c0_59], %132 {strides = array<i32>} : memref<8x32xbf16, #tpu.memory_space<vmem>>, vector<8x32xbf16>,
      %c0_60 = arith.constant 0 : index
      %c0_61 = arith.constant 0 : index
      %134 = vector.load %arg7[%c0_60, %c0_61] : memref<32x32xbf16, #tpu.memory_space<vmem>>, vector<32x32xbf16>
      %cst_62 = arith.constant dense<0.000000e+00> : vector<8x32xf32>
      %135 = tpu.matmul %132, %134, %cst_62 {dimension_numbers = #tpu.dot_dimension_numbers<[1], [0], [0], [1], [0, 0, 1, 1], [], []>} : vector<8x32xbf16>, vector<32x32xbf16>, vector<8x32xf32> -> vector<8x32xf32>
      %c0_63 = arith.constant 0 : index
      %c0_64 = arith.constant 0 : index
      %136 = vector.load %arg8[%c0_63, %c0_64] : memref<1x32xf32, #tpu.memory_space<vmem>>, vector<1x32xf32>
      %137 = vector.shape_cast %136 : vector<1x32xf32> to vector<32xf32>
      %138 = vector.shape_cast %137 : vector<32xf32> to vector<1x32xf32>
      %139 = vector.broadcast %138 : vector<1x32xf32> to vector<8x32xf32>
      %140 = arith.addf %135, %139 : vector<8x32xf32>
      %c0_65 = arith.constant 0 : index
      %c0_66 = arith.constant 0 : index
      %141 = vector.load %arg9[%c0_65, %c0_66] : memref<32x32xbf16, #tpu.memory_space<vmem>>, vector<32x32xbf16>
      %cst_67 = arith.constant dense<0.000000e+00> : vector<8x32xf32>
      %142 = tpu.matmul %132, %141, %cst_67 {dimension_numbers = #tpu.dot_dimension_numbers<[1], [0], [0], [1], [0, 0, 1, 1], [], []>} : vector<8x32xbf16>, vector<32x32xbf16>, vector<8x32xf32> -> vector<8x32xf32>
      %c0_68 = arith.constant 0 : index
      %c0_69 = arith.constant 0 : index
      %143 = vector.load %arg10[%c0_68, %c0_69] : memref<1x32xf32, #tpu.memory_space<vmem>>, vector<1x32xf32>
      %144 = vector.shape_cast %143 : vector<1x32xf32> to vector<32xf32>
      %145 = vector.shape_cast %144 : vector<32xf32> to vector<1x32xf32>
      %146 = vector.broadcast %145 : vector<1x32xf32> to vector<8x32xf32>
      %147 = arith.addf %142, %146 : vector<8x32xf32>
      %148 = vector.shape_cast %140 : vector<8x32xf32> to vector<8x4x8xf32>
      %149 = tpu.transpose %148, [1, 0, 2] : vector<8x4x8xf32> -> vector<4x8x8xf32>
      %150 = arith.truncf %149 : vector<4x8x8xf32> to vector<4x8x8xbf16>
      %c0_70 = arith.constant 0 : index
      %c0_71 = arith.constant 0 : index
      %c0_72 = arith.constant 0 : index
      %151 = vector.load %arg21[%c0_70, %c0_71, %c0_72] : memref<4x8x8xbf16, #tpu.memory_space<vmem>>, vector<4x8x8xbf16>
      tpu.vector_store %arg21[%c0_70, %c0_71, %c0_72], %150 {strides = array<i32>} : memref<4x8x8xbf16, #tpu.memory_space<vmem>>, vector<4x8x8xbf16>,
      %152 = vector.shape_cast %147 : vector<8x32xf32> to vector<8x4x8xf32>
      %153 = tpu.transpose %152, [1, 0, 2] : vector<8x4x8xf32> -> vector<4x8x8xf32>
      %154 = arith.truncf %153 : vector<4x8x8xf32> to vector<4x8x8xbf16>
      %c0_73 = arith.constant 0 : index
      %c0_74 = arith.constant 0 : index
      %c0_75 = arith.constant 0 : index
      %155 = vector.load %arg22[%c0_73, %c0_74, %c0_75] : memref<4x8x8xbf16, #tpu.memory_space<vmem>>, vector<4x8x8xbf16>
      tpu.vector_store %arg22[%c0_73, %c0_74, %c0_75], %154 {strides = array<i32>} : memref<4x8x8xbf16, #tpu.memory_space<vmem>>, vector<4x8x8xbf16>,
    } else {
    }
    %5 = arith.index_cast %1 : i32 to index
    %c0 = arith.constant 0 : index
    %6 = vector.load %arg20[%5, %c0] : memref<8x32xbf16, #tpu.memory_space<vmem>>, vector<8x32xbf16>
    %c0_1 = arith.constant 0 : index
    %c0_2 = arith.constant 0 : index
    %7 = vector.load %arg5[%c0_1, %c0_2] : memref<32x32xbf16, #tpu.memory_space<vmem>>, vector<32x32xbf16>
    %cst = arith.constant dense<0.000000e+00> : vector<8x32xf32>
    %8 = tpu.matmul %6, %7, %cst {dimension_numbers = #tpu.dot_dimension_numbers<[1], [0], [0], [1], [0, 0, 1, 1], [], []>} : vector<8x32xbf16>, vector<32x32xbf16>, vector<8x32xf32> -> vector<8x32xf32>
    %c0_3 = arith.constant 0 : index
    %c0_4 = arith.constant 0 : index
    %9 = vector.load %arg6[%c0_3, %c0_4] : memref<1x32xf32, #tpu.memory_space<vmem>>, vector<1x32xf32>
    %10 = vector.shape_cast %9 : vector<1x32xf32> to vector<32xf32>
    %11 = vector.shape_cast %10 : vector<32xf32> to vector<1x32xf32>
    %12 = vector.broadcast %11 : vector<1x32xf32> to vector<8x32xf32>
    %13 = arith.addf %8, %12 : vector<8x32xf32>
    %14 = vector.shape_cast %13 : vector<8x32xf32> to vector<8x4x8xf32>
    %15 = tpu.transpose %14, [1, 0, 2] : vector<8x4x8xf32> -> vector<4x8x8xf32>
    %16 = arith.truncf %15 : vector<4x8x8xf32> to vector<4x8x8xbf16>
    %c0_5 = arith.constant 0 : index
    %c0_6 = arith.constant 0 : index
    %c0_7 = arith.constant 0 : index
    %17 = vector.load %arg21[%c0_5, %c0_6, %c0_7] : memref<4x8x8xbf16, #tpu.memory_space<vmem>>, vector<4x8x8xbf16>
    %c0_8 = arith.constant 0 : index
    %c0_9 = arith.constant 0 : index
    %c0_10 = arith.constant 0 : index
    %18 = vector.load %arg22[%c0_8, %c0_9, %c0_10] : memref<4x8x8xbf16, #tpu.memory_space<vmem>>, vector<4x8x8xbf16>
    "tpu.trace_start"() <{level = 10 : i32, message = "hld,hmd->hlm"}> : () -> ()
    %cst_11 = arith.constant dense<0.000000e+00> : vector<4x8x8xf32>
    %19 = tpu.matmul %16, %17, %cst_11 {dimension_numbers = #tpu.dot_dimension_numbers<[2], [2], [1], [1], [0, 0, 0, 1, 1, 1], [0], [0]>} : vector<4x8x8xbf16>, vector<4x8x8xbf16>, vector<4x8x8xf32> -> vector<4x8x8xf32>
    "tpu.trace_stop"() : () -> ()
    %cst_12 = arith.constant dense<0xFF800000> : vector<4x8xf32>
    %20 = vector.multi_reduction <maximumf>, %19, %cst_12 [2] : vector<4x8x8xf32> to vector<4x8xf32>
    %21 = vector.shape_cast %20 : vector<4x8xf32> to vector<4x8x1xf32>
    %22 = vector.broadcast %21 : vector<4x8x1xf32> to vector<4x8x8xf32>
    %23 = arith.subf %19, %22 : vector<4x8x8xf32>
    %24 = math.exp %23 : vector<4x8x8xf32>
    %cst_13 = arith.constant dense<0.000000e+00> : vector<4x8xf32>
    %25 = vector.multi_reduction <add>, %24, %cst_13 [2] : vector<4x8x8xf32> to vector<4x8xf32>
    %26 = vector.shape_cast %25 : vector<4x8xf32> to vector<4x8x1xf32>
    %27 = arith.truncf %24 : vector<4x8x8xf32> to vector<4x8x8xbf16>
    "tpu.trace_start"() <{level = 10 : i32, message = "hlm,hmd->hld"}> : () -> ()
    %cst_14 = arith.constant dense<0.000000e+00> : vector<4x8x8xf32>
    %28 = tpu.matmul %27, %18, %cst_14 {dimension_numbers = #tpu.dot_dimension_numbers<[2], [1], [1], [2], [0, 0, 0, 1, 1, 2], [0], [0]>} : vector<4x8x8xbf16>, vector<4x8x8xbf16>, vector<4x8x8xf32> -> vector<4x8x8xf32>
    "tpu.trace_stop"() : () -> ()
    %29 = tpu.reciprocal %26 {approx = true} : vector<4x8x1xf32> -> vector<4x8x1xf32>
    %30 = vector.broadcast %29 : vector<4x8x1xf32> to vector<4x8x8xf32>
    %31 = arith.mulf %28, %30 : vector<4x8x8xf32>
    %32 = tpu.transpose %31, [1, 0, 2] : vector<4x8x8xf32> -> vector<8x4x8xf32>
    %33 = vector.shape_cast %32 : vector<8x4x8xf32> to vector<8x32xf32>
    %34 = arith.truncf %33 : vector<8x32xf32> to vector<8x32xbf16>
    %c0_15 = arith.constant 0 : index
    %c0_16 = arith.constant 0 : index
    %35 = vector.load %arg11[%c0_15, %c0_16] : memref<32x32xbf16, #tpu.memory_space<vmem>>, vector<32x32xbf16>
    %cst_17 = arith.constant dense<0.000000e+00> : vector<8x32xf32>
    %36 = tpu.matmul %34, %35, %cst_17 {dimension_numbers = #tpu.dot_dimension_numbers<[1], [0], [0], [1], [0, 0, 1, 1], [], []>} : vector<8x32xbf16>, vector<32x32xbf16>, vector<8x32xf32> -> vector<8x32xf32>
    %c0_18 = arith.constant 0 : index
    %c0_19 = arith.constant 0 : index
    %37 = vector.load %arg12[%c0_18, %c0_19] : memref<1x32xf32, #tpu.memory_space<vmem>>, vector<1x32xf32>
    %38 = vector.shape_cast %37 : vector<1x32xf32> to vector<32xf32>
    %39 = vector.shape_cast %38 : vector<32xf32> to vector<1x32xf32>
    %40 = vector.broadcast %39 : vector<1x32xf32> to vector<8x32xf32>
    %41 = arith.addf %36, %40 : vector<8x32xf32>
    %c0_20 = arith.constant 0 : index
    %42 = arith.index_cast %1 : i32 to index
    %c0_21 = arith.constant 0 : index
    %43 = vector.load %arg2[%c0_20, %42, %c0_21] : memref<1x8x32xf32, #tpu.memory_space<vmem>>, vector<1x8x32xf32>
    %44 = vector.shape_cast %43 : vector<1x8x32xf32> to vector<8x32xf32>
    %45 = arith.addf %44, %41 : vector<8x32xf32>
    %c0_22 = arith.constant 0 : index
    %c0_23 = arith.constant 0 : index
    %46 = vector.load %arg13[%c0_22, %c0_23] : memref<1x32xf32, #tpu.memory_space<vmem>>, vector<1x32xf32>
    %47 = vector.shape_cast %46 : vector<1x32xf32> to vector<32xf32>
    %c0_24 = arith.constant 0 : index
    %c0_25 = arith.constant 0 : index
    %48 = vector.load %arg14[%c0_24, %c0_25] : memref<1x32xf32, #tpu.memory_space<vmem>>, vector<1x32xf32>
    %49 = vector.shape_cast %48 : vector<1x32xf32> to vector<32xf32>
    %cst_26 = arith.constant dense<0.000000e+00> : vector<8xf32>
    %50 = vector.multi_reduction <add>, %45, %cst_26 [1] : vector<8x32xf32> to vector<8xf32>
    %51 = vector.shape_cast %50 : vector<8xf32> to vector<8x1xf32>
    %cst_27 = arith.constant 3.200000e+01 : f32
    %52 = vector.broadcast %cst_27 : f32 to vector<8x1xf32>
    %53 = arith.divf %51, %52 : vector<8x1xf32>
    %54 = vector.broadcast %53 : vector<8x1xf32> to vector<8x32xf32>
    %55 = arith.subf %45, %54 : vector<8x32xf32>
    %56 = arith.mulf %55, %55 : vector<8x32xf32>
    %cst_28 = arith.constant dense<0.000000e+00> : vector<8xf32>
    %57 = vector.multi_reduction <add>, %56, %cst_28 [1] : vector<8x32xf32> to vector<8xf32>
    %58 = vector.shape_cast %57 : vector<8xf32> to vector<8x1xf32>
    %cst_29 = arith.constant 3.200000e+01 : f32
    %59 = vector.broadcast %cst_29 : f32 to vector<8x1xf32>
    %60 = arith.divf %58, %59 : vector<8x1xf32>
    %61 = vector.broadcast %53 : vector<8x1xf32> to vector<8x32xf32>
    %62 = arith.subf %45, %61 : vector<8x32xf32>
    %cst_30 = arith.constant 9.99999974E-6 : f32
    %63 = vector.broadcast %cst_30 : f32 to vector<8x1xf32>
    %64 = arith.addf %60, %63 : vector<8x1xf32>
    %65 = math.rsqrt %64 : vector<8x1xf32>
    %66 = vector.broadcast %65 : vector<8x1xf32> to vector<8x32xf32>
    %67 = arith.mulf %62, %66 : vector<8x32xf32>
    %68 = vector.shape_cast %47 : vector<32xf32> to vector<1x32xf32>
    %69 = vector.broadcast %68 : vector<1x32xf32> to vector<8x32xf32>
    %70 = arith.mulf %67, %69 : vector<8x32xf32>
    %71 = vector.shape_cast %49 : vector<32xf32> to vector<1x32xf32>
    %72 = vector.broadcast %71 : vector<1x32xf32> to vector<8x32xf32>
    %73 = arith.addf %70, %72 : vector<8x32xf32>
    %74 = arith.truncf %73 : vector<8x32xf32> to vector<8x32xbf16>
    %c0_31 = arith.constant 0 : index
    %c0_32 = arith.constant 0 : index
    %75 = vector.load %arg15[%c0_31, %c0_32] : memref<32x128xbf16, #tpu.memory_space<vmem>>, vector<32x128xbf16>
    %cst_33 = arith.constant dense<0.000000e+00> : vector<8x128xf32>
    %76 = tpu.matmul %74, %75, %cst_33 {dimension_numbers = #tpu.dot_dimension_numbers<[1], [0], [0], [1], [0, 0, 1, 1], [], []>} : vector<8x32xbf16>, vector<32x128xbf16>, vector<8x128xf32> -> vector<8x128xf32>
    %c0_34 = arith.constant 0 : index
    %c0_35 = arith.constant 0 : index
    %77 = vector.load %arg16[%c0_34, %c0_35] : memref<1x128xf32, #tpu.memory_space<vmem>>, vector<1x128xf32>
    %78 = vector.shape_cast %77 : vector<1x128xf32> to vector<128xf32>
    %79 = vector.shape_cast %78 : vector<128xf32> to vector<1x128xf32>
    %80 = vector.broadcast %79 : vector<1x128xf32> to vector<8x128xf32>
    %81 = arith.addf %76, %80 : vector<8x128xf32>
    %cst_36 = arith.constant 1.702000e+00 : f32
    %82 = vector.broadcast %cst_36 : f32 to vector<8x128xf32>
    %83 = arith.mulf %82, %81 : vector<8x128xf32>
    %84 = arith.negf %83 : vector<8x128xf32>
    %85 = math.exp %84 : vector<8x128xf32>
    %cst_37 = arith.constant 1.000000e+00 : f32
    %86 = vector.broadcast %cst_37 : f32 to vector<8x128xf32>
    %87 = arith.addf %86, %85 : vector<8x128xf32>
    %88 = arith.divf %86, %87 : vector<8x128xf32>
    %89 = arith.mulf %81, %88 : vector<8x128xf32>
    %90 = arith.truncf %89 : vector<8x128xf32> to vector<8x128xbf16>
    %c0_38 = arith.constant 0 : index
    %c0_39 = arith.constant 0 : index
    %91 = vector.load %arg17[%c0_38, %c0_39] : memref<128x32xbf16, #tpu.memory_space<vmem>>, vector<128x32xbf16>
    %cst_40 = arith.constant dense<0.000000e+00> : vector<8x32xf32>
    %92 = tpu.matmul %90, %91, %cst_40 {dimension_numbers = #tpu.dot_dimension_numbers<[1], [0], [0], [1], [0, 0, 1, 1], [], []>} : vector<8x128xbf16>, vector<128x32xbf16>, vector<8x32xf32> -> vector<8x32xf32>
    %c0_41 = arith.constant 0 : index
    %c0_42 = arith.constant 0 : index
    %93 = vector.load %arg18[%c0_41, %c0_42] : memref<1x32xf32, #tpu.memory_space<vmem>>, vector<1x32xf32>
    %94 = vector.shape_cast %93 : vector<1x32xf32> to vector<32xf32>
    %95 = vector.shape_cast %94 : vector<32xf32> to vector<1x32xf32>
    %96 = vector.broadcast %95 : vector<1x32xf32> to vector<8x32xf32>
    %97 = arith.addf %92, %96 : vector<8x32xf32>
    %98 = arith.addf %45, %97 : vector<8x32xf32>
    %c0_43 = arith.constant 0 : index
    %c0_44 = arith.constant 0 : index
    %c0_45 = arith.constant 0 : index
    %99 = vector.load %arg19[%c0_43, %c0_44, %c0_45] : memref<1x8x32xf32, #tpu.memory_space<vmem>>, vector<1x8x32xf32>
    %100 = vector.shape_cast %99 : vector<1x8x32xf32> to vector<8x32xf32>
    %101 = vector.shape_cast %98 : vector<8x32xf32> to vector<1x8x32xf32>
    tpu.vector_store %arg19[%c0_43, %c0_44, %c0_45], %101 {strides = array<i32>} : memref<1x8x32xf32, #tpu.memory_space<vmem>>, vector<1x8x32xf32>,
    return
  }
  func.func @transform_0(%arg0: i32, %arg1: i32) -> (i32, i32, i32) {
    %c0_i32 = arith.constant 0 : i32
    %c0_i32_0 = arith.constant 0 : i32
    %c0_i32_1 = arith.constant 0 : i32
    return %arg0, %c0_i32, %c0_i32_0 : i32, i32, i32
  }
  func.func @transform_1(%arg0: i32, %arg1: i32) -> (i32, i32) {
    %c0_i32 = arith.constant 0 : i32
    %c0_i32_0 = arith.constant 0 : i32
    %c0_i32_1 = arith.constant 0 : i32
    return %c0_i32, %c0_i32_0 : i32, i32
  }
  func.func @transform_2(%arg0: i32, %arg1: i32) -> (i32, i32) {
    %c0_i32 = arith.constant 0 : i32
    %c0_i32_0 = arith.constant 0 : i32
    %c0_i32_1 = arith.constant 0 : i32
    return %c0_i32, %c0_i32_0 : i32, i32
  }
  func.func @transform_3(%arg0: i32, %arg1: i32) -> (i32, i32) {
    %c0_i32 = arith.constant 0 : i32
    %c0_i32_0 = arith.constant 0 : i32
    %c0_i32_1 = arith.constant 0 : i32
    return %c0_i32, %c0_i32_0 : i32, i32
  }
  func.func @transform_4(%arg0: i32, %arg1: i32) -> (i32, i32) {
    %c0_i32 = arith.constant 0 : i32
    %c0_i32_0 = arith.constant 0 : i32
    %c0_i32_1 = arith.constant 0 : i32
    return %c0_i32, %c0_i32_0 : i32, i32
  }
  func.func @transform_5(%arg0: i32, %arg1: i32) -> (i32, i32) {
    %c0_i32 = arith.constant 0 : i32
    %c0_i32_0 = arith.constant 0 : i32
    %c0_i32_1 = arith.constant 0 : i32
    return %c0_i32, %c0_i32_0 : i32, i32
  }
  func.func @transform_6(%arg0: i32, %arg1: i32) -> (i32, i32) {
    %c0_i32 = arith.constant 0 : i32
    %c0_i32_0 = arith.constant 0 : i32
    %c0_i32_1 = arith.constant 0 : i32
    return %c0_i32, %c0_i32_0 : i32, i32
  }
  func.func @transform_7(%arg0: i32, %arg1: i32) -> (i32, i32) {
    %c0_i32 = arith.constant 0 : i32
    %c0_i32_0 = arith.constant 0 : i32
    %c0_i32_1 = arith.constant 0 : i32
    return %c0_i32, %c0_i32_0 : i32, i32
  }
  func.func @transform_8(%arg0: i32, %arg1: i32) -> (i32, i32) {
    %c0_i32 = arith.constant 0 : i32
    %c0_i32_0 = arith.constant 0 : i32
    %c0_i32_1 = arith.constant 0 : i32
    return %c0_i32, %c0_i32_0 : i32, i32
  }
  func.func @transform_9(%arg0: i32, %arg1: i32) -> (i32, i32) {
    %c0_i32 = arith.constant 0 : i32
    %c0_i32_0 = arith.constant 0 : i32
    %c0_i32_1 = arith.constant 0 : i32
    return %c0_i32, %c0_i32_0 : i32, i32
  }
  func.func @transform_10(%arg0: i32, %arg1: i32) -> (i32, i32) {
    %c0_i32 = arith.constant 0 : i32
    %c0_i32_0 = arith.constant 0 : i32
    %c0_i32_1 = arith.constant 0 : i32
    return %c0_i32, %c0_i32_0 : i32, i32
  }
  func.func @transform_11(%arg0: i32, %arg1: i32) -> (i32, i32) {
    %c0_i32 = arith.constant 0 : i32
    %c0_i32_0 = arith.constant 0 : i32
    %c0_i32_1 = arith.constant 0 : i32
    return %c0_i32, %c0_i32_0 : i32, i32
  }
  func.func @transform_12(%arg0: i32, %arg1: i32) -> (i32, i32) {
    %c0_i32 = arith.constant 0 : i32
    %c0_i32_0 = arith.constant 0 : i32
    %c0_i32_1 = arith.constant 0 : i32
    return %c0_i32, %c0_i32_0 : i32, i32
  }
  func.func @transform_13(%arg0: i32, %arg1: i32) -> (i32, i32) {
    %c0_i32 = arith.constant 0 : i32
    %c0_i32_0 = arith.constant 0 : i32
    %c0_i32_1 = arith.constant 0 : i32
    return %c0_i32, %c0_i32_0 : i32, i32
  }
  func.func @transform_14(%arg0: i32, %arg1: i32) -> (i32, i32) {
    %c0_i32 = arith.constant 0 : i32
    %c0_i32_0 = arith.constant 0 : i32
    %c0_i32_1 = arith.constant 0 : i32
    return %c0_i32, %c0_i32_0 : i32, i32
  }
  func.func @transform_15(%arg0: i32, %arg1: i32) -> (i32, i32) {
    %c0_i32 = arith.constant 0 : i32
    %c0_i32_0 = arith.constant 0 : i32
    %c0_i32_1 = arith.constant 0 : i32
    return %c0_i32, %c0_i32_0 : i32, i32
  }
  func.func @transform_16(%arg0: i32, %arg1: i32) -> (i32, i32) {
    %c0_i32 = arith.constant 0 : i32
    %c0_i32_0 = arith.constant 0 : i32
    %c0_i32_1 = arith.constant 0 : i32
    return %c0_i32, %c0_i32_0 : i32, i32
  }
  func.func @transform_17(%arg0: i32, %arg1: i32) -> (i32, i32, i32) {
    %c0_i32 = arith.constant 0 : i32
    %c0_i32_0 = arith.constant 0 : i32
    return %arg0, %arg1, %c0_i32 : i32, i32, i32
  }
}

module attributes {stable_mosaic.version = 11 : i64} {
  func.func @kernel(%arg0: i32, %arg1: i32, %arg2: memref<1x8x32xf32, #tpu.memory_space<vmem>>, %arg3: memref<1x32xf32, #tpu.memory_space<vmem>>, %arg4: memref<1x32xf32, #tpu.memory_space<vmem>>, %arg5: memref<32x32xbf16, #tpu.memory_space<vmem>>, %arg6: memref<1x32xf32, #tpu.memory_space<vmem>>, %arg7: memref<32x32xbf16, #tpu.memory_space<vmem>>, %arg8: memref<1x32xf32, #tpu.memory_space<vmem>>, %arg9: memref<32x32xbf16, #tpu.memory_space<vmem>>, %arg10: memref<1x32xf32, #tpu.memory_space<vmem>>, %arg11: memref<32x32xbf16, #tpu.memory_space<vmem>>, %arg12: memref<1x32xf32, #tpu.memory_space<vmem>>, %arg13: memref<1x32xf32, #tpu.memory_space<vmem>>, %arg14: memref<1x32xf32, #tpu.memory_space<vmem>>, %arg15: memref<32x128xbf16, #tpu.memory_space<vmem>>, %arg16: memref<1x128xf32, #tpu.memory_space<vmem>>, %arg17: memref<128x32xbf16, #tpu.memory_space<vmem>>, %arg18: memref<1x32xf32, #tpu.memory_space<vmem>>, %arg19: memref<1x8x32xf32, #tpu.memory_space<vmem>>, %arg20: memref<8x32xbf16, #tpu.memory_space<vmem>>, %arg21: memref<4x8x8xbf16, #tpu.memory_space<vmem>>, %arg22: memref<4x8x8xbf16, #tpu.memory_space<vmem>>) attributes {dimension_semantics = [#tpu.dimension_semantics<parallel>, #tpu.dimension_semantics<arbitrary>], iteration_bounds = array<i64: 2, 1>, scalar_prefetch = 0 : i64, scratch_operands = 3 : i64, tpu.core_type = #tpu.core_type<tc>, window_params = [{transform_indices = @transform_0, window_bounds = array<i64: 1, 8, 32>}, {pipeline_mode = #tpu.pipeline_mode<synchronous>, transform_indices = @transform_1, window_bounds = array<i64: 1, 32>}, {pipeline_mode = #tpu.pipeline_mode<synchronous>, transform_indices = @transform_2, window_bounds = array<i64: 1, 32>}, {pipeline_mode = #tpu.pipeline_mode<synchronous>, transform_indices = @transform_3, window_bounds = array<i64: 32, 32>}, {pipeline_mode = #tpu.pipeline_mode<synchronous>, transform_indices = @transform_4, window_bounds = array<i64: 1, 32>}, {pipeline_mode = #tpu.pipeline_mode<synchronous>, transform_indices = @transform_5, window_bounds = array<i64: 32, 32>}, {pipeline_mode = #tpu.pipeline_mode<synchronous>, transform_indices = @transform_6, window_bounds = array<i64: 1, 32>}, {pipeline_mode = #tpu.pipeline_mode<synchronous>, transform_indices = @transform_7, window_bounds = array<i64: 32, 32>}, {pipeline_mode = #tpu.pipeline_mode<synchronous>, transform_indices = @transform_8, window_bounds = array<i64: 1, 32>}, {pipeline_mode = #tpu.pipeline_mode<synchronous>, transform_indices = @transform_9, window_bounds = array<i64: 32, 32>}, {pipeline_mode = #tpu.pipeline_mode<synchronous>, transform_indices = @transform_10, window_bounds = array<i64: 1, 32>}, {pipeline_mode = #tpu.pipeline_mode<synchronous>, transform_indices = @transform_11, window_bounds = array<i64: 1, 32>}, {pipeline_mode = #tpu.pipeline_mode<synchronous>, transform_indices = @transform_12, window_bounds = array<i64: 1, 32>}, {pipeline_mode = #tpu.pipeline_mode<synchronous>, transform_indices = @transform_13, window_bounds = array<i64: 32, 128>}, {pipeline_mode = #tpu.pipeline_mode<synchronous>, transform_indices = @transform_14, window_bounds = array<i64: 1, 128>}, {pipeline_mode = #tpu.pipeline_mode<synchronous>, transform_indices = @transform_15, window_bounds = array<i64: 128, 32>}, {pipeline_mode = #tpu.pipeline_mode<synchronous>, transform_indices = @transform_16, window_bounds = array<i64: 1, 32>}, {transform_indices = @transform_17, window_bounds = array<i64: 1, 8, 32>}]} {
    %c8_i32 = arith.constant 8 : i32
    %0 = arith.muli %arg1, %c8_i32 : i32
    %1 = tpu.assume_multiple %0, 8 : i32
    %c0_i32 = arith.constant 0 : i32
    %2 = arith.cmpi eq, %arg1, %c0_i32 : i32
    %3 = arith.extui %2 : i1 to i32
    %c0_i32_0 = arith.constant 0 : i32
    %4 = arith.cmpi ne, %3, %c0_i32_0 : i32
    scf.if %4 {
      %c0_46 = arith.constant 0 : index
      %c0_47 = arith.constant 0 : index
      %c0_48 = arith.constant 0 : index
      %102 = vector.load %arg2[%c0_46, %c0_47, %c0_48] : memref<1x8x32xf32, #tpu.memory_space<vmem>>, vector<1x8x32xf32>
      %103 = vector.shape_cast %102 : vector<1x8x32xf32> to vector<8x32xf32>
      %c0_49 = arith.constant 0 : index
      %c0_50 = arith.constant 0 : index
      %104 = vector.load %arg3[%c0_49, %c0_50] : memref<1x32xf32, #tpu.memory_space<vmem>>, vector<1x32xf32>
      %105 = vector.shape_cast %104 : vector<1x32xf32> to vector<32xf32>
      %c0_51 = arith.constant 0 : index
      %c0_52 = arith.constant 0 : index
      %106 = vector.load %arg4[%c0_51, %c0_52] : memref<1x32xf32, #tpu.memory_space<vmem>>, vector<1x32xf32>
      %107 = vector.shape_cast %106 : vector<1x32xf32> to vector<32xf32>
      %cst_53 = arith.constant dense<0.000000e+00> : vector<8xf32>
      %108 = vector.multi_reduction <add>, %103, %cst_53 [1] : vector<8x32xf32> to vector<8xf32>
      %109 = vector.shape_cast %108 : vector<8xf32> to vector<8x1xf32>
      %cst_54 = arith.constant 3.200000e+01 : f32
      %110 = vector.broadcast %cst_54 : f32 to vector<8x1xf32>
      %111 = arith.divf %109, %110 : vector<8x1xf32>
      %112 = vector.broadcast %111 : vector<8x1xf32> to vector<8x32xf32>
      %113 = arith.subf %103, %112 : vector<8x32xf32>
      %114 = arith.mulf %113, %113 : vector<8x32xf32>
      %cst_55 = arith.constant dense<0.000000e+00> : vector<8xf32>
      %115 = vector.multi_reduction <add>, %114, %cst_55 [1] : vector<8x32xf32> to vector<8xf32>
      %116 = vector.shape_cast %115 : vector<8xf32> to vector<8x1xf32>
      %cst_56 = arith.constant 3.200000e+01 : f32
      %117 = vector.broadcast %cst_56 : f32 to vector<8x1xf32>
      %118 = arith.divf %116, %117 : vector<8x1xf32>
      %119 = vector.broadcast %111 : vector<8x1xf32> to vector<8x32xf32>
      %120 = arith.subf %103, %119 : vector<8x32xf32>
      %cst_57 = arith.constant 9.99999974E-6 : f32
      %121 = vector.broadcast %cst_57 : f32 to vector<8x1xf32>
      %122 = arith.addf %118, %121 : vector<8x1xf32>
      %123 = math.rsqrt %122 : vector<8x1xf32>
      %124 = vector.broadcast %123 : vector<8x1xf32> to vector<8x32xf32>
      %125 = arith.mulf %120, %124 : vector<8x32xf32>
      %126 = vector.shape_cast %105 : vector<32xf32> to vector<1x32xf32>
      %127 = vector.broadcast %126 : vector<1x32xf32> to vector<8x32xf32>
      %128 = arith.mulf %125, %127 : vector<8x32xf32>
      %129 = vector.shape_cast %107 : vector<32xf32> to vector<1x32xf32>
      %130 = vector.broadcast %129 : vector<1x32xf32> to vector<8x32xf32>
      %131 = arith.addf %128, %130 : vector<8x32xf32>
      %132 = arith.truncf %131 : vector<8x32xf32> to vector<8x32xbf16>
      %c0_58 = arith.constant 0 : index
      %c0_59 = arith.constant 0 : index
      %133 = vector.load %arg20[%c0_58, %c0_59] : memref<8x32xbf16, #tpu.memory_space<vmem>>, vector<8x32xbf16>
      tpu.vector_store %arg20[%c0_58, %c0_59], %132 {strides = array<i32>} : memref<8x32xbf16, #tpu.memory_space<vmem>>, vector<8x32xbf16>,
      %c0_60 = arith.constant 0 : index
      %c0_61 = arith.constant 0 : index
      %134 = vector.load %arg7[%c0_60, %c0_61] : memref<32x32xbf16, #tpu.memory_space<vmem>>, vector<32x32xbf16>
      %cst_62 = arith.constant dense<0.000000e+00> : vector<8x32xf32>
      %135 = tpu.matmul %132, %134, %cst_62 {dimension_numbers = #tpu.dot_dimension_numbers<[1], [0], [0], [1], [0, 0, 1, 1], [], []>} : vector<8x32xbf16>, vector<32x32xbf16>, vector<8x32xf32> -> vector<8x32xf32>
      %c0_63 = arith.constant 0 : index
      %c0_64 = arith.constant 0 : index
      %136 = vector.load %arg8[%c0_63, %c0_64] : memref<1x32xf32, #tpu.memory_space<vmem>>, vector<1x32xf32>
      %137 = vector.shape_cast %136 : vector<1x32xf32> to vector<32xf32>
      %138 = vector.shape_cast %137 : vector<32xf32> to vector<1x32xf32>
      %139 = vector.broadcast %138 : vector<1x32xf32> to vector<8x32xf32>
      %140 = arith.addf %135, %139 : vector<8x32xf32>
      %c0_65 = arith.constant 0 : index
      %c0_66 = arith.constant 0 : index
      %141 = vector.load %arg9[%c0_65, %c0_66] : memref<32x32xbf16, #tpu.memory_space<vmem>>, vector<32x32xbf16>
      %cst_67 = arith.constant dense<0.000000e+00> : vector<8x32xf32>
      %142 = tpu.matmul %132, %141, %cst_67 {dimension_numbers = #tpu.dot_dimension_numbers<[1], [0], [0], [1], [0, 0, 1, 1], [], []>} : vector<8x32xbf16>, vector<32x32xbf16>, vector<8x32xf32> -> vector<8x32xf32>
      %c0_68 = arith.constant 0 : index
      %c0_69 = arith.constant 0 : index
      %143 = vector.load %arg10[%c0_68, %c0_69] : memref<1x32xf32, #tpu.memory_space<vmem>>, vector<1x32xf32>
      %144 = vector.shape_cast %143 : vector<1x32xf32> to vector<32xf32>
      %145 = vector.shape_cast %144 : vector<32xf32> to vector<1x32xf32>
      %146 = vector.broadcast %145 : vector<1x32xf32> to vector<8x32xf32>
      %147 = arith.addf %142, %146 : vector<8x32xf32>
      %148 = vector.shape_cast %140 : vector<8x32xf32> to vector<8x4x8xf32>
      %149 = tpu.transpose %148, [1, 0, 2] : vector<8x4x8xf32> -> vector<4x8x8xf32>
      %150 = arith.truncf %149 : vector<4x8x8xf32> to vector<4x8x8xbf16>
      %c0_70 = arith.constant 0 : index
      %c0_71 = arith.constant 0 : index
      %c0_72 = arith.constant 0 : index
      %151 = vector.load %arg21[%c0_70, %c0_71, %c0_72] : memref<4x8x8xbf16, #tpu.memory_space<vmem>>, vector<4x8x8xbf16>
      tpu.vector_store %arg21[%c0_70, %c0_71, %c0_72], %150 {strides = array<i32>} : memref<4x8x8xbf16, #tpu.memory_space<vmem>>, vector<4x8x8xbf16>,
      %152 = vector.shape_cast %147 : vector<8x32xf32> to vector<8x4x8xf32>
      %153 = tpu.transpose %152, [1, 0, 2] : vector<8x4x8xf32> -> vector<4x8x8xf32>
      %154 = arith.truncf %153 : vector<4x8x8xf32> to vector<4x8x8xbf16>
      %c0_73 = arith.constant 0 : index
      %c0_74 = arith.constant 0 : index
      %c0_75 = arith.constant 0 : index
      %155 = vector.load %arg22[%c0_73, %c0_74, %c0_75] : memref<4x8x8xbf16, #tpu.memory_space<vmem>>, vector<4x8x8xbf16>
      tpu.vector_store %arg22[%c0_73, %c0_74, %c0_75], %154 {strides = array<i32>} : memref<4x8x8xbf16, #tpu.memory_space<vmem>>, vector<4x8x8xbf16>,
    } else {
    }
    %5 = arith.index_cast %1 : i32 to index
    %c0 = arith.constant 0 : index
    %6 = vector.load %arg20[%5, %c0] : memref<8x32xbf16, #tpu.memory_space<vmem>>, vector<8x32xbf16>
    %c0_1 = arith.constant 0 : index
    %c0_2 = arith.constant 0 : index
    %7 = vector.load %arg5[%c0_1, %c0_2] : memref<32x32xbf16, #tpu.memory_space<vmem>>, vector<32x32xbf16>
    %cst = arith.constant dense<0.000000e+00> : vector<8x32xf32>
    %8 = tpu.matmul %6, %7, %cst {dimension_numbers = #tpu.dot_dimension_numbers<[1], [0], [0], [1], [0, 0, 1, 1], [], []>} : vector<8x32xbf16>, vector<32x32xbf16>, vector<8x32xf32> -> vector<8x32xf32>
    %c0_3 = arith.constant 0 : index
    %c0_4 = arith.constant 0 : index
    %9 = vector.load %arg6[%c0_3, %c0_4] : memref<1x32xf32, #tpu.memory_space<vmem>>, vector<1x32xf32>
    %10 = vector.shape_cast %9 : vector<1x32xf32> to vector<32xf32>
    %11 = vector.shape_cast %10 : vector<32xf32> to vector<1x32xf32>
    %12 = vector.broadcast %11 : vector<1x32xf32> to vector<8x32xf32>
    %13 = arith.addf %8, %12 : vector<8x32xf32>
    %14 = vector.shape_cast %13 : vector<8x32xf32> to vector<8x4x8xf32>
    %15 = tpu.transpose %14, [1, 0, 2] : vector<8x4x8xf32> -> vector<4x8x8xf32>
    %16 = arith.truncf %15 : vector<4x8x8xf32> to vector<4x8x8xbf16>
    %c0_5 = arith.constant 0 : index
    %c0_6 = arith.constant 0 : index
    %c0_7 = arith.constant 0 : index
    %17 = vector.load %arg21[%c0_5, %c0_6, %c0_7] : memref<4x8x8xbf16, #tpu.memory_space<vmem>>, vector<4x8x8xbf16>
    %c0_8 = arith.constant 0 : index
    %c0_9 = arith.constant 0 : index
    %c0_10 = arith.constant 0 : index
    %18 = vector.load %arg22[%c0_8, %c0_9, %c0_10] : memref<4x8x8xbf16, #tpu.memory_space<vmem>>, vector<4x8x8xbf16>
    "tpu.trace_start"() <{level = 10 : i32, message = "hld,hmd->hlm"}> : () -> ()
    %cst_11 = arith.constant dense<0.000000e+00> : vector<4x8x8xf32>
    %19 = tpu.matmul %16, %17, %cst_11 {dimension_numbers = #tpu.dot_dimension_numbers<[2], [2], [1], [1], [0, 0, 0, 1, 1, 1], [0], [0]>} : vector<4x8x8xbf16>, vector<4x8x8xbf16>, vector<4x8x8xf32> -> vector<4x8x8xf32>
    "tpu.trace_stop"() : () -> ()
    %cst_12 = arith.constant dense<0xFF800000> : vector<4x8xf32>
    %20 = vector.multi_reduction <maximumf>, %19, %cst_12 [2] : vector<4x8x8xf32> to vector<4x8xf32>
    %21 = vector.shape_cast %20 : vector<4x8xf32> to vector<4x8x1xf32>
    %22 = vector.broadcast %21 : vector<4x8x1xf32> to vector<4x8x8xf32>
    %23 = arith.subf %19, %22 : vector<4x8x8xf32>
    %24 = math.exp %23 : vector<4x8x8xf32>
    %cst_13 = arith.constant dense<0.000000e+00> : vector<4x8xf32>
    %25 = vector.multi_reduction <add>, %24, %cst_13 [2] : vector<4x8x8xf32> to vector<4x8xf32>
    %26 = vector.shape_cast %25 : vector<4x8xf32> to vector<4x8x1xf32>
    %27 = arith.truncf %24 : vector<4x8x8xf32> to vector<4x8x8xbf16>
    "tpu.trace_start"() <{level = 10 : i32, message = "hlm,hmd->hld"}> : () -> ()
    %cst_14 = arith.constant dense<0.000000e+00> : vector<4x8x8xf32>
    %28 = tpu.matmul %27, %18, %cst_14 {dimension_numbers = #tpu.dot_dimension_numbers<[2], [1], [1], [2], [0, 0, 0, 1, 1, 2], [0], [0]>} : vector<4x8x8xbf16>, vector<4x8x8xbf16>, vector<4x8x8xf32> -> vector<4x8x8xf32>
    "tpu.trace_stop"() : () -> ()
    %29 = tpu.reciprocal %26 {approx = true} : vector<4x8x1xf32> -> vector<4x8x1xf32>
    %30 = vector.broadcast %29 : vector<4x8x1xf32> to vector<4x8x8xf32>
    %31 = arith.mulf %28, %30 : vector<4x8x8xf32>
    %32 = tpu.transpose %31, [1, 0, 2] : vector<4x8x8xf32> -> vector<8x4x8xf32>
    %33 = vector.shape_cast %32 : vector<8x4x8xf32> to vector<8x32xf32>
    %34 = arith.truncf %33 : vector<8x32xf32> to vector<8x32xbf16>
    %c0_15 = arith.constant 0 : index
    %c0_16 = arith.constant 0 : index
    %35 = vector.load %arg11[%c0_15, %c0_16] : memref<32x32xbf16, #tpu.memory_space<vmem>>, vector<32x32xbf16>
    %cst_17 = arith.constant dense<0.000000e+00> : vector<8x32xf32>
    %36 = tpu.matmul %34, %35, %cst_17 {dimension_numbers = #tpu.dot_dimension_numbers<[1], [0], [0], [1], [0, 0, 1, 1], [], []>} : vector<8x32xbf16>, vector<32x32xbf16>, vector<8x32xf32> -> vector<8x32xf32>
    %c0_18 = arith.constant 0 : index
    %c0_19 = arith.constant 0 : index
    %37 = vector.load %arg12[%c0_18, %c0_19] : memref<1x32xf32, #tpu.memory_space<vmem>>, vector<1x32xf32>
    %38 = vector.shape_cast %37 : vector<1x32xf32> to vector<32xf32>
    %39 = vector.shape_cast %38 : vector<32xf32> to vector<1x32xf32>
    %40 = vector.broadcast %39 : vector<1x32xf32> to vector<8x32xf32>
    %41 = arith.addf %36, %40 : vector<8x32xf32>
    %c0_20 = arith.constant 0 : index
    %42 = arith.index_cast %1 : i32 to index
    %c0_21 = arith.constant 0 : index
    %43 = vector.load %arg2[%c0_20, %42, %c0_21] : memref<1x8x32xf32, #tpu.memory_space<vmem>>, vector<1x8x32xf32>
    %44 = vector.shape_cast %43 : vector<1x8x32xf32> to vector<8x32xf32>
    %45 = arith.addf %44, %41 : vector<8x32xf32>
    %c0_22 = arith.constant 0 : index
    %c0_23 = arith.constant 0 : index
    %46 = vector.load %arg13[%c0_22, %c0_23] : memref<1x32xf32, #tpu.memory_space<vmem>>, vector<1x32xf32>
    %47 = vector.shape_cast %46 : vector<1x32xf32> to vector<32xf32>
    %c0_24 = arith.constant 0 : index
    %c0_25 = arith.constant 0 : index
    %48 = vector.load %arg14[%c0_24, %c0_25] : memref<1x32xf32, #tpu.memory_space<vmem>>, vector<1x32xf32>
    %49 = vector.shape_cast %48 : vector<1x32xf32> to vector<32xf32>
    %cst_26 = arith.constant dense<0.000000e+00> : vector<8xf32>
    %50 = vector.multi_reduction <add>, %45, %cst_26 [1] : vector<8x32xf32> to vector<8xf32>
    %51 = vector.shape_cast %50 : vector<8xf32> to vector<8x1xf32>
    %cst_27 = arith.constant 3.200000e+01 : f32
    %52 = vector.broadcast %cst_27 : f32 to vector<8x1xf32>
    %53 = arith.divf %51, %52 : vector<8x1xf32>
    %54 = vector.broadcast %53 : vector<8x1xf32> to vector<8x32xf32>
    %55 = arith.subf %45, %54 : vector<8x32xf32>
    %56 = arith.mulf %55, %55 : vector<8x32xf32>
    %cst_28 = arith.constant dense<0.000000e+00> : vector<8xf32>
    %57 = vector.multi_reduction <add>, %56, %cst_28 [1] : vector<8x32xf32> to vector<8xf32>
    %58 = vector.shape_cast %57 : vector<8xf32> to vector<8x1xf32>
    %cst_29 = arith.constant 3.200000e+01 : f32
    %59 = vector.broadcast %cst_29 : f32 to vector<8x1xf32>
    %60 = arith.divf %58, %59 : vector<8x1xf32>
    %61 = vector.broadcast %53 : vector<8x1xf32> to vector<8x32xf32>
    %62 = arith.subf %45, %61 : vector<8x32xf32>
    %cst_30 = arith.constant 9.99999974E-6 : f32
    %63 = vector.broadcast %cst_30 : f32 to vector<8x1xf32>
    %64 = arith.addf %60, %63 : vector<8x1xf32>
    %65 = math.rsqrt %64 : vector<8x1xf32>
    %66 = vector.broadcast %65 : vector<8x1xf32> to vector<8x32xf32>
    %67 = arith.mulf %62, %66 : vector<8x32xf32>
    %68 = vector.shape_cast %47 : vector<32xf32> to vector<1x32xf32>
    %69 = vector.broadcast %68 : vector<1x32xf32> to vector<8x32xf32>
    %70 = arith.mulf %67, %69 : vector<8x32xf32>
    %71 = vector.shape_cast %49 : vector<32xf32> to vector<1x32xf32>
    %72 = vector.broadcast %71 : vector<1x32xf32> to vector<8x32xf32>
    %73 = arith.addf %70, %72 : vector<8x32xf32>
    %74 = arith.truncf %73 : vector<8x32xf32> to vector<8x32xbf16>
    %c0_31 = arith.constant 0 : index
    %c0_32 = arith.constant 0 : index
    %75 = vector.load %arg15[%c0_31, %c0_32] : memref<32x128xbf16, #tpu.memory_space<vmem>>, vector<32x128xbf16>
    %cst_33 = arith.constant dense<0.000000e+00> : vector<8x128xf32>
    %76 = tpu.matmul %74, %75, %cst_33 {dimension_numbers = #tpu.dot_dimension_numbers<[1], [0], [0], [1], [0, 0, 1, 1], [], []>} : vector<8x32xbf16>, vector<32x128xbf16>, vector<8x128xf32> -> vector<8x128xf32>
    %c0_34 = arith.constant 0 : index
    %c0_35 = arith.constant 0 : index
    %77 = vector.load %arg16[%c0_34, %c0_35] : memref<1x128xf32, #tpu.memory_space<vmem>>, vector<1x128xf32>
    %78 = vector.shape_cast %77 : vector<1x128xf32> to vector<128xf32>
    %79 = vector.shape_cast %78 : vector<128xf32> to vector<1x128xf32>
    %80 = vector.broadcast %79 : vector<1x128xf32> to vector<8x128xf32>
    %81 = arith.addf %76, %80 : vector<8x128xf32>
    %cst_36 = arith.constant 1.702000e+00 : f32
    %82 = vector.broadcast %cst_36 : f32 to vector<8x128xf32>
    %83 = arith.mulf %82, %81 : vector<8x128xf32>
    %84 = arith.negf %83 : vector<8x128xf32>
    %85 = math.exp %84 : vector<8x128xf32>
    %cst_37 = arith.constant 1.000000e+00 : f32
    %86 = vector.broadcast %cst_37 : f32 to vector<8x128xf32>
    %87 = arith.addf %86, %85 : vector<8x128xf32>
    %88 = arith.divf %86, %87 : vector<8x128xf32>
    %89 = arith.mulf %81, %88 : vector<8x128xf32>
    %90 = arith.truncf %89 : vector<8x128xf32> to vector<8x128xbf16>
    %c0_38 = arith.constant 0 : index
    %c0_39 = arith.constant 0 : index
    %91 = vector.load %arg17[%c0_38, %c0_39] : memref<128x32xbf16, #tpu.memory_space<vmem>>, vector<128x32xbf16>
    %cst_40 = arith.constant dense<0.000000e+00> : vector<8x32xf32>
    %92 = tpu.matmul %90, %91, %cst_40 {dimension_numbers = #tpu.dot_dimension_numbers<[1], [0], [0], [1], [0, 0, 1, 1], [], []>} : vector<8x128xbf16>, vector<128x32xbf16>, vector<8x32xf32> -> vector<8x32xf32>
    %c0_41 = arith.constant 0 : index
    %c0_42 = arith.constant 0 : index
    %93 = vector.load %arg18[%c0_41, %c0_42] : memref<1x32xf32, #tpu.memory_space<vmem>>, vector<1x32xf32>
    %94 = vector.shape_cast %93 : vector<1x32xf32> to vector<32xf32>
    %95 = vector.shape_cast %94 : vector<32xf32> to vector<1x32xf32>
    %96 = vector.broadcast %95 : vector<1x32xf32> to vector<8x32xf32>
    %97 = arith.addf %92, %96 : vector<8x32xf32>
    %98 = arith.addf %45, %97 : vector<8x32xf32>
    %c0_43 = arith.constant 0 : index
    %c0_44 = arith.constant 0 : index
    %c0_45 = arith.constant 0 : index
    %99 = vector.load %arg19[%c0_43, %c0_44, %c0_45] : memref<1x8x32xf32, #tpu.memory_space<vmem>>, vector<1x8x32xf32>
    %100 = vector.shape_cast %99 : vector<1x8x32xf32> to vector<8x32xf32>
    %101 = vector.shape_cast %98 : vector<8x32xf32> to vector<1x8x32xf32>
    tpu.vector_store %arg19[%c0_43, %c0_44, %c0_45], %101 {strides = array<i32>} : memref<1x8x32xf32, #tpu.memory_space<vmem>>, vector<1x8x32xf32>,
    return
  }
  func.func @transform_0(%arg0: i32, %arg1: i32) -> (i32, i32, i32) {
    %c0_i32 = arith.constant 0 : i32
    %c0_i32_0 = arith.constant 0 : i32
    %c0_i32_1 = arith.constant 0 : i32
    return %arg0, %c0_i32, %c0_i32_0 : i32, i32, i32
  }
  func.func @transform_1(%arg0: i32, %arg1: i32) -> (i32, i32) {
    %c0_i32 = arith.constant 0 : i32
    %c0_i32_0 = arith.constant 0 : i32
    %c0_i32_1 = arith.constant 0 : i32
    return %c0_i32, %c0_i32_0 : i32, i32
  }
  func.func @transform_2(%arg0: i32, %arg1: i32) -> (i32, i32) {
    %c0_i32 = arith.constant 0 : i32
    %c0_i32_0 = arith.constant 0 : i32
    %c0_i32_1 = arith.constant 0 : i32
    return %c0_i32, %c0_i32_0 : i32, i32
  }
  func.func @transform_3(%arg0: i32, %arg1: i32) -> (i32, i32) {
    %c0_i32 = arith.constant 0 : i32
    %c0_i32_0 = arith.constant 0 : i32
    %c0_i32_1 = arith.constant 0 : i32
    return %c0_i32, %c0_i32_0 : i32, i32
  }
  func.func @transform_4(%arg0: i32, %arg1: i32) -> (i32, i32) {
    %c0_i32 = arith.constant 0 : i32
    %c0_i32_0 = arith.constant 0 : i32
    %c0_i32_1 = arith.constant 0 : i32
    return %c0_i32, %c0_i32_0 : i32, i32
  }
  func.func @transform_5(%arg0: i32, %arg1: i32) -> (i32, i32) {
    %c0_i32 = arith.constant 0 : i32
    %c0_i32_0 = arith.constant 0 : i32
    %c0_i32_1 = arith.constant 0 : i32
    return %c0_i32, %c0_i32_0 : i32, i32
  }
  func.func @transform_6(%arg0: i32, %arg1: i32) -> (i32, i32) {
    %c0_i32 = arith.constant 0 : i32
    %c0_i32_0 = arith.constant 0 : i32
    %c0_i32_1 = arith.constant 0 : i32
    return %c0_i32, %c0_i32_0 : i32, i32
  }
  func.func @transform_7(%arg0: i32, %arg1: i32) -> (i32, i32) {
    %c0_i32 = arith.constant 0 : i32
    %c0_i32_0 = arith.constant 0 : i32
    %c0_i32_1 = arith.constant 0 : i32
    return %c0_i32, %c0_i32_0 : i32, i32
  }
  func.func @transform_8(%arg0: i32, %arg1: i32) -> (i32, i32) {
    %c0_i32 = arith.constant 0 : i32
    %c0_i32_0 = arith.constant 0 : i32
    %c0_i32_1 = arith.constant 0 : i32
    return %c0_i32, %c0_i32_0 : i32, i32
  }
  func.func @transform_9(%arg0: i32, %arg1: i32) -> (i32, i32) {
    %c0_i32 = arith.constant 0 : i32
    %c0_i32_0 = arith.constant 0 : i32
    %c0_i32_1 = arith.constant 0 : i32
    return %c0_i32, %c0_i32_0 : i32, i32
  }
  func.func @transform_10(%arg0: i32, %arg1: i32) -> (i32, i32) {
    %c0_i32 = arith.constant 0 : i32
    %c0_i32_0 = arith.constant 0 : i32
    %c0_i32_1 = arith.constant 0 : i32
    return %c0_i32, %c0_i32_0 : i32, i32
  }
  func.func @transform_11(%arg0: i32, %arg1: i32) -> (i32, i32) {
    %c0_i32 = arith.constant 0 : i32
    %c0_i32_0 = arith.constant 0 : i32
    %c0_i32_1 = arith.constant 0 : i32
    return %c0_i32, %c0_i32_0 : i32, i32
  }
  func.func @transform_12(%arg0: i32, %arg1: i32) -> (i32, i32) {
    %c0_i32 = arith.constant 0 : i32
    %c0_i32_0 = arith.constant 0 : i32
    %c0_i32_1 = arith.constant 0 : i32
    return %c0_i32, %c0_i32_0 : i32, i32
  }
  func.func @transform_13(%arg0: i32, %arg1: i32) -> (i32, i32) {
    %c0_i32 = arith.constant 0 : i32
    %c0_i32_0 = arith.constant 0 : i32
    %c0_i32_1 = arith.constant 0 : i32
    return %c0_i32, %c0_i32_0 : i32, i32
  }
  func.func @transform_14(%arg0: i32, %arg1: i32) -> (i32, i32) {
    %c0_i32 = arith.constant 0 : i32
    %c0_i32_0 = arith.constant 0 : i32
    %c0_i32_1 = arith.constant 0 : i32
    return %c0_i32, %c0_i32_0 : i32, i32
  }
  func.func @transform_15(%arg0: i32, %arg1: i32) -> (i32, i32) {
    %c0_i32 = arith.constant 0 : i32
    %c0_i32_0 = arith.constant 0 : i32
    %c0_i32_1 = arith.constant 0 : i32
    return %c0_i32, %c0_i32_0 : i32, i32
  }
  func.func @transform_16(%arg0: i32, %arg1: i32) -> (i32, i32) {
    %c0_i32 = arith.constant 0 : i32
    %c0_i32_0 = arith.constant 0 : i32
    %c0_i32_1 = arith.constant 0 : i32
    return %c0_i32, %c0_i32_0 : i32, i32
  }
  func.func @transform_17(%arg0: i32, %arg1: i32) -> (i32, i32, i32) {
    %c0_i32 = arith.constant 0 : i32
    %c0_i32_0 = arith.constant 0 : i32
    return %arg0, %arg1, %c0_i32 : i32, i32, i32
  }
}

</mosaic_0001>

<llo_original>
// kernel: tpu_custom_call.1
$region0: #{tpu_custom_call.1}
  #allocation0 [shape = 'u32[]', space=smem, size = 0x4, offset = 0x4, fixed_abs, tag = 'smem constant byte address 0x4 - core index']
  #allocation1 [shape = 'u32[144,128]{1,0:T(1,128)}', space=vmem, size = 0x12000, scoped, tag = 'internal scratch']
  #allocation2 [shape = 'bf16[8,32]{1,0:T(8,128)(2,1)}', space=vmem, size = 0x800, scoped, tag = 'scratch operand']
  #allocation3 [shape = 'bf16[4,8,8]{2,1,0:T(8,128)(2,1)}', space=vmem, size = 0x2000, scoped, tag = 'scratch operand']
  #allocation4 [shape = 'bf16[4,8,8]{2,1,0:T(8,128)(2,1)}', space=vmem, size = 0x2000, scoped, tag = 'scratch operand']
  %s0 = inlined_call_operand.hbm [shape: f32[2,8,32], index: 0, kind: input, shape index: {}]
  %s1 = inlined_call_operand.hbm [shape: f32[1,32], index: 1, kind: input, shape index: {}]
  %s2 = inlined_call_operand.hbm [shape: f32[1,32], index: 2, kind: input, shape index: {}]
  %s3 = inlined_call_operand.hbm [shape: bf16[32,32], index: 3, kind: input, shape index: {}]
  %s4 = inlined_call_operand.hbm [shape: f32[1,32], index: 4, kind: input, shape index: {}]
  %s5 = inlined_call_operand.hbm [shape: bf16[32,32], index: 5, kind: input, shape index: {}]
  %s6 = inlined_call_operand.hbm [shape: f32[1,32], index: 6, kind: input, shape index: {}]
  %s7 = inlined_call_operand.hbm [shape: bf16[32,32], index: 7, kind: input, shape index: {}]
  %s8 = inlined_call_operand.hbm [shape: f32[1,32], index: 8, kind: input, shape index: {}]
  %s9 = inlined_call_operand.hbm [shape: bf16[32,32], index: 9, kind: input, shape index: {}]
  %s10 = inlined_call_operand.hbm [shape: f32[1,32], index: 10, kind: input, shape index: {}]
  %s11 = inlined_call_operand.hbm [shape: f32[1,32], index: 11, kind: input, shape index: {}]
  %s12 = inlined_call_operand.hbm [shape: f32[1,32], index: 12, kind: input, shape index: {}]
  %s13 = inlined_call_operand.hbm [shape: bf16[32,128], index: 13, kind: input, shape index: {}]
  %s14 = inlined_call_operand.hbm [shape: f32[1,128], index: 14, kind: input, shape index: {}]
  %s15 = inlined_call_operand.hbm [shape: bf16[128,32], index: 15, kind: input, shape index: {}]
  %s16 = inlined_call_operand.hbm [shape: f32[1,32], index: 16, kind: input, shape index: {}]
  %s17 = inlined_call_operand.hbm [shape: f32[2,8,32], index: 17, kind: output, shape index: {}]
  %s18 = sld [smem:[#allocation0]]
  $region173: #{tpu_custom_call.1} parent=0
    _
  %s20 = ssub.s32 1, %s18
  %s21 = scalar_select 0, %s20, %s18
  $region1: #{tpu_custom_call.1} parent=0
    #allocation5 [shape = 'u8[8192]{0}', space=vmem, size = 0x2000, scoped, tag = 'input window, operand 0']
    #allocation6 [shape = 's32[2]{0}', space=sflag, size = 0x8, scoped, tag = 'scoped memory for tpu_custom_call.1']
    #allocation7 [shape = 's32[2]{0}', space=sflag, size = 0x8, scoped, tag = 'scoped memory for tpu_custom_call.1']
    #allocation8 [shape = 'u8[512]{0}', space=vmem, size = 0x400, scoped, tag = 'input window, operand 1, single buffered']
    #allocation9 [shape = 's32[1]{0}', space=sflag, size = 0x4, scoped, tag = 'scoped memory for tpu_custom_call.1']
    #allocation10 [shape = 'u8[512]{0}', space=vmem, size = 0x400, scoped, tag = 'input window, operand 2, single buffered']
    #allocation11 [shape = 'u8[8192]{0}', space=vmem, size = 0x2000, scoped, tag = 'input window, operand 3, single buffered']
    #allocation12 [shape = 's32[1]{0}', space=sflag, size = 0x4, scoped, tag = 'scoped memory for tpu_custom_call.1']
    #allocation13 [shape = 'u8[512]{0}', space=vmem, size = 0x400, scoped, tag = 'input window, operand 4, single buffered']
    #allocation14 [shape = 'u8[8192]{0}', space=vmem, size = 0x2000, scoped, tag = 'input window, operand 5, single buffered']
    #allocation15 [shape = 's32[1]{0}', space=sflag, size = 0x4, scoped, tag = 'scoped memory for tpu_custom_call.1']
    #allocation16 [shape = 'u8[512]{0}', space=vmem, size = 0x400, scoped, tag = 'input window, operand 6, single buffered']
    #allocation17 [shape = 'u8[8192]{0}', space=vmem, size = 0x2000, scoped, tag = 'input window, operand 7, single buffered']
    #allocation18 [shape = 's32[1]{0}', space=sflag, size = 0x4, scoped, tag = 'scoped memory for tpu_custom_call.1']
    #allocation19 [shape = 'u8[512]{0}', space=vmem, size = 0x400, scoped, tag = 'input window, operand 8, single buffered']
    #allocation20 [shape = 'u8[8192]{0}', space=vmem, size = 0x2000, scoped, tag = 'input window, operand 9, single buffered']
    #allocation21 [shape = 's32[1]{0}', space=sflag, size = 0x4, scoped, tag = 'scoped memory for tpu_custom_call.1']
    #allocation22 [shape = 'u8[512]{0}', space=vmem, size = 0x400, scoped, tag = 'input window, operand 10, single buffered']
    #allocation23 [shape = 'u8[512]{0}', space=vmem, size = 0x400, scoped, tag = 'input window, operand 11, single buffered']
    #allocation24 [shape = 's32[1]{0}', space=sflag, size = 0x4, scoped, tag = 'scoped memory for tpu_custom_call.1']
    #allocation25 [shape = 'u8[512]{0}', space=vmem, size = 0x400, scoped, tag = 'input window, operand 12, single buffered']
    #allocation26 [shape = 'u8[8192]{0}', space=vmem, size = 0x2000, scoped, tag = 'input window, operand 13, single buffered']
    #allocation27 [shape = 's32[1]{0}', space=sflag, size = 0x4, scoped, tag = 'scoped memory for tpu_custom_call.1']
    #allocation28 [shape = 'u8[512]{0}', space=vmem, size = 0x400, scoped, tag = 'input window, operand 14, single buffered']
    #allocation29 [shape = 'u8[32768]{0}', space=vmem, size = 0x8000, scoped, tag = 'input window, operand 15, single buffered']
    #allocation30 [shape = 's32[1]{0}', space=sflag, size = 0x4, scoped, tag = 'scoped memory for tpu_custom_call.1']
    #allocation31 [shape = 'u8[512]{0}', space=vmem, size = 0x400, scoped, tag = 'input window, operand 16, single buffered']
    #allocation32 [shape = 'u8[8192]{0}', space=vmem, size = 0x2000, scoped, tag = 'output window, operand 0']
    %22 = vsyncpa [#allocation6], 0
    %s23 = scalar_lea.sflag [#allocation6], 1
    %24 = vsyncpa %s23, 0
    %25 = vsyncpa [#allocation9], 0
    %26 = vsyncpa [#allocation12], 0
    %27 = vsyncpa [#allocation15], 0
    %28 = vsyncpa [#allocation18], 0
    %29 = vsyncpa [#allocation21], 0
    %30 = vsyncpa [#allocation24], 0
    %31 = vsyncpa [#allocation27], 0
    %32 = vsyncpa [#allocation30], 0
    %33 = vsyncpa [#allocation7], 0
    %s34 = scalar_lea.sflag [#allocation7], 1
    %35 = vsyncpa %s34, 0
    loop: start=0, step=1, limit=4
    $region2: #{tpu_custom_call.1} parent=1 // loop_pre_header
      _
    $region3: #{tpu_custom_call.1} parent=1 // loop_header
      %s37 = sphi 0, %s41
      %p38 = scmp.ge.s32.totalorder %s37, 4
      %s44 = sphi 0, %s56
      %s45 = sphi 0, %s52
      %s46 = sphi 0, %s44
      %s47 = sphi 0, %s45
      %s48 = sphi 0, %s46
      %s49 = sphi 0, %s47
      %s59 = sphi 0, %s61
      %s62 = sphi 0, %s59
      %s63 = sphi 0, %s62
      %s79 = sphi 0, %s63
      %s83 = sphi 0, %s83
      %s85 = sphi 0, %s83
      %s86 = sphi 0, %s85
      %s100 = sphi 0, %s86
      %s104 = sphi 0, %s104
      %s106 = sphi 0, %s104
      %s107 = sphi 0, %s106
      %s121 = sphi 0, %s107
      %s125 = sphi 0, %s125
      %s127 = sphi 0, %s125
      %s128 = sphi 0, %s127
      %s142 = sphi 0, %s128
      %s146 = sphi 0, %s146
      %s148 = sphi 0, %s146
      %s149 = sphi 0, %s148
      %s163 = sphi 0, %s149
      %s167 = sphi 0, %s167
      %s169 = sphi 0, %s167
      %s170 = sphi 0, %s169
      %s184 = sphi 0, %s170
      %s188 = sphi 0, %s188
      %s190 = sphi 0, %s188
      %s191 = sphi 0, %s190
      %s205 = sphi 0, %s191
      %s209 = sphi 0, %s209
      %s211 = sphi 0, %s209
      %s212 = sphi 0, %s211
      %s226 = sphi 0, %s212
      %s230 = sphi 0, %s230
      %s232 = sphi 0, %s230
      %s233 = sphi 0, %s232
      %s247 = sphi 0, %s233
      %s251 = sphi 0, %s251
      %s253 = sphi 0, %s251
      %s254 = sphi 0, %s253
      %s268 = sphi 0, %s254
      %s272 = sphi 0, %s272
      %s274 = sphi 0, %s272
      %s275 = sphi 0, %s274
      %s289 = sphi 0, %s275
      %s293 = sphi 0, %s293
      %s295 = sphi 0, %s293
      %s296 = sphi 0, %s295
      %s310 = sphi 0, %s296
      %s314 = sphi 0, %s314
      %s316 = sphi 0, %s314
      %s317 = sphi 0, %s316
      %s331 = sphi 0, %s317
      %s335 = sphi 0, %s335
      %s337 = sphi 0, %s335
      %s338 = sphi 0, %s337
      %s352 = sphi 0, %s338
      %s356 = sphi 0, %s356
      %s358 = sphi 0, %s356
      %s359 = sphi 0, %s358
      %s373 = sphi 0, %s359
      %s377 = sphi 0, %s377
      %s379 = sphi 0, %s377
      %s380 = sphi 0, %s379
      %s394 = sphi 0, %s380
      %s398 = sphi 0, %s398
      %s400 = sphi 0, %s398
      %s401 = sphi 0, %s400
      %s415 = sphi 0, %s401
      %s423 = sphi 0, %s425
      %s426 = sphi 0, %s423
      %s427 = sphi 0, %s426
      %s443 = sphi 0, %s427
    $region4: #{tpu_custom_call.1} parent=1 // loop_header_branch
      %40 = sbr.rel (%p38) target = $region8
    $region5: #{tpu_custom_call.1} parent=1 // loop_body
      %s42 = ssub.s32 %s37, 1
      %s43 = ssub.s32 %s37, 2
      %s50 = sadd.s32 1, %s45
      %p51 = scmp.ge.s32.totalorder %s50, 1
      %s52 = scalar_select %p51, 0, %s50
      %s53 = sadd.s32 1, %s44
      %s54 = scalar_select %p51, %s53, %s44
      %p55 = scmp.ge.s32.totalorder %s54, 2
      %s56 = scalar_select %p55, 0, %s54
      %s57 = ssub.s32 %s44, %s56
      %p58 = scmp.eq.s32.totalorder %s57, 0
      %s60 = sadd.s32 %s59, 1
      %s61 = scalar_select %p58, %s59, %s60
      %p64 = pneg %p58
      %p65 = scmp.eq.s32.totalorder %s37, 1
      %p66 = por %p64, %p65
      %p67 = scmp.ne.s32.totalorder %s59, %s62
      %p68 = scmp.eq.s32.totalorder %s37, 0
      %p69 = por %p67, %p68
      %p70 = scmp.ne.s32.totalorder %s59, %s62
      %p71 = scmp.eq.s32.totalorder %s42, 1
      %p72 = por %p70, %p71
      %p73 = scmp.ne.s32.totalorder %s62, %s63
      %p74 = scmp.eq.s32.totalorder %s42, 0
      %p75 = por %p73, %p74
      %p76 = scmp.ne.s32.totalorder %s62, %s63
      %p77 = scmp.eq.s32.totalorder %s43, 1
      %p78 = por %p76, %p77
      %p80 = scmp.ne.s32.totalorder %s63, %s79
      %p81 = scmp.eq.s32.totalorder %s43, 0
      %p82 = por %p80, %p81
      %s84 = sadd.s32 %s83, 1
      %p87 = scmp.eq.s32.totalorder %s37, 1
      %p88 = scmp.ne.s32.totalorder %s83, %s85
      %p89 = scmp.eq.s32.totalorder %s37, 0
      %p90 = por %p88, %p89
      %p91 = scmp.ne.s32.totalorder %s83, %s85
      %p92 = scmp.eq.s32.totalorder %s42, 1
      %p93 = por %p91, %p92
      %p94 = scmp.ne.s32.totalorder %s85, %s86
      %p95 = scmp.eq.s32.totalorder %s42, 0
      %p96 = por %p94, %p95
      %p97 = scmp.ne.s32.totalorder %s85, %s86
      %p98 = scmp.eq.s32.totalorder %s43, 1
      %p99 = por %p97, %p98
      %p101 = scmp.ne.s32.totalorder %s86, %s100
      %p102 = scmp.eq.s32.totalorder %s43, 0
      %p103 = por %p101, %p102
      %s105 = sadd.s32 %s104, 1
      %p108 = scmp.eq.s32.totalorder %s37, 1
      %p109 = scmp.ne.s32.totalorder %s104, %s106
      %p110 = scmp.eq.s32.totalorder %s37, 0
      %p111 = por %p109, %p110
      %p112 = scmp.ne.s32.totalorder %s104, %s106
      %p113 = scmp.eq.s32.totalorder %s42, 1
      %p114 = por %p112, %p113
      %p115 = scmp.ne.s32.totalorder %s106, %s107
      %p116 = scmp.eq.s32.totalorder %s42, 0
      %p117 = por %p115, %p116
      %p118 = scmp.ne.s32.totalorder %s106, %s107
      %p119 = scmp.eq.s32.totalorder %s43, 1
      %p120 = por %p118, %p119
      %p122 = scmp.ne.s32.totalorder %s107, %s121
      %p123 = scmp.eq.s32.totalorder %s43, 0
      %p124 = por %p122, %p123
      %s126 = sadd.s32 %s125, 1
      %p129 = scmp.eq.s32.totalorder %s37, 1
      %p130 = scmp.ne.s32.totalorder %s125, %s127
      %p131 = scmp.eq.s32.totalorder %s37, 0
      %p132 = por %p130, %p131
      %p133 = scmp.ne.s32.totalorder %s125, %s127
      %p134 = scmp.eq.s32.totalorder %s42, 1
      %p135 = por %p133, %p134
      %p136 = scmp.ne.s32.totalorder %s127, %s128
      %p137 = scmp.eq.s32.totalorder %s42, 0
      %p138 = por %p136, %p137
      %p139 = scmp.ne.s32.totalorder %s127, %s128
      %p140 = scmp.eq.s32.totalorder %s43, 1
      %p141 = por %p139, %p140
      %p143 = scmp.ne.s32.totalorder %s128, %s142
      %p144 = scmp.eq.s32.totalorder %s43, 0
      %p145 = por %p143, %p144
      %s147 = sadd.s32 %s146, 1
      %p150 = scmp.eq.s32.totalorder %s37, 1
      %p151 = scmp.ne.s32.totalorder %s146, %s148
      %p152 = scmp.eq.s32.totalorder %s37, 0
      %p153 = por %p151, %p152
      %p154 = scmp.ne.s32.totalorder %s146, %s148
      %p155 = scmp.eq.s32.totalorder %s42, 1
      %p156 = por %p154, %p155
      %p157 = scmp.ne.s32.totalorder %s148, %s149
      %p158 = scmp.eq.s32.totalorder %s42, 0
      %p159 = por %p157, %p158
      %p160 = scmp.ne.s32.totalorder %s148, %s149
      %p161 = scmp.eq.s32.totalorder %s43, 1
      %p162 = por %p160, %p161
      %p164 = scmp.ne.s32.totalorder %s149, %s163
      %p165 = scmp.eq.s32.totalorder %s43, 0
      %p166 = por %p164, %p165
      %s168 = sadd.s32 %s167, 1
      %p171 = scmp.eq.s32.totalorder %s37, 1
      %p172 = scmp.ne.s32.totalorder %s167, %s169
      %p173 = scmp.eq.s32.totalorder %s37, 0
      %p174 = por %p172, %p173
      %p175 = scmp.ne.s32.totalorder %s167, %s169
      %p176 = scmp.eq.s32.totalorder %s42, 1
      %p177 = por %p175, %p176
      %p178 = scmp.ne.s32.totalorder %s169, %s170
      %p179 = scmp.eq.s32.totalorder %s42, 0
      %p180 = por %p178, %p179
      %p181 = scmp.ne.s32.totalorder %s169, %s170
      %p182 = scmp.eq.s32.totalorder %s43, 1
      %p183 = por %p181, %p182
      %p185 = scmp.ne.s32.totalorder %s170, %s184
      %p186 = scmp.eq.s32.totalorder %s43, 0
      %p187 = por %p185, %p186
      %s189 = sadd.s32 %s188, 1
      %p192 = scmp.eq.s32.totalorder %s37, 1
      %p193 = scmp.ne.s32.totalorder %s188, %s190
      %p194 = scmp.eq.s32.totalorder %s37, 0
      %p195 = por %p193, %p194
      %p196 = scmp.ne.s32.totalorder %s188, %s190
      %p197 = scmp.eq.s32.totalorder %s42, 1
      %p198 = por %p196, %p197
      %p199 = scmp.ne.s32.totalorder %s190, %s191
      %p200 = scmp.eq.s32.totalorder %s42, 0
      %p201 = por %p199, %p200
      %p202 = scmp.ne.s32.totalorder %s190, %s191
      %p203 = scmp.eq.s32.totalorder %s43, 1
      %p204 = por %p202, %p203
      %p206 = scmp.ne.s32.totalorder %s191, %s205
      %p207 = scmp.eq.s32.totalorder %s43, 0
      %p208 = por %p206, %p207
      %s210 = sadd.s32 %s209, 1
      %p213 = scmp.eq.s32.totalorder %s37, 1
      %p214 = scmp.ne.s32.totalorder %s209, %s211
      %p215 = scmp.eq.s32.totalorder %s37, 0
      %p216 = por %p214, %p215
      %p217 = scmp.ne.s32.totalorder %s209, %s211
      %p218 = scmp.eq.s32.totalorder %s42, 1
      %p219 = por %p217, %p218
      %p220 = scmp.ne.s32.totalorder %s211, %s212
      %p221 = scmp.eq.s32.totalorder %s42, 0
      %p222 = por %p220, %p221
      %p223 = scmp.ne.s32.totalorder %s211, %s212
      %p224 = scmp.eq.s32.totalorder %s43, 1
      %p225 = por %p223, %p224
      %p227 = scmp.ne.s32.totalorder %s212, %s226
      %p228 = scmp.eq.s32.totalorder %s43, 0
      %p229 = por %p227, %p228
      %s231 = sadd.s32 %s230, 1
      %p234 = scmp.eq.s32.totalorder %s37, 1
      %p235 = scmp.ne.s32.totalorder %s230, %s232
      %p236 = scmp.eq.s32.totalorder %s37, 0
      %p237 = por %p235, %p236
      %p238 = scmp.ne.s32.totalorder %s230, %s232
      %p239 = scmp.eq.s32.totalorder %s42, 1
      %p240 = por %p238, %p239
      %p241 = scmp.ne.s32.totalorder %s232, %s233
      %p242 = scmp.eq.s32.totalorder %s42, 0
      %p243 = por %p241, %p242
      %p244 = scmp.ne.s32.totalorder %s232, %s233
      %p245 = scmp.eq.s32.totalorder %s43, 1
      %p246 = por %p244, %p245
      %p248 = scmp.ne.s32.totalorder %s233, %s247
      %p249 = scmp.eq.s32.totalorder %s43, 0
      %p250 = por %p248, %p249
      %s252 = sadd.s32 %s251, 1
      %p255 = scmp.eq.s32.totalorder %s37, 1
      %p256 = scmp.ne.s32.totalorder %s251, %s253
      %p257 = scmp.eq.s32.totalorder %s37, 0
      %p258 = por %p256, %p257
      %p259 = scmp.ne.s32.totalorder %s251, %s253
      %p260 = scmp.eq.s32.totalorder %s42, 1
      %p261 = por %p259, %p260
      %p262 = scmp.ne.s32.totalorder %s253, %s254
      %p263 = scmp.eq.s32.totalorder %s42, 0
      %p264 = por %p262, %p263
      %p265 = scmp.ne.s32.totalorder %s253, %s254
      %p266 = scmp.eq.s32.totalorder %s43, 1
      %p267 = por %p265, %p266
      %p269 = scmp.ne.s32.totalorder %s254, %s268
      %p270 = scmp.eq.s32.totalorder %s43, 0
      %p271 = por %p269, %p270
      %s273 = sadd.s32 %s272, 1
      %p276 = scmp.eq.s32.totalorder %s37, 1
      %p277 = scmp.ne.s32.totalorder %s272, %s274
      %p278 = scmp.eq.s32.totalorder %s37, 0
      %p279 = por %p277, %p278
      %p280 = scmp.ne.s32.totalorder %s272, %s274
      %p281 = scmp.eq.s32.totalorder %s42, 1
      %p282 = por %p280, %p281
      %p283 = scmp.ne.s32.totalorder %s274, %s275
      %p284 = scmp.eq.s32.totalorder %s42, 0
      %p285 = por %p283, %p284
      %p286 = scmp.ne.s32.totalorder %s274, %s275
      %p287 = scmp.eq.s32.totalorder %s43, 1
      %p288 = por %p286, %p287
      %p290 = scmp.ne.s32.totalorder %s275, %s289
      %p291 = scmp.eq.s32.totalorder %s43, 0
      %p292 = por %p290, %p291
      %s294 = sadd.s32 %s293, 1
      %p297 = scmp.eq.s32.totalorder %s37, 1
      %p298 = scmp.ne.s32.totalorder %s293, %s295
      %p299 = scmp.eq.s32.totalorder %s37, 0
      %p300 = por %p298, %p299
      %p301 = scmp.ne.s32.totalorder %s293, %s295
      %p302 = scmp.eq.s32.totalorder %s42, 1
      %p303 = por %p301, %p302
      %p304 = scmp.ne.s32.totalorder %s295, %s296
      %p305 = scmp.eq.s32.totalorder %s42, 0
      %p306 = por %p304, %p305
      %p307 = scmp.ne.s32.totalorder %s295, %s296
      %p308 = scmp.eq.s32.totalorder %s43, 1
      %p309 = por %p307, %p308
      %p311 = scmp.ne.s32.totalorder %s296, %s310
      %p312 = scmp.eq.s32.totalorder %s43, 0
      %p313 = por %p311, %p312
      %s315 = sadd.s32 %s314, 1
      %p318 = scmp.eq.s32.totalorder %s37, 1
      %p319 = scmp.ne.s32.totalorder %s314, %s316
      %p320 = scmp.eq.s32.totalorder %s37, 0
      %p321 = por %p319, %p320
      %p322 = scmp.ne.s32.totalorder %s314, %s316
      %p323 = scmp.eq.s32.totalorder %s42, 1
      %p324 = por %p322, %p323
      %p325 = scmp.ne.s32.totalorder %s316, %s317
      %p326 = scmp.eq.s32.totalorder %s42, 0
      %p327 = por %p325, %p326
      %p328 = scmp.ne.s32.totalorder %s316, %s317
      %p329 = scmp.eq.s32.totalorder %s43, 1
      %p330 = por %p328, %p329
      %p332 = scmp.ne.s32.totalorder %s317, %s331
      %p333 = scmp.eq.s32.totalorder %s43, 0
      %p334 = por %p332, %p333
      %s336 = sadd.s32 %s335, 1
      %p339 = scmp.eq.s32.totalorder %s37, 1
      %p340 = scmp.ne.s32.totalorder %s335, %s337
      %p341 = scmp.eq.s32.totalorder %s37, 0
      %p342 = por %p340, %p341
      %p343 = scmp.ne.s32.totalorder %s335, %s337
      %p344 = scmp.eq.s32.totalorder %s42, 1
      %p345 = por %p343, %p344
      %p346 = scmp.ne.s32.totalorder %s337, %s338
      %p347 = scmp.eq.s32.totalorder %s42, 0
      %p348 = por %p346, %p347
      %p349 = scmp.ne.s32.totalorder %s337, %s338
      %p350 = scmp.eq.s32.totalorder %s43, 1
      %p351 = por %p349, %p350
      %p353 = scmp.ne.s32.totalorder %s338, %s352
      %p354 = scmp.eq.s32.totalorder %s43, 0
      %p355 = por %p353, %p354
      %s357 = sadd.s32 %s356, 1
      %p360 = scmp.eq.s32.totalorder %s37, 1
      %p361 = scmp.ne.s32.totalorder %s356, %s358
      %p362 = scmp.eq.s32.totalorder %s37, 0
      %p363 = por %p361, %p362
      %p364 = scmp.ne.s32.totalorder %s356, %s358
      %p365 = scmp.eq.s32.totalorder %s42, 1
      %p366 = por %p364, %p365
      %p367 = scmp.ne.s32.totalorder %s358, %s359
      %p368 = scmp.eq.s32.totalorder %s42, 0
      %p369 = por %p367, %p368
      %p370 = scmp.ne.s32.totalorder %s358, %s359
      %p371 = scmp.eq.s32.totalorder %s43, 1
      %p372 = por %p370, %p371
      %p374 = scmp.ne.s32.totalorder %s359, %s373
      %p375 = scmp.eq.s32.totalorder %s43, 0
      %p376 = por %p374, %p375
      %s378 = sadd.s32 %s377, 1
      %p381 = scmp.eq.s32.totalorder %s37, 1
      %p382 = scmp.ne.s32.totalorder %s377, %s379
      %p383 = scmp.eq.s32.totalorder %s37, 0
      %p384 = por %p382, %p383
      %p385 = scmp.ne.s32.totalorder %s377, %s379
      %p386 = scmp.eq.s32.totalorder %s42, 1
      %p387 = por %p385, %p386
      %p388 = scmp.ne.s32.totalorder %s379, %s380
      %p389 = scmp.eq.s32.totalorder %s42, 0
      %p390 = por %p388, %p389
      %p391 = scmp.ne.s32.totalorder %s379, %s380
      %p392 = scmp.eq.s32.totalorder %s43, 1
      %p393 = por %p391, %p392
      %p395 = scmp.ne.s32.totalorder %s380, %s394
      %p396 = scmp.eq.s32.totalorder %s43, 0
      %p397 = por %p395, %p396
      %s399 = sadd.s32 %s398, 1
      %p402 = scmp.eq.s32.totalorder %s37, 1
      %p403 = scmp.ne.s32.totalorder %s398, %s400
      %p404 = scmp.eq.s32.totalorder %s37, 0
      %p405 = por %p403, %p404
      %p406 = scmp.ne.s32.totalorder %s398, %s400
      %p407 = scmp.eq.s32.totalorder %s42, 1
      %p408 = por %p406, %p407
      %p409 = scmp.ne.s32.totalorder %s400, %s401
      %p410 = scmp.eq.s32.totalorder %s42, 0
      %p411 = por %p409, %p410
      %p412 = scmp.ne.s32.totalorder %s400, %s401
      %p413 = scmp.eq.s32.totalorder %s43, 1
      %p414 = por %p412, %p413
      %p416 = scmp.ne.s32.totalorder %s401, %s415
      %p417 = scmp.eq.s32.totalorder %s43, 0
      %p418 = por %p416, %p417
      %s419 = ssub.s32 %s44, %s56
      %s420 = ssub.s32 %s45, %s52
      %s421 = sor.u32 %s419, %s420
      %p422 = scmp.eq.s32.totalorder %s421, 0
      %s424 = sadd.s32 %s423, 1
      %s425 = scalar_select %p422, %s423, %s424
      %p428 = pneg %p422
      %p429 = scmp.eq.s32.totalorder %s37, 1
      %p430 = por %p428, %p429
      %p431 = scmp.ne.s32.totalorder %s423, %s426
      %p432 = scmp.eq.s32.totalorder %s37, 0
      %p433 = por %p431, %p432
      %p434 = scmp.ne.s32.totalorder %s423, %s426
      %p435 = scmp.eq.s32.totalorder %s42, 1
      %p436 = por %p434, %p435
      %p437 = scmp.ne.s32.totalorder %s426, %s427
      %p438 = scmp.eq.s32.totalorder %s42, 0
      %p439 = por %p437, %p438
      %p440 = scmp.ne.s32.totalorder %s426, %s427
      %p441 = scmp.eq.s32.totalorder %s43, 1
      %p442 = por %p440, %p441
      %p444 = scmp.ne.s32.totalorder %s427, %s443
      %p445 = scmp.eq.s32.totalorder %s43, 0
      %p446 = por %p444, %p445
      %p447 = scmp.le.s32.totalorder 1, %s37
      %p448 = scmp.lt.s32.totalorder %s37, 3
      %p449 = pnand %p447, %p448
      %p450 = pneg %p449
      // Predicated region
      $region9: #{tpu_custom_call.1} parent=5 // pred_check
        _
      $region10: #{tpu_custom_call.1} parent=5 // pred_check_branch
        %452 = sbr.rel (%p449) target = $region12
      $region11: #{tpu_custom_call.1} parent=5 // pred_region
        %s453 = ssub.s32 %s37, 1
        // Predicated region
        $region13: #{tpu_custom_call.1} parent=11 // pred_check
          %p454 = pneg %p96
        $region14: #{tpu_custom_call.1} parent=11 // pred_check_branch
          %456 = sbr.rel (%p454) target = $region16
        $region15: #{tpu_custom_call.1} parent=11 // pred_region
          %s458 = ssub.s32 16, 16
          %459 = vsyncadd [#allocation9], %s458
          %s461 = sshll.u32 [#allocation8], 4
          %s462 = int_to_ptr.vmem [resolvable:$true] %s461
          %464 = dma.hbm_to_vmem [thread:$0]  %s1, 16, %s462, [#allocation9]
        $region16: #{tpu_custom_call.1} parent=11 // pred_fallthru
          _
        // Predicated region
        $region17: #{tpu_custom_call.1} parent=11 // pred_check
          %p465 = pneg %p117
        $region18: #{tpu_custom_call.1} parent=11 // pred_check_branch
          %467 = sbr.rel (%p465) target = $region20
        $region19: #{tpu_custom_call.1} parent=11 // pred_region
          %s469 = ssub.s32 16, 16
          %470 = vsyncadd [#allocation9], %s469
          %s472 = sshll.u32 [#allocation10], 4
          %s473 = int_to_ptr.vmem [resolvable:$true] %s472
          %475 = dma.hbm_to_vmem [thread:$0]  %s2, 16, %s473, [#allocation9]
        $region20: #{tpu_custom_call.1} parent=11 // pred_fallthru
          _
        // Predicated region
        $region21: #{tpu_custom_call.1} parent=11 // pred_check
          %p476 = pneg %p138
        $region22: #{tpu_custom_call.1} parent=11 // pred_check_branch
          %478 = sbr.rel (%p476) target = $region24
        $region23: #{tpu_custom_call.1} parent=11 // pred_region
          %s480 = ssub.s32 256, 256
          %481 = vsyncadd [#allocation12], %s480
          %s482 = sshll.u32 [#allocation11], 4
          %s483 = int_to_ptr.vmem [resolvable:$true] %s482
          %488 = dma.hbm_to_vmem [thread:$0]  %s3, 256, %s483, [#allocation12], 64, 64, 4
        $region24: #{tpu_custom_call.1} parent=11 // pred_fallthru
          _
        // Predicated region
        $region25: #{tpu_custom_call.1} parent=11 // pred_check
          %p489 = pneg %p159
        $region26: #{tpu_custom_call.1} parent=11 // pred_check_branch
          %491 = sbr.rel (%p489) target = $region28
        $region27: #{tpu_custom_call.1} parent=11 // pred_region
          %s493 = ssub.s32 16, 16
          %494 = vsyncadd [#allocation12], %s493
          %s496 = sshll.u32 [#allocation13], 4
          %s497 = int_to_ptr.vmem [resolvable:$true] %s496
          %499 = dma.hbm_to_vmem [thread:$0]  %s4, 16, %s497, [#allocation12]
        $region28: #{tpu_custom_call.1} parent=11 // pred_fallthru
          _
        // Predicated region
        $region29: #{tpu_custom_call.1} parent=11 // pred_check
          %p500 = pneg %p180
        $region30: #{tpu_custom_call.1} parent=11 // pred_check_branch
          %502 = sbr.rel (%p500) target = $region32
        $region31: #{tpu_custom_call.1} parent=11 // pred_region
          %s504 = ssub.s32 256, 256
          %505 = vsyncadd [#allocation15], %s504
          %s506 = sshll.u32 [#allocation14], 4
          %s507 = int_to_ptr.vmem [resolvable:$true] %s506
          %512 = dma.hbm_to_vmem [thread:$0]  %s5, 256, %s507, [#allocation15], 64, 64, 4
        $region32: #{tpu_custom_call.1} parent=11 // pred_fallthru
          _
        // Predicated region
        $region33: #{tpu_custom_call.1} parent=11 // pred_check
          %p513 = pneg %p201
        $region34: #{tpu_custom_call.1} parent=11 // pred_check_branch
          %515 = sbr.rel (%p513) target = $region36
        $region35: #{tpu_custom_call.1} parent=11 // pred_region
          %s517 = ssub.s32 16, 16
          %518 = vsyncadd [#allocation15], %s517
          %s520 = sshll.u32 [#allocation16], 4
          %s521 = int_to_ptr.vmem [resolvable:$true] %s520
          %523 = dma.hbm_to_vmem [thread:$0]  %s6, 16, %s521, [#allocation15]
        $region36: #{tpu_custom_call.1} parent=11 // pred_fallthru
          _
        // Predicated region
        $region37: #{tpu_custom_call.1} parent=11 // pred_check
          %p524 = pneg %p222
        $region38: #{tpu_custom_call.1} parent=11 // pred_check_branch
          %526 = sbr.rel (%p524) target = $region40
        $region39: #{tpu_custom_call.1} parent=11 // pred_region
          %s528 = ssub.s32 256, 256
          %529 = vsyncadd [#allocation18], %s528
          %s530 = sshll.u32 [#allocation17], 4
          %s531 = int_to_ptr.vmem [resolvable:$true] %s530
          %536 = dma.hbm_to_vmem [thread:$0]  %s7, 256, %s531, [#allocation18], 64, 64, 4
        $region40: #{tpu_custom_call.1} parent=11 // pred_fallthru
          _
        // Predicated region
        $region41: #{tpu_custom_call.1} parent=11 // pred_check
          %p537 = pneg %p243
        $region42: #{tpu_custom_call.1} parent=11 // pred_check_branch
          %539 = sbr.rel (%p537) target = $region44
        $region43: #{tpu_custom_call.1} parent=11 // pred_region
          %s541 = ssub.s32 16, 16
          %542 = vsyncadd [#allocation18], %s541
          %s544 = sshll.u32 [#allocation19], 4
          %s545 = int_to_ptr.vmem [resolvable:$true] %s544
          %547 = dma.hbm_to_vmem [thread:$0]  %s8, 16, %s545, [#allocation18]
        $region44: #{tpu_custom_call.1} parent=11 // pred_fallthru
          _
        // Predicated region
        $region45: #{tpu_custom_call.1} parent=11 // pred_check
          %p548 = pneg %p264
        $region46: #{tpu_custom_call.1} parent=11 // pred_check_branch
          %550 = sbr.rel (%p548) target = $region48
        $region47: #{tpu_custom_call.1} parent=11 // pred_region
          %s552 = ssub.s32 256, 256
          %553 = vsyncadd [#allocation21], %s552
          %s554 = sshll.u32 [#allocation20], 4
          %s555 = int_to_ptr.vmem [resolvable:$true] %s554
          %560 = dma.hbm_to_vmem [thread:$0]  %s9, 256, %s555, [#allocation21], 64, 64, 4
        $region48: #{tpu_custom_call.1} parent=11 // pred_fallthru
          _
        // Predicated region
        $region49: #{tpu_custom_call.1} parent=11 // pred_check
          %p561 = pneg %p285
        $region50: #{tpu_custom_call.1} parent=11 // pred_check_branch
          %563 = sbr.rel (%p561) target = $region52
        $region51: #{tpu_custom_call.1} parent=11 // pred_region
          %s565 = ssub.s32 16, 16
          %566 = vsyncadd [#allocation21], %s565
          %s568 = sshll.u32 [#allocation22], 4
          %s569 = int_to_ptr.vmem [resolvable:$true] %s568
          %571 = dma.hbm_to_vmem [thread:$0]  %s10, 16, %s569, [#allocation21]
        $region52: #{tpu_custom_call.1} parent=11 // pred_fallthru
          _
        // Predicated region
        $region53: #{tpu_custom_call.1} parent=11 // pred_check
          %p572 = pneg %p306
        $region54: #{tpu_custom_call.1} parent=11 // pred_check_branch
          %574 = sbr.rel (%p572) target = $region56
        $region55: #{tpu_custom_call.1} parent=11 // pred_region
          %s576 = ssub.s32 16, 16
          %577 = vsyncadd [#allocation24], %s576
          %s579 = sshll.u32 [#allocation23], 4
          %s580 = int_to_ptr.vmem [resolvable:$true] %s579
          %582 = dma.hbm_to_vmem [thread:$0]  %s11, 16, %s580, [#allocation24]
        $region56: #{tpu_custom_call.1} parent=11 // pred_fallthru
          _
        // Predicated region
        $region57: #{tpu_custom_call.1} parent=11 // pred_check
          %p583 = pneg %p327
        $region58: #{tpu_custom_call.1} parent=11 // pred_check_branch
          %585 = sbr.rel (%p583) target = $region60
        $region59: #{tpu_custom_call.1} parent=11 // pred_region
          %s587 = ssub.s32 16, 16
          %588 = vsyncadd [#allocation24], %s587
          %s590 = sshll.u32 [#allocation25], 4
          %s591 = int_to_ptr.vmem [resolvable:$true] %s590
          %593 = dma.hbm_to_vmem [thread:$0]  %s12, 16, %s591, [#allocation24]
        $region60: #{tpu_custom_call.1} parent=11 // pred_fallthru
          _
        // Predicated region
        $region61: #{tpu_custom_call.1} parent=11 // pred_check
          %p594 = pneg %p348
        $region62: #{tpu_custom_call.1} parent=11 // pred_check_branch
          %596 = sbr.rel (%p594) target = $region64
        $region63: #{tpu_custom_call.1} parent=11 // pred_region
          %s598 = ssub.s32 256, 256
          %599 = vsyncadd [#allocation27], %s598
          %s600 = sshll.u32 [#allocation26], 4
          %s601 = int_to_ptr.vmem [resolvable:$true] %s600
          %606 = dma.hbm_to_vmem [thread:$0]  %s13, 256, %s601, [#allocation27], 64, 64, 4
        $region64: #{tpu_custom_call.1} parent=11 // pred_fallthru
          _
        // Predicated region
        $region65: #{tpu_custom_call.1} parent=11 // pred_check
          %p607 = pneg %p369
        $region66: #{tpu_custom_call.1} parent=11 // pred_check_branch
          %609 = sbr.rel (%p607) target = $region68
        $region67: #{tpu_custom_call.1} parent=11 // pred_region
          %s611 = ssub.s32 16, 16
          %612 = vsyncadd [#allocation27], %s611
          %s614 = sshll.u32 [#allocation28], 4
          %s615 = int_to_ptr.vmem [resolvable:$true] %s614
          %617 = dma.hbm_to_vmem [thread:$0]  %s14, 16, %s615, [#allocation27]
        $region68: #{tpu_custom_call.1} parent=11 // pred_fallthru
          _
        // Predicated region
        $region69: #{tpu_custom_call.1} parent=11 // pred_check
          %p618 = pneg %p390
        $region70: #{tpu_custom_call.1} parent=11 // pred_check_branch
          %620 = sbr.rel (%p618) target = $region72
        $region71: #{tpu_custom_call.1} parent=11 // pred_region
          %s622 = ssub.s32 1024, 1024
          %623 = vsyncadd [#allocation30], %s622
          %s624 = sshll.u32 [#allocation29], 4
          %s625 = int_to_ptr.vmem [resolvable:$true] %s624
          %630 = dma.hbm_to_vmem [thread:$0]  %s15, 1024, %s625, [#allocation30], 64, 64, 4
        $region72: #{tpu_custom_call.1} parent=11 // pred_fallthru
          _
        // Predicated region
        $region73: #{tpu_custom_call.1} parent=11 // pred_check
          %p631 = pneg %p411
        $region74: #{tpu_custom_call.1} parent=11 // pred_check_branch
          %633 = sbr.rel (%p631) target = $region76
        $region75: #{tpu_custom_call.1} parent=11 // pred_region
          %s635 = ssub.s32 16, 16
          %636 = vsyncadd [#allocation30], %s635
          %s638 = sshll.u32 [#allocation31], 4
          %s639 = int_to_ptr.vmem [resolvable:$true] %s638
          %641 = dma.hbm_to_vmem [thread:$0]  %s16, 16, %s639, [#allocation30]
        $region76: #{tpu_custom_call.1} parent=11 // pred_fallthru
          _
      $region12: #{tpu_custom_call.1} parent=5 // pred_fallthru
        _
      %p642 = scmp.lt.s32.totalorder %s37, 2
      // Predicated region
      $region77: #{tpu_custom_call.1} parent=5 // pred_check
        %p643 = pneg %p642
      $region78: #{tpu_custom_call.1} parent=5 // pred_check_branch
        %645 = sbr.rel (%p643) target = $region80
      $region79: #{tpu_custom_call.1} parent=5 // pred_region
        // Predicated region
        $region81: #{tpu_custom_call.1} parent=79 // pred_check
          %p646 = pneg %p69
        $region82: #{tpu_custom_call.1} parent=79 // pred_check_branch
          %648 = sbr.rel (%p646) target = $region84
        $region83: #{tpu_custom_call.1} parent=79 // pred_region
          %s649 = sand.u32 %s59, 1
          %s650 = scalar_lea.sflag [#allocation6], %s649
          %s651 = sand.u32 %s59, 1
          %s652 = smul.addr %s651, 8
          %s653 = scalar_lea.vmem [#allocation5], %s652
          %s655 = ssub.s32 128, 128
          %656 = vsyncadd %s650, %s655
          %s657 = smul.addr %s44, 128
          %s658 = scalar_lea.hbm %s0, %s657
          %s660 = sshll.u32 %s653, 4
          %s661 = int_to_ptr.vmem [resolvable:$true] %s660
          %663 = dma.hbm_to_vmem [thread:$0]  %s658, 128, %s661, %s650
        $region84: #{tpu_custom_call.1} parent=79 // pred_fallthru
          _
      $region80: #{tpu_custom_call.1} parent=5 // pred_fallthru
        _
      %p664 = scmp.le.s32.totalorder 1, %s37
      %p665 = scmp.lt.s32.totalorder %s37, 3
      %p666 = pnand %p664, %p665
      %p667 = pneg %p666
      // Predicated region
      $region85: #{tpu_custom_call.1} parent=5 // pred_check
        _
      $region86: #{tpu_custom_call.1} parent=5 // pred_check_branch
        %669 = sbr.rel (%p666) target = $region88
      $region87: #{tpu_custom_call.1} parent=5 // pred_region
        %s670 = ssub.s32 %s37, 1
        %s671 = sand.u32 %s62, 1
        %s672 = scalar_lea.sflag [#allocation6], %s671
        %s673 = sand.u32 %s62, 1
        %s674 = smul.addr %s673, 8
        %s675 = scalar_lea.vmem [#allocation5], %s674
        // Predicated region
        $region89: #{tpu_custom_call.1} parent=87 // pred_check
          %p676 = pneg %p75
        $region90: #{tpu_custom_call.1} parent=87 // pred_check_branch
          %678 = sbr.rel (%p676) target = $region92
        $region91: #{tpu_custom_call.1} parent=87 // pred_region
          %679 = dma.done %s672, 128
        $region92: #{tpu_custom_call.1} parent=87 // pred_fallthru
          _
        // Predicated region
        $region93: #{tpu_custom_call.1} parent=87 // pred_check
          %p680 = pneg %p96
        $region94: #{tpu_custom_call.1} parent=87 // pred_check_branch
          %682 = sbr.rel (%p680) target = $region96
        $region95: #{tpu_custom_call.1} parent=87 // pred_region
          %683 = dma.done [#allocation9], 16
        $region96: #{tpu_custom_call.1} parent=87 // pred_fallthru
          _
        // Predicated region
        $region97: #{tpu_custom_call.1} parent=87 // pred_check
          %p684 = pneg %p117
        $region98: #{tpu_custom_call.1} parent=87 // pred_check_branch
          %686 = sbr.rel (%p684) target = $region100
        $region99: #{tpu_custom_call.1} parent=87 // pred_region
          %687 = dma.done [#allocation9], 16
        $region100: #{tpu_custom_call.1} parent=87 // pred_fallthru
          _
        // Predicated region
        $region101: #{tpu_custom_call.1} parent=87 // pred_check
          %p688 = pneg %p138
        $region102: #{tpu_custom_call.1} parent=87 // pred_check_branch
          %690 = sbr.rel (%p688) target = $region104
        $region103: #{tpu_custom_call.1} parent=87 // pred_region
          %691 = dma.done [#allocation12], 256
        $region104: #{tpu_custom_call.1} parent=87 // pred_fallthru
          _
        // Predicated region
        $region105: #{tpu_custom_call.1} parent=87 // pred_check
          %p692 = pneg %p159
        $region106: #{tpu_custom_call.1} parent=87 // pred_check_branch
          %694 = sbr.rel (%p692) target = $region108
        $region107: #{tpu_custom_call.1} parent=87 // pred_region
          %695 = dma.done [#allocation12], 16
        $region108: #{tpu_custom_call.1} parent=87 // pred_fallthru
          _
        // Predicated region
        $region109: #{tpu_custom_call.1} parent=87 // pred_check
          %p696 = pneg %p180
        $region110: #{tpu_custom_call.1} parent=87 // pred_check_branch
          %698 = sbr.rel (%p696) target = $region112
        $region111: #{tpu_custom_call.1} parent=87 // pred_region
          %699 = dma.done [#allocation15], 256
        $region112: #{tpu_custom_call.1} parent=87 // pred_fallthru
          _
        // Predicated region
        $region113: #{tpu_custom_call.1} parent=87 // pred_check
          %p700 = pneg %p201
        $region114: #{tpu_custom_call.1} parent=87 // pred_check_branch
          %702 = sbr.rel (%p700) target = $region116
        $region115: #{tpu_custom_call.1} parent=87 // pred_region
          %703 = dma.done [#allocation15], 16
        $region116: #{tpu_custom_call.1} parent=87 // pred_fallthru
          _
        // Predicated region
        $region117: #{tpu_custom_call.1} parent=87 // pred_check
          %p704 = pneg %p222
        $region118: #{tpu_custom_call.1} parent=87 // pred_check_branch
          %706 = sbr.rel (%p704) target = $region120
        $region119: #{tpu_custom_call.1} parent=87 // pred_region
          %707 = dma.done [#allocation18], 256
        $region120: #{tpu_custom_call.1} parent=87 // pred_fallthru
          _
        // Predicated region
        $region121: #{tpu_custom_call.1} parent=87 // pred_check
          %p708 = pneg %p243
        $region122: #{tpu_custom_call.1} parent=87 // pred_check_branch
          %710 = sbr.rel (%p708) target = $region124
        $region123: #{tpu_custom_call.1} parent=87 // pred_region
          %711 = dma.done [#allocation18], 16
        $region124: #{tpu_custom_call.1} parent=87 // pred_fallthru
          _
        // Predicated region
        $region125: #{tpu_custom_call.1} parent=87 // pred_check
          %p712 = pneg %p264
        $region126: #{tpu_custom_call.1} parent=87 // pred_check_branch
          %714 = sbr.rel (%p712) target = $region128
        $region127: #{tpu_custom_call.1} parent=87 // pred_region
          %715 = dma.done [#allocation21], 256
        $region128: #{tpu_custom_call.1} parent=87 // pred_fallthru
          _
        // Predicated region
        $region129: #{tpu_custom_call.1} parent=87 // pred_check
          %p716 = pneg %p285
        $region130: #{tpu_custom_call.1} parent=87 // pred_check_branch
          %718 = sbr.rel (%p716) target = $region132
        $region131: #{tpu_custom_call.1} parent=87 // pred_region
          %719 = dma.done [#allocation21], 16
        $region132: #{tpu_custom_call.1} parent=87 // pred_fallthru
          _
        // Predicated region
        $region133: #{tpu_custom_call.1} parent=87 // pred_check
          %p720 = pneg %p306
        $region134: #{tpu_custom_call.1} parent=87 // pred_check_branch
          %722 = sbr.rel (%p720) target = $region136
        $region135: #{tpu_custom_call.1} parent=87 // pred_region
          %723 = dma.done [#allocation24], 16
        $region136: #{tpu_custom_call.1} parent=87 // pred_fallthru
          _
        // Predicated region
        $region137: #{tpu_custom_call.1} parent=87 // pred_check
          %p724 = pneg %p327
        $region138: #{tpu_custom_call.1} parent=87 // pred_check_branch
          %726 = sbr.rel (%p724) target = $region140
        $region139: #{tpu_custom_call.1} parent=87 // pred_region
          %727 = dma.done [#allocation24], 16
        $region140: #{tpu_custom_call.1} parent=87 // pred_fallthru
          _
        // Predicated region
        $region141: #{tpu_custom_call.1} parent=87 // pred_check
          %p728 = pneg %p348
        $region142: #{tpu_custom_call.1} parent=87 // pred_check_branch
          %730 = sbr.rel (%p728) target = $region144
        $region143: #{tpu_custom_call.1} parent=87 // pred_region
          %731 = dma.done [#allocation27], 256
        $region144: #{tpu_custom_call.1} parent=87 // pred_fallthru
          _
        // Predicated region
        $region145: #{tpu_custom_call.1} parent=87 // pred_check
          %p732 = pneg %p369
        $region146: #{tpu_custom_call.1} parent=87 // pred_check_branch
          %734 = sbr.rel (%p732) target = $region148
        $region147: #{tpu_custom_call.1} parent=87 // pred_region
          %735 = dma.done [#allocation27], 16
        $region148: #{tpu_custom_call.1} parent=87 // pred_fallthru
          _
        // Predicated region
        $region149: #{tpu_custom_call.1} parent=87 // pred_check
          %p736 = pneg %p390
        $region150: #{tpu_custom_call.1} parent=87 // pred_check_branch
          %738 = sbr.rel (%p736) target = $region152
        $region151: #{tpu_custom_call.1} parent=87 // pred_region
          %739 = dma.done [#allocation30], 1024
        $region152: #{tpu_custom_call.1} parent=87 // pred_fallthru
          _
        // Predicated region
        $region153: #{tpu_custom_call.1} parent=87 // pred_check
          %p740 = pneg %p411
        $region154: #{tpu_custom_call.1} parent=87 // pred_check_branch
          %742 = sbr.rel (%p740) target = $region156
        $region155: #{tpu_custom_call.1} parent=87 // pred_region
          %743 = dma.done [#allocation30], 16
        $region156: #{tpu_custom_call.1} parent=87 // pred_fallthru
          _
        %s744 = sand.u32 %s62, 1
        %s745 = scalar_lea.sflag [#allocation6], %s744
        %s746 = sand.u32 %s62, 1
        %s747 = smul.addr %s746, 8
        %s748 = scalar_lea.vmem [#allocation5], %s747
        %p749 = pneg %p75
        %p750 = pneg %p72
        %p751 = pneg %p96
        %p752 = pneg %p93
        %p753 = pneg %p117
        %p754 = pneg %p114
        %p755 = pneg %p138
        %p756 = pneg %p135
        %p757 = pneg %p159
        %p758 = pneg %p156
        %p759 = pneg %p180
        %p760 = pneg %p177
        %p761 = pneg %p201
        %p762 = pneg %p198
        %p763 = pneg %p222
        %p764 = pneg %p219
        %p765 = pneg %p243
        %p766 = pneg %p240
        %p767 = pneg %p264
        %p768 = pneg %p261
        %p769 = pneg %p285
        %p770 = pneg %p282
        %p771 = pneg %p306
        %p772 = pneg %p303
        %p773 = pneg %p327
        %p774 = pneg %p324
        %p775 = pneg %p348
        %p776 = pneg %p345
        %p777 = pneg %p369
        %p778 = pneg %p366
        %p779 = pneg %p390
        %p780 = pneg %p387
        %p781 = pneg %p411
        %p782 = pneg %p408
        %p783 = pneg %p439
        %p784 = pneg %p436
        %s785 = sand.u32 %s426, 1
        %s786 = scalar_lea.sflag [#allocation7], %s785
        %s787 = sand.u32 %s426, 1
        %s788 = smul.addr %s787, 8
        %s789 = scalar_lea.vmem [#allocation32], %s788
        %s791 = smul.u32 %s47, 8
        %p792 = scmp.eq.s32.totalorder %s47, 0
        // Predicated region
        $region157: #{tpu_custom_call.1} parent=87 // pred_check
          %p793 = pneg %p792
        $region158: #{tpu_custom_call.1} parent=87 // pred_check_branch
          %795 = sbr.rel (%p793) target = $region160
        $region159: #{tpu_custom_call.1} parent=87 // pred_region
          %v796 = vld [vmem:[%s675] sm:$0xff]
          %v797 = vld [vmem:[#allocation8] sm:$0x1]
          %v798 = vld [vmem:[#allocation10] sm:$0x1]
          %vm799 = vcmask 261120
          %v800 = vsel %vm799, %v796, 0.0
          %801 = vadd.xlane.f32.xlu0 %v800
          %v802 = vpop.xlane.xlu0 %801
          %v803 = vrcp.pop 32.0
          %v804 = vmul.f32 %v802, %v803
          %v805 = vsub.f32 %v796, %v804
          %v806 = vmul.f32 %v805, %v805
          %v807 = vsel %vm799, %v806, 0.0
          %808 = vadd.xlane.f32.xlu0 %v807
          %v809 = vpop.xlane.xlu0 %808
          %v810 = vmul.f32 %v809, %v803
          %v811 = vadd.f32 %v810, 1e-05
          %v812 = vrsqrt.pop %v811
          %v813 = vmul.f32 %v805, %v812
          %v815 = vlaneseq
          %v816 = vshrl.u32 %v815, 7
          %v817 = vsub.s32 0, %v816
          %v818 = vrot.slane %v797, %v817
          %v820 = vmul.f32 %v813, %v818
          %v822 = vlaneseq
          %v823 = vshrl.u32 %v822, 7
          %v824 = vsub.s32 0, %v823
          %v825 = vrot.slane %v798, %v824
          %v827 = vadd.f32 %v820, %v825
          %v828 = vpack.c.bf16 %v827, %v827
          %vm829 = vcmask 257024
          %830 = vst.msk [vmem:[#allocation2] sm:$0xf] %vm829, %v828
          %v831 = vld [vmem:[#allocation14] sm:$0xf]
          %v832 = vld [vmem:[#allocation14 + $0x4] sm:$0xf]
          %v833 = vld [vmem:[#allocation14 + $0x8] sm:$0xf]
          %v834 = vld [vmem:[#allocation14 + $0xc] sm:$0xf]
          %v835 = vld [vmem:[#allocation16] sm:$0x1]
          %v837 = vlaneseq
          %v838 = vshrl.u32 %v837, 7
          %v839 = vsub.s32 0, %v838
          %v840 = vrot.slane %v835, %v839
          %v846 = vunpack.c.l.b16 %v831
          %v847 = vunpack.c.l.b16 %v832
          %v848 = vunpack.c.l.b16 %v833
          %v849 = vunpack.c.l.b16 %v834
          %v850 = vpack.c.b16 %v847, %v846
          %v851 = vpack.c.b16 %v849, %v848
          %v855 = vsel %vm799, %v828, 0
          %857 = vmatprep.subr.bf16.mxu0 0
          %858 = vmatpush1.bf16.msra.mxu0 %v850
          %859 = vmatprep.subr.bf16.mxu0 0
          %860 = vmatpush1.bf16.msra.mxu0 %v851
          %861 = vmatprep.subr.bf16.mxu0 0
          %862 = vmatpush1.bf16.msra.mxu0 0
          %863 = vmatprep.subr.bf16.mxu0 0
          %864 = vmatpush1.bf16.msra.mxu0 0
          %865 = vmatprep.subr.bf16.mxu0 0
          %866 = vmatpush1.bf16.msra.mxu0 0
          %867 = vmatprep.subr.bf16.mxu0 0
          %868 = vmatpush1.bf16.msra.mxu0 0
          %869 = vmatprep.subr.bf16.mxu0 0
          %870 = vmatpush1.bf16.msra.mxu0 0
          %871 = vmatprep.subr.bf16.mxu0 0
          %872 = vmatpush1.bf16.msra.mxu0 0
          %873 = vmatprep.subr.bf16.mxu0 0
          %874 = vmatpush1.bf16.msra.mxu0 0
          %875 = vmatprep.subr.bf16.mxu0 0
          %876 = vmatpush1.bf16.msra.mxu0 0
          %877 = vmatprep.subr.bf16.mxu0 0
          %878 = vmatpush1.bf16.msra.mxu0 0
          %879 = vmatprep.subr.bf16.mxu0 0
          %880 = vmatpush1.bf16.msra.mxu0 0
          %881 = vmatprep.subr.bf16.mxu0 0
          %882 = vmatpush1.bf16.msra.mxu0 0
          %883 = vmatprep.subr.bf16.mxu0 0
          %884 = vmatpush1.bf16.msra.mxu0 0
          %885 = vmatprep.subr.bf16.mxu0 0
          %886 = vmatpush1.bf16.msra.mxu0 0
          %887 = vmatprep.subr.bf16.mxu0 0
          %888 = vmatpush1.bf16.msra.mxu0 0
          %889 = vmatprep.mubr.bf16.mxu0 0
          %890 = vmatmul.mubr.bf16.gmra.mrb[0].mxu0 %v855
          %v891 = vpop.f32.mrb[0].mxu0
          %v892 = vadd.f32 %v840, %v891
          %v893 = vpop.f32.mrb[0].mxu0
          %v894 = vpop.f32.mrb[0].mxu0
          %v895 = vpop.f32.mrb[0].mxu0
          %896 = vdwg.mxu0
          %v897 = vld [vmem:[#allocation17] sm:$0xf]
          %v898 = vld [vmem:[#allocation17 + $0x4] sm:$0xf]
          %v899 = vld [vmem:[#allocation17 + $0x8] sm:$0xf]
          %v900 = vld [vmem:[#allocation17 + $0xc] sm:$0xf]
          %v901 = vld [vmem:[#allocation19] sm:$0x1]
          %v903 = vlaneseq
          %v904 = vshrl.u32 %v903, 7
          %v905 = vsub.s32 0, %v904
          %v906 = vrot.slane %v901, %v905
          %v912 = vunpack.c.l.b16 %v897
          %v913 = vunpack.c.l.b16 %v898
          %v914 = vunpack.c.l.b16 %v899
          %v915 = vunpack.c.l.b16 %v900
          %v916 = vpack.c.b16 %v913, %v912
          %v917 = vpack.c.b16 %v915, %v914
          %920 = vmatprep.subr.bf16.mxu0 0
          %921 = vmatpush1.bf16.msra.mxu0 %v916
          %922 = vmatprep.subr.bf16.mxu0 0
          %923 = vmatpush1.bf16.msra.mxu0 %v917
          %924 = vmatprep.subr.bf16.mxu0 0
          %925 = vmatpush1.bf16.msra.mxu0 0
          %926 = vmatprep.subr.bf16.mxu0 0
          %927 = vmatpush1.bf16.msra.mxu0 0
          %928 = vmatprep.subr.bf16.mxu0 0
          %929 = vmatpush1.bf16.msra.mxu0 0
          %930 = vmatprep.subr.bf16.mxu0 0
          %931 = vmatpush1.bf16.msra.mxu0 0
          %932 = vmatprep.subr.bf16.mxu0 0
          %933 = vmatpush1.bf16.msra.mxu0 0
          %934 = vmatprep.subr.bf16.mxu0 0
          %935 = vmatpush1.bf16.msra.mxu0 0
          %936 = vmatprep.subr.bf16.mxu0 0
          %937 = vmatpush1.bf16.msra.mxu0 0
          %938 = vmatprep.subr.bf16.mxu0 0
          %939 = vmatpush1.bf16.msra.mxu0 0
          %940 = vmatprep.subr.bf16.mxu0 0
          %941 = vmatpush1.bf16.msra.mxu0 0
          %942 = vmatprep.subr.bf16.mxu0 0
          %943 = vmatpush1.bf16.msra.mxu0 0
          %944 = vmatprep.subr.bf16.mxu0 0
          %945 = vmatpush1.bf16.msra.mxu0 0
          %946 = vmatprep.subr.bf16.mxu0 0
          %947 = vmatpush1.bf16.msra.mxu0 0
          %948 = vmatprep.subr.bf16.mxu0 0
          %949 = vmatpush1.bf16.msra.mxu0 0
          %950 = vmatprep.subr.bf16.mxu0 0
          %951 = vmatpush1.bf16.msra.mxu0 0
          %952 = vmatprep.mubr.bf16.mxu0 0
          %953 = vmatmul.mubr.bf16.gmra.mrb[0].mxu0 %v855
          %v954 = vpop.f32.mrb[0].mxu0
          %v955 = vadd.f32 %v906, %v954
          %v956 = vpop.f32.mrb[0].mxu0
          %v957 = vpop.f32.mrb[0].mxu0
          %v958 = vpop.f32.mrb[0].mxu0
          %959 = vdwg.mxu0
          %961 = vrot.lane.b32.xlu0 %v892, 120
          %v962 = vpop.permute.xlu0 %961
          %964 = vrot.lane.b32.xlu0 %v892, 112
          %v965 = vpop.permute.xlu0 %964
          %967 = vrot.lane.b32.xlu0 %v892, 104
          %v968 = vpop.permute.xlu0 %967
          %v970 = vcombine.low %v892, %v965
          %v971 = vcombine.high %v892, %v965
          %v973 = vunpack.c.l.s4 1983009808
          %v974 = vunpack.c.0.s8 %v973
          %v975 = vlaneseq
          %v976 = vshrl.u32 %v975, 7
          %v977 = vsub.s32 %v974, %v976
          %v978 = vrot.slane %v970, %v977
          %v980 = vunpack.c.l.s4 1983009808
          %v981 = vunpack.c.0.s8 %v980
          %v982 = vlaneseq
          %v983 = vshrl.u32 %v982, 7
          %v984 = vsub.s32 %v981, %v983
          %v985 = vrot.slane %v971, %v984
          %v986 = vcombine.low %v962, %v968
          %v987 = vcombine.high %v962, %v968
          %v989 = vunpack.c.l.s4 1983009808
          %v990 = vunpack.c.0.s8 %v989
          %v991 = vlaneseq
          %v992 = vshrl.u32 %v991, 7
          %v993 = vsub.s32 %v990, %v992
          %v994 = vrot.slane %v986, %v993
          %v996 = vunpack.c.l.s4 1983009808
          %v997 = vunpack.c.0.s8 %v996
          %v998 = vlaneseq
          %v999 = vshrl.u32 %v998, 7
          %v1000 = vsub.s32 %v997, %v999
          %v1001 = vrot.slane %v987, %v1000
          %v1002 = vcombine.low %v978, %v994
          %v1003 = vcombine.high %v978, %v994
          %v1005 = vunpack.c.l.s4 1934713408
          %v1006 = vunpack.c.0.s8 %v1005
          %v1007 = vlaneseq
          %v1008 = vshrl.u32 %v1007, 7
          %v1009 = vsub.s32 %v1006, %v1008
          %v1010 = vrot.slane %v1002, %v1009
          %v1012 = vunpack.c.l.s4 1934713408
          %v1013 = vunpack.c.0.s8 %v1012
          %v1014 = vlaneseq
          %v1015 = vshrl.u32 %v1014, 7
          %v1016 = vsub.s32 %v1013, %v1015
          %v1017 = vrot.slane %v1003, %v1016
          %v1018 = vcombine.low %v985, %v1001
          %v1019 = vcombine.high %v985, %v1001
          %v1021 = vunpack.c.l.s4 1934713408
          %v1022 = vunpack.c.0.s8 %v1021
          %v1023 = vlaneseq
          %v1024 = vshrl.u32 %v1023, 7
          %v1025 = vsub.s32 %v1022, %v1024
          %v1026 = vrot.slane %v1018, %v1025
          %v1028 = vunpack.c.l.s4 1934713408
          %v1029 = vunpack.c.0.s8 %v1028
          %v1030 = vlaneseq
          %v1031 = vshrl.u32 %v1030, 7
          %v1032 = vsub.s32 %v1029, %v1031
          %v1033 = vrot.slane %v1019, %v1032
          %v1034 = vcombine.high %v1010, 0.0
          %v1035 = vcombine.high %v1017, 0.0
          %v1036 = vcombine.high %v1026, 0.0
          %v1037 = vcombine.high %v1033, 0.0
          %v1038 = vcombine.low %v1010, %v1017
          %v1040 = vunpack.c.l.s4 1983009808
          %v1041 = vunpack.c.0.s8 %v1040
          %v1042 = vlaneseq
          %v1043 = vshrl.u32 %v1042, 7
          %v1044 = vsub.s32 %v1041, %v1043
          %v1045 = vrot.slane %v1038, %v1044
          %v1046 = vcombine.low %v1034, %v1035
          %v1048 = vunpack.c.l.s4 1983009808
          %v1049 = vunpack.c.0.s8 %v1048
          %v1050 = vlaneseq
          %v1051 = vshrl.u32 %v1050, 7
          %v1052 = vsub.s32 %v1049, %v1051
          %v1053 = vrot.slane %v1046, %v1052
          %v1054 = vcombine.low %v1026, %v1033
          %v1056 = vunpack.c.l.s4 1983009808
          %v1057 = vunpack.c.0.s8 %v1056
          %v1058 = vlaneseq
          %v1059 = vshrl.u32 %v1058, 7
          %v1060 = vsub.s32 %v1057, %v1059
          %v1061 = vrot.slane %v1054, %v1060
          %v1062 = vcombine.low %v1036, %v1037
          %v1064 = vunpack.c.l.s4 1983009808
          %v1065 = vunpack.c.0.s8 %v1064
          %v1066 = vlaneseq
          %v1067 = vshrl.u32 %v1066, 7
          %v1068 = vsub.s32 %v1065, %v1067
          %v1069 = vrot.slane %v1062, %v1068
          %v1070 = vcombine.low %v1045, %v1053
          %v1071 = vcombine.high %v1045, %v1053
          %v1073 = vunpack.c.l.s4 1934713408
          %v1074 = vunpack.c.0.s8 %v1073
          %v1075 = vlaneseq
          %v1076 = vshrl.u32 %v1075, 7
          %v1077 = vsub.s32 %v1074, %v1076
          %v1078 = vrot.slane %v1070, %v1077
          %v1080 = vunpack.c.l.s4 1934713408
          %v1081 = vunpack.c.0.s8 %v1080
          %v1082 = vlaneseq
          %v1083 = vshrl.u32 %v1082, 7
          %v1084 = vsub.s32 %v1081, %v1083
          %v1085 = vrot.slane %v1071, %v1084
          %v1086 = vcombine.low %v1061, %v1069
          %v1087 = vcombine.high %v1061, %v1069
          %v1089 = vunpack.c.l.s4 1934713408
          %v1090 = vunpack.c.0.s8 %v1089
          %v1091 = vlaneseq
          %v1092 = vshrl.u32 %v1091, 7
          %v1093 = vsub.s32 %v1090, %v1092
          %v1094 = vrot.slane %v1086, %v1093
          %v1096 = vunpack.c.l.s4 1934713408
          %v1097 = vunpack.c.0.s8 %v1096
          %v1098 = vlaneseq
          %v1099 = vshrl.u32 %v1098, 7
          %v1100 = vsub.s32 %v1097, %v1099
          %v1101 = vrot.slane %v1087, %v1100
          %v1102 = vcombine.low %v1078, %v1094
          %v1103 = vcombine.high %v1078, %v1094
          %v1104 = vcombine.low %v1085, %v1101
          %v1105 = vcombine.high %v1085, %v1101
          %v1106 = vpack.c.bf16 %v1102, %v1102
          %v1107 = vpack.c.bf16 %v1103, %v1103
          %v1108 = vpack.c.bf16 %v1104, %v1104
          %v1109 = vpack.c.bf16 %v1105, %v1105
          %vm1110 = vcmask 60416
          %1111 = vst.msk [vmem:[#allocation3] sm:$0xf] %vm1110, %v1106
          %1112 = vst.msk [vmem:[#allocation3 + $0x4] sm:$0xf] %vm1110, %v1107
          %1113 = vst.msk [vmem:[#allocation3 + $0x8] sm:$0xf] %vm1110, %v1108
          %1114 = vst.msk [vmem:[#allocation3 + $0xc] sm:$0xf] %vm1110, %v1109
          %1116 = vrot.lane.b32.xlu0 %v955, 120
          %v1117 = vpop.permute.xlu0 %1116
          %1119 = vrot.lane.b32.xlu0 %v955, 112
          %v1120 = vpop.permute.xlu0 %1119
          %1122 = vrot.lane.b32.xlu0 %v955, 104
          %v1123 = vpop.permute.xlu0 %1122
          %v1125 = vcombine.low %v955, %v1120
          %v1126 = vcombine.high %v955, %v1120
          %v1128 = vunpack.c.l.s4 1983009808
          %v1129 = vunpack.c.0.s8 %v1128
          %v1130 = vlaneseq
          %v1131 = vshrl.u32 %v1130, 7
          %v1132 = vsub.s32 %v1129, %v1131
          %v1133 = vrot.slane %v1125, %v1132
          %v1135 = vunpack.c.l.s4 1983009808
          %v1136 = vunpack.c.0.s8 %v1135
          %v1137 = vlaneseq
          %v1138 = vshrl.u32 %v1137, 7
          %v1139 = vsub.s32 %v1136, %v1138
          %v1140 = vrot.slane %v1126, %v1139
          %v1141 = vcombine.low %v1117, %v1123
          %v1142 = vcombine.high %v1117, %v1123
          %v1144 = vunpack.c.l.s4 1983009808
          %v1145 = vunpack.c.0.s8 %v1144
          %v1146 = vlaneseq
          %v1147 = vshrl.u32 %v1146, 7
          %v1148 = vsub.s32 %v1145, %v1147
          %v1149 = vrot.slane %v1141, %v1148
          %v1151 = vunpack.c.l.s4 1983009808
          %v1152 = vunpack.c.0.s8 %v1151
          %v1153 = vlaneseq
          %v1154 = vshrl.u32 %v1153, 7
          %v1155 = vsub.s32 %v1152, %v1154
          %v1156 = vrot.slane %v1142, %v1155
          %v1157 = vcombine.low %v1133, %v1149
          %v1158 = vcombine.high %v1133, %v1149
          %v1160 = vunpack.c.l.s4 1934713408
          %v1161 = vunpack.c.0.s8 %v1160
          %v1162 = vlaneseq
          %v1163 = vshrl.u32 %v1162, 7
          %v1164 = vsub.s32 %v1161, %v1163
          %v1165 = vrot.slane %v1157, %v1164
          %v1167 = vunpack.c.l.s4 1934713408
          %v1168 = vunpack.c.0.s8 %v1167
          %v1169 = vlaneseq
          %v1170 = vshrl.u32 %v1169, 7
          %v1171 = vsub.s32 %v1168, %v1170
          %v1172 = vrot.slane %v1158, %v1171
          %v1173 = vcombine.low %v1140, %v1156
          %v1174 = vcombine.high %v1140, %v1156
          %v1176 = vunpack.c.l.s4 1934713408
          %v1177 = vunpack.c.0.s8 %v1176
          %v1178 = vlaneseq
          %v1179 = vshrl.u32 %v1178, 7
          %v1180 = vsub.s32 %v1177, %v1179
          %v1181 = vrot.slane %v1173, %v1180
          %v1183 = vunpack.c.l.s4 1934713408
          %v1184 = vunpack.c.0.s8 %v1183
          %v1185 = vlaneseq
          %v1186 = vshrl.u32 %v1185, 7
          %v1187 = vsub.s32 %v1184, %v1186
          %v1188 = vrot.slane %v1174, %v1187
          %v1189 = vcombine.high %v1165, 0.0
          %v1190 = vcombine.high %v1172, 0.0
          %v1191 = vcombine.high %v1181, 0.0
          %v1192 = vcombine.high %v1188, 0.0
          %v1193 = vcombine.low %v1165, %v1172
          %v1195 = vunpack.c.l.s4 1983009808
          %v1196 = vunpack.c.0.s8 %v1195
          %v1197 = vlaneseq
          %v1198 = vshrl.u32 %v1197, 7
          %v1199 = vsub.s32 %v1196, %v1198
          %v1200 = vrot.slane %v1193, %v1199
          %v1201 = vcombine.low %v1189, %v1190
          %v1203 = vunpack.c.l.s4 1983009808
          %v1204 = vunpack.c.0.s8 %v1203
          %v1205 = vlaneseq
          %v1206 = vshrl.u32 %v1205, 7
          %v1207 = vsub.s32 %v1204, %v1206
          %v1208 = vrot.slane %v1201, %v1207
          %v1209 = vcombine.low %v1181, %v1188
          %v1211 = vunpack.c.l.s4 1983009808
          %v1212 = vunpack.c.0.s8 %v1211
          %v1213 = vlaneseq
          %v1214 = vshrl.u32 %v1213, 7
          %v1215 = vsub.s32 %v1212, %v1214
          %v1216 = vrot.slane %v1209, %v1215
          %v1217 = vcombine.low %v1191, %v1192
          %v1219 = vunpack.c.l.s4 1983009808
          %v1220 = vunpack.c.0.s8 %v1219
          %v1221 = vlaneseq
          %v1222 = vshrl.u32 %v1221, 7
          %v1223 = vsub.s32 %v1220, %v1222
          %v1224 = vrot.slane %v1217, %v1223
          %v1225 = vcombine.low %v1200, %v1208
          %v1226 = vcombine.high %v1200, %v1208
          %v1228 = vunpack.c.l.s4 1934713408
          %v1229 = vunpack.c.0.s8 %v1228
          %v1230 = vlaneseq
          %v1231 = vshrl.u32 %v1230, 7
          %v1232 = vsub.s32 %v1229, %v1231
          %v1233 = vrot.slane %v1225, %v1232
          %v1235 = vunpack.c.l.s4 1934713408
          %v1236 = vunpack.c.0.s8 %v1235
          %v1237 = vlaneseq
          %v1238 = vshrl.u32 %v1237, 7
          %v1239 = vsub.s32 %v1236, %v1238
          %v1240 = vrot.slane %v1226, %v1239
          %v1241 = vcombine.low %v1216, %v1224
          %v1242 = vcombine.high %v1216, %v1224
          %v1244 = vunpack.c.l.s4 1934713408
          %v1245 = vunpack.c.0.s8 %v1244
          %v1246 = vlaneseq
          %v1247 = vshrl.u32 %v1246, 7
          %v1248 = vsub.s32 %v1245, %v1247
          %v1249 = vrot.slane %v1241, %v1248
          %v1251 = vunpack.c.l.s4 1934713408
          %v1252 = vunpack.c.0.s8 %v1251
          %v1253 = vlaneseq
          %v1254 = vshrl.u32 %v1253, 7
          %v1255 = vsub.s32 %v1252, %v1254
          %v1256 = vrot.slane %v1242, %v1255
          %v1257 = vcombine.low %v1233, %v1249
          %v1258 = vcombine.high %v1233, %v1249
          %v1259 = vcombine.low %v1240, %v1256
          %v1260 = vcombine.high %v1240, %v1256
          %v1261 = vpack.c.bf16 %v1257, %v1257
          %v1262 = vpack.c.bf16 %v1258, %v1258
          %v1263 = vpack.c.bf16 %v1259, %v1259
          %v1264 = vpack.c.bf16 %v1260, %v1260
          %1265 = vst.msk [vmem:[#allocation4] sm:$0xf] %vm1110, %v1261
          %1266 = vst.msk [vmem:[#allocation4 + $0x4] sm:$0xf] %vm1110, %v1262
          %1267 = vst.msk [vmem:[#allocation4 + $0x8] sm:$0xf] %vm1110, %v1263
          %1268 = vst.msk [vmem:[#allocation4 + $0xc] sm:$0xf] %vm1110, %v1264
        $region160: #{tpu_custom_call.1} parent=87 // pred_fallthru
          _
        %s1269 = sshra.s32 %s791, 3
        %s1270 = sand.u32 %s791, 7
        %s1271 = smul.addr %s1269, 4
        %s1272 = scalar_lea.vmem [#allocation2], %s1271
        %v1273 = vld [vmem:[%s1272] sm:$0xf]
        %v1274 = vld [vmem:[#allocation11] sm:$0xf]
        %v1275 = vld [vmem:[#allocation11 + $0x4] sm:$0xf]
        %v1276 = vld [vmem:[#allocation11 + $0x8] sm:$0xf]
        %v1277 = vld [vmem:[#allocation11 + $0xc] sm:$0xf]
        %v1278 = vld [vmem:[#allocation13] sm:$0x1]
        %v1280 = vlaneseq
        %v1281 = vshrl.u32 %v1280, 7
        %v1282 = vsub.s32 0, %v1281
        %v1283 = vrot.slane %v1278, %v1282
        %v1289 = vunpack.c.l.b16 %v1274
        %v1290 = vunpack.c.l.b16 %v1275
        %v1291 = vunpack.c.l.b16 %v1276
        %v1292 = vunpack.c.l.b16 %v1277
        %v1293 = vpack.c.b16 %v1290, %v1289
        %v1294 = vpack.c.b16 %v1292, %v1291
        %vm1297 = vcmask 261120
        %v1299 = vsel %vm1297, %v1273, 0
        %1301 = vmatprep.subr.bf16.mxu0 0
        %1302 = vmatpush1.bf16.msra.mxu0 %v1293
        %1303 = vmatprep.subr.bf16.mxu0 0
        %1304 = vmatpush1.bf16.msra.mxu0 %v1294
        %1305 = vmatprep.subr.bf16.mxu0 0
        %1306 = vmatpush1.bf16.msra.mxu0 0
        %1307 = vmatprep.subr.bf16.mxu0 0
        %1308 = vmatpush1.bf16.msra.mxu0 0
        %1309 = vmatprep.subr.bf16.mxu0 0
        %1310 = vmatpush1.bf16.msra.mxu0 0
        %1311 = vmatprep.subr.bf16.mxu0 0
        %1312 = vmatpush1.bf16.msra.mxu0 0
        %1313 = vmatprep.subr.bf16.mxu0 0
        %1314 = vmatpush1.bf16.msra.mxu0 0
        %1315 = vmatprep.subr.bf16.mxu0 0
        %1316 = vmatpush1.bf16.msra.mxu0 0
        %1317 = vmatprep.subr.bf16.mxu0 0
        %1318 = vmatpush1.bf16.msra.mxu0 0
        %1319 = vmatprep.subr.bf16.mxu0 0
        %1320 = vmatpush1.bf16.msra.mxu0 0
        %1321 = vmatprep.subr.bf16.mxu0 0
        %1322 = vmatpush1.bf16.msra.mxu0 0
        %1323 = vmatprep.subr.bf16.mxu0 0
        %1324 = vmatpush1.bf16.msra.mxu0 0
        %1325 = vmatprep.subr.bf16.mxu0 0
        %1326 = vmatpush1.bf16.msra.mxu0 0
        %1327 = vmatprep.subr.bf16.mxu0 0
        %1328 = vmatpush1.bf16.msra.mxu0 0
        %1329 = vmatprep.subr.bf16.mxu0 0
        %1330 = vmatpush1.bf16.msra.mxu0 0
        %1331 = vmatprep.subr.bf16.mxu0 0
        %1332 = vmatpush1.bf16.msra.mxu0 0
        %1333 = vmatprep.mubr.bf16.mxu0 0
        %1334 = vmatmul.mubr.bf16.gmra.mrb[0].mxu0 %v1299
        %v1335 = vpop.f32.mrb[0].mxu0
        %v1336 = vadd.f32 %v1283, %v1335
        %v1337 = vpop.f32.mrb[0].mxu0
        %v1338 = vpop.f32.mrb[0].mxu0
        %v1339 = vpop.f32.mrb[0].mxu0
        %1340 = vdwg.mxu0
        %1342 = vrot.lane.b32.xlu0 %v1336, 120
        %v1343 = vpop.permute.xlu0 %1342
        %1345 = vrot.lane.b32.xlu0 %v1336, 112
        %v1346 = vpop.permute.xlu0 %1345
        %1348 = vrot.lane.b32.xlu0 %v1336, 104
        %v1349 = vpop.permute.xlu0 %1348
        %v1351 = vcombine.low %v1336, %v1346
        %v1352 = vcombine.high %v1336, %v1346
        %v1354 = vunpack.c.l.s4 1983009808
        %v1355 = vunpack.c.0.s8 %v1354
        %v1356 = vlaneseq
        %v1357 = vshrl.u32 %v1356, 7
        %v1358 = vsub.s32 %v1355, %v1357
        %v1359 = vrot.slane %v1351, %v1358
        %v1361 = vunpack.c.l.s4 1983009808
        %v1362 = vunpack.c.0.s8 %v1361
        %v1363 = vlaneseq
        %v1364 = vshrl.u32 %v1363, 7
        %v1365 = vsub.s32 %v1362, %v1364
        %v1366 = vrot.slane %v1352, %v1365
        %v1367 = vcombine.low %v1343, %v1349
        %v1368 = vcombine.high %v1343, %v1349
        %v1370 = vunpack.c.l.s4 1983009808
        %v1371 = vunpack.c.0.s8 %v1370
        %v1372 = vlaneseq
        %v1373 = vshrl.u32 %v1372, 7
        %v1374 = vsub.s32 %v1371, %v1373
        %v1375 = vrot.slane %v1367, %v1374
        %v1377 = vunpack.c.l.s4 1983009808
        %v1378 = vunpack.c.0.s8 %v1377
        %v1379 = vlaneseq
        %v1380 = vshrl.u32 %v1379, 7
        %v1381 = vsub.s32 %v1378, %v1380
        %v1382 = vrot.slane %v1368, %v1381
        %v1383 = vcombine.low %v1359, %v1375
        %v1384 = vcombine.high %v1359, %v1375
        %v1386 = vunpack.c.l.s4 1934713408
        %v1387 = vunpack.c.0.s8 %v1386
        %v1388 = vlaneseq
        %v1389 = vshrl.u32 %v1388, 7
        %v1390 = vsub.s32 %v1387, %v1389
        %v1391 = vrot.slane %v1383, %v1390
        %v1393 = vunpack.c.l.s4 1934713408
        %v1394 = vunpack.c.0.s8 %v1393
        %v1395 = vlaneseq
        %v1396 = vshrl.u32 %v1395, 7
        %v1397 = vsub.s32 %v1394, %v1396
        %v1398 = vrot.slane %v1384, %v1397
        %v1399 = vcombine.low %v1366, %v1382
        %v1400 = vcombine.high %v1366, %v1382
        %v1402 = vunpack.c.l.s4 1934713408
        %v1403 = vunpack.c.0.s8 %v1402
        %v1404 = vlaneseq
        %v1405 = vshrl.u32 %v1404, 7
        %v1406 = vsub.s32 %v1403, %v1405
        %v1407 = vrot.slane %v1399, %v1406
        %v1409 = vunpack.c.l.s4 1934713408
        %v1410 = vunpack.c.0.s8 %v1409
        %v1411 = vlaneseq
        %v1412 = vshrl.u32 %v1411, 7
        %v1413 = vsub.s32 %v1410, %v1412
        %v1414 = vrot.slane %v1400, %v1413
        %v1415 = vcombine.high %v1391, 0.0
        %v1416 = vcombine.high %v1398, 0.0
        %v1417 = vcombine.high %v1407, 0.0
        %v1418 = vcombine.high %v1414, 0.0
        %v1419 = vcombine.low %v1391, %v1398
        %v1421 = vunpack.c.l.s4 1983009808
        %v1422 = vunpack.c.0.s8 %v1421
        %v1423 = vlaneseq
        %v1424 = vshrl.u32 %v1423, 7
        %v1425 = vsub.s32 %v1422, %v1424
        %v1426 = vrot.slane %v1419, %v1425
        %v1427 = vcombine.low %v1415, %v1416
        %v1429 = vunpack.c.l.s4 1983009808
        %v1430 = vunpack.c.0.s8 %v1429
        %v1431 = vlaneseq
        %v1432 = vshrl.u32 %v1431, 7
        %v1433 = vsub.s32 %v1430, %v1432
        %v1434 = vrot.slane %v1427, %v1433
        %v1435 = vcombine.low %v1407, %v1414
        %v1437 = vunpack.c.l.s4 1983009808
        %v1438 = vunpack.c.0.s8 %v1437
        %v1439 = vlaneseq
        %v1440 = vshrl.u32 %v1439, 7
        %v1441 = vsub.s32 %v1438, %v1440
        %v1442 = vrot.slane %v1435, %v1441
        %v1443 = vcombine.low %v1417, %v1418
        %v1445 = vunpack.c.l.s4 1983009808
        %v1446 = vunpack.c.0.s8 %v1445
        %v1447 = vlaneseq
        %v1448 = vshrl.u32 %v1447, 7
        %v1449 = vsub.s32 %v1446, %v1448
        %v1450 = vrot.slane %v1443, %v1449
        %v1451 = vcombine.low %v1426, %v1434
        %v1452 = vcombine.high %v1426, %v1434
        %v1454 = vunpack.c.l.s4 1934713408
        %v1455 = vunpack.c.0.s8 %v1454
        %v1456 = vlaneseq
        %v1457 = vshrl.u32 %v1456, 7
        %v1458 = vsub.s32 %v1455, %v1457
        %v1459 = vrot.slane %v1451, %v1458
        %v1461 = vunpack.c.l.s4 1934713408
        %v1462 = vunpack.c.0.s8 %v1461
        %v1463 = vlaneseq
        %v1464 = vshrl.u32 %v1463, 7
        %v1465 = vsub.s32 %v1462, %v1464
        %v1466 = vrot.slane %v1452, %v1465
        %v1467 = vcombine.low %v1442, %v1450
        %v1468 = vcombine.high %v1442, %v1450
        %v1470 = vunpack.c.l.s4 1934713408
        %v1471 = vunpack.c.0.s8 %v1470
        %v1472 = vlaneseq
        %v1473 = vshrl.u32 %v1472, 7
        %v1474 = vsub.s32 %v1471, %v1473
        %v1475 = vrot.slane %v1467, %v1474
        %v1477 = vunpack.c.l.s4 1934713408
        %v1478 = vunpack.c.0.s8 %v1477
        %v1479 = vlaneseq
        %v1480 = vshrl.u32 %v1479, 7
        %v1481 = vsub.s32 %v1478, %v1480
        %v1482 = vrot.slane %v1468, %v1481
        %v1483 = vcombine.low %v1459, %v1475
        %v1484 = vcombine.high %v1459, %v1475
        %v1485 = vcombine.low %v1466, %v1482
        %v1486 = vcombine.high %v1466, %v1482
        %v1487 = vpack.c.bf16 %v1483, %v1483
        %v1488 = vpack.c.bf16 %v1484, %v1484
        %v1489 = vpack.c.bf16 %v1485, %v1485
        %v1490 = vpack.c.bf16 %v1486, %v1486
        %v1491 = vld [vmem:[#allocation3] sm:$0xf]
        %v1492 = vld [vmem:[#allocation3 + $0x4] sm:$0xf]
        %v1493 = vld [vmem:[#allocation3 + $0x8] sm:$0xf]
        %v1494 = vld [vmem:[#allocation3 + $0xc] sm:$0xf]
        %v1495 = vld [vmem:[#allocation4] sm:$0xf]
        %v1496 = vld [vmem:[#allocation4 + $0x4] sm:$0xf]
        %v1497 = vld [vmem:[#allocation4 + $0x8] sm:$0xf]
        %v1498 = vld [vmem:[#allocation4 + $0xc] sm:$0xf]
        %vm1499 = vcmask 64512
        %v1501 = vsel %vm1499, %v1487, 0
        %v1504 = vsel %vm1499, %v1491, 0
        %1506 = vmatprep.subr.bf16.mxu0 0
        %1507 = vmatpush1.bf16.xpose.msra.mxu0 %v1504
        %1508 = vmatprep.subr.bf16.mxu0 0
        %1509 = vmatpush1.bf16.xpose.msra.mxu0 0
        %1510 = vmatprep.subr.bf16.mxu0 0
        %1511 = vmatpush1.bf16.xpose.msra.mxu0 0
        %1512 = vmatprep.subr.bf16.mxu0 0
        %1513 = vmatpush1.bf16.xpose.msra.mxu0 0
        %1514 = vmatprep.subr.bf16.mxu0 0
        %1515 = vmatpush1.bf16.xpose.msra.mxu0 0
        %1516 = vmatprep.subr.bf16.mxu0 0
        %1517 = vmatpush1.bf16.xpose.msra.mxu0 0
        %1518 = vmatprep.subr.bf16.mxu0 0
        %1519 = vmatpush1.bf16.xpose.msra.mxu0 0
        %1520 = vmatprep.subr.bf16.mxu0 0
        %1521 = vmatpush1.bf16.xpose.msra.mxu0 0
        %1522 = vmatprep.subr.bf16.mxu0 0
        %1523 = vmatpush1.bf16.xpose.msra.mxu0 0
        %1524 = vmatprep.subr.bf16.mxu0 0
        %1525 = vmatpush1.bf16.xpose.msra.mxu0 0
        %1526 = vmatprep.subr.bf16.mxu0 0
        %1527 = vmatpush1.bf16.xpose.msra.mxu0 0
        %1528 = vmatprep.subr.bf16.mxu0 0
        %1529 = vmatpush1.bf16.xpose.msra.mxu0 0
        %1530 = vmatprep.subr.bf16.mxu0 0
        %1531 = vmatpush1.bf16.xpose.msra.mxu0 0
        %1532 = vmatprep.subr.bf16.mxu0 0
        %1533 = vmatpush1.bf16.xpose.msra.mxu0 0
        %1534 = vmatprep.subr.bf16.mxu0 0
        %1535 = vmatpush1.bf16.xpose.msra.mxu0 0
        %1536 = vmatprep.subr.bf16.mxu0 0
        %1537 = vmatpush1.bf16.xpose.msra.mxu0 0
        %1538 = vmatprep.mubr.bf16.mxu0 0
        %1539 = vmatmul.mubr.bf16.gmra.mrb[0].mxu0 %v1501
        %v1540 = vpop.f32.mrb[0].mxu0
        %v1541 = vadd.f32 0.0, %v1540
        %v1542 = vpop.f32.mrb[0].mxu0
        %v1543 = vpop.f32.mrb[0].mxu0
        %v1544 = vpop.f32.mrb[0].mxu0
        %1545 = vdwg.mxu0
        %v1547 = vsel %vm1499, %v1488, 0
        %v1550 = vsel %vm1499, %v1492, 0
        %1552 = vmatprep.subr.bf16.mxu0 0
        %1553 = vmatpush1.bf16.xpose.msra.mxu0 %v1550
        %1554 = vmatprep.subr.bf16.mxu0 0
        %1555 = vmatpush1.bf16.xpose.msra.mxu0 0
        %1556 = vmatprep.subr.bf16.mxu0 0
        %1557 = vmatpush1.bf16.xpose.msra.mxu0 0
        %1558 = vmatprep.subr.bf16.mxu0 0
        %1559 = vmatpush1.bf16.xpose.msra.mxu0 0
        %1560 = vmatprep.subr.bf16.mxu0 0
        %1561 = vmatpush1.bf16.xpose.msra.mxu0 0
        %1562 = vmatprep.subr.bf16.mxu0 0
        %1563 = vmatpush1.bf16.xpose.msra.mxu0 0
        %1564 = vmatprep.subr.bf16.mxu0 0
        %1565 = vmatpush1.bf16.xpose.msra.mxu0 0
        %1566 = vmatprep.subr.bf16.mxu0 0
        %1567 = vmatpush1.bf16.xpose.msra.mxu0 0
        %1568 = vmatprep.subr.bf16.mxu0 0
        %1569 = vmatpush1.bf16.xpose.msra.mxu0 0
        %1570 = vmatprep.subr.bf16.mxu0 0
        %1571 = vmatpush1.bf16.xpose.msra.mxu0 0
        %1572 = vmatprep.subr.bf16.mxu0 0
        %1573 = vmatpush1.bf16.xpose.msra.mxu0 0
        %1574 = vmatprep.subr.bf16.mxu0 0
        %1575 = vmatpush1.bf16.xpose.msra.mxu0 0
        %1576 = vmatprep.subr.bf16.mxu0 0
        %1577 = vmatpush1.bf16.xpose.msra.mxu0 0
        %1578 = vmatprep.subr.bf16.mxu0 0
        %1579 = vmatpush1.bf16.xpose.msra.mxu0 0
        %1580 = vmatprep.subr.bf16.mxu0 0
        %1581 = vmatpush1.bf16.xpose.msra.mxu0 0
        %1582 = vmatprep.subr.bf16.mxu0 0
        %1583 = vmatpush1.bf16.xpose.msra.mxu0 0
        %1584 = vmatprep.mubr.bf16.mxu0 0
        %1585 = vmatmul.mubr.bf16.gmra.mrb[0].mxu0 %v1547
        %v1586 = vpop.f32.mrb[0].mxu0
        %v1587 = vadd.f32 0.0, %v1586
        %v1588 = vpop.f32.mrb[0].mxu0
        %v1589 = vpop.f32.mrb[0].mxu0
        %v1590 = vpop.f32.mrb[0].mxu0
        %1591 = vdwg.mxu0
        %v1593 = vsel %vm1499, %v1489, 0
        %v1596 = vsel %vm1499, %v1493, 0
        %1598 = vmatprep.subr.bf16.mxu0 0
        %1599 = vmatpush1.bf16.xpose.msra.mxu0 %v1596
        %1600 = vmatprep.subr.bf16.mxu0 0
        %1601 = vmatpush1.bf16.xpose.msra.mxu0 0
        %1602 = vmatprep.subr.bf16.mxu0 0
        %1603 = vmatpush1.bf16.xpose.msra.mxu0 0
        %1604 = vmatprep.subr.bf16.mxu0 0
        %1605 = vmatpush1.bf16.xpose.msra.mxu0 0
        %1606 = vmatprep.subr.bf16.mxu0 0
        %1607 = vmatpush1.bf16.xpose.msra.mxu0 0
        %1608 = vmatprep.subr.bf16.mxu0 0
        %1609 = vmatpush1.bf16.xpose.msra.mxu0 0
        %1610 = vmatprep.subr.bf16.mxu0 0
        %1611 = vmatpush1.bf16.xpose.msra.mxu0 0
        %1612 = vmatprep.subr.bf16.mxu0 0
        %1613 = vmatpush1.bf16.xpose.msra.mxu0 0
        %1614 = vmatprep.subr.bf16.mxu0 0
        %1615 = vmatpush1.bf16.xpose.msra.mxu0 0
        %1616 = vmatprep.subr.bf16.mxu0 0
        %1617 = vmatpush1.bf16.xpose.msra.mxu0 0
        %1618 = vmatprep.subr.bf16.mxu0 0
        %1619 = vmatpush1.bf16.xpose.msra.mxu0 0
        %1620 = vmatprep.subr.bf16.mxu0 0
        %1621 = vmatpush1.bf16.xpose.msra.mxu0 0
        %1622 = vmatprep.subr.bf16.mxu0 0
        %1623 = vmatpush1.bf16.xpose.msra.mxu0 0
        %1624 = vmatprep.subr.bf16.mxu0 0
        %1625 = vmatpush1.bf16.xpose.msra.mxu0 0
        %1626 = vmatprep.subr.bf16.mxu0 0
        %1627 = vmatpush1.bf16.xpose.msra.mxu0 0
        %1628 = vmatprep.subr.bf16.mxu0 0
        %1629 = vmatpush1.bf16.xpose.msra.mxu0 0
        %1630 = vmatprep.mubr.bf16.mxu0 0
        %1631 = vmatmul.mubr.bf16.gmra.mrb[0].mxu0 %v1593
        %v1632 = vpop.f32.mrb[0].mxu0
        %v1633 = vadd.f32 0.0, %v1632
        %v1634 = vpop.f32.mrb[0].mxu0
        %v1635 = vpop.f32.mrb[0].mxu0
        %v1636 = vpop.f32.mrb[0].mxu0
        %1637 = vdwg.mxu0
        %v1639 = vsel %vm1499, %v1490, 0
        %v1642 = vsel %vm1499, %v1494, 0
        %1644 = vmatprep.subr.bf16.mxu0 0
        %1645 = vmatpush1.bf16.xpose.msra.mxu0 %v1642
        %1646 = vmatprep.subr.bf16.mxu0 0
        %1647 = vmatpush1.bf16.xpose.msra.mxu0 0
        %1648 = vmatprep.subr.bf16.mxu0 0
        %1649 = vmatpush1.bf16.xpose.msra.mxu0 0
        %1650 = vmatprep.subr.bf16.mxu0 0
        %1651 = vmatpush1.bf16.xpose.msra.mxu0 0
        %1652 = vmatprep.subr.bf16.mxu0 0
        %1653 = vmatpush1.bf16.xpose.msra.mxu0 0
        %1654 = vmatprep.subr.bf16.mxu0 0
        %1655 = vmatpush1.bf16.xpose.msra.mxu0 0
        %1656 = vmatprep.subr.bf16.mxu0 0
        %1657 = vmatpush1.bf16.xpose.msra.mxu0 0
        %1658 = vmatprep.subr.bf16.mxu0 0
        %1659 = vmatpush1.bf16.xpose.msra.mxu0 0
        %1660 = vmatprep.subr.bf16.mxu0 0
        %1661 = vmatpush1.bf16.xpose.msra.mxu0 0
        %1662 = vmatprep.subr.bf16.mxu0 0
        %1663 = vmatpush1.bf16.xpose.msra.mxu0 0
        %1664 = vmatprep.subr.bf16.mxu0 0
        %1665 = vmatpush1.bf16.xpose.msra.mxu0 0
        %1666 = vmatprep.subr.bf16.mxu0 0
        %1667 = vmatpush1.bf16.xpose.msra.mxu0 0
        %1668 = vmatprep.subr.bf16.mxu0 0
        %1669 = vmatpush1.bf16.xpose.msra.mxu0 0
        %1670 = vmatprep.subr.bf16.mxu0 0
        %1671 = vmatpush1.bf16.xpose.msra.mxu0 0
        %1672 = vmatprep.subr.bf16.mxu0 0
        %1673 = vmatpush1.bf16.xpose.msra.mxu0 0
        %1674 = vmatprep.subr.bf16.mxu0 0
        %1675 = vmatpush1.bf16.xpose.msra.mxu0 0
        %1676 = vmatprep.mubr.bf16.mxu0 0
        %1677 = vmatmul.mubr.bf16.gmra.mrb[0].mxu0 %v1639
        %v1678 = vpop.f32.mrb[0].mxu0
        %v1679 = vadd.f32 0.0, %v1678
        %v1680 = vpop.f32.mrb[0].mxu0
        %v1681 = vpop.f32.mrb[0].mxu0
        %v1682 = vpop.f32.mrb[0].mxu0
        %1683 = vdwg.mxu0
        %v1684 = vsel %vm1499, %v1541, -inf
        %1685 = vmax.xlane.f32.xlu0 %v1684
        %v1686 = vpop.xlane.xlu0 %1685
        %v1687 = vsel %vm1499, %v1587, -inf
        %1688 = vmax.xlane.f32.xlu0 %v1687
        %v1689 = vpop.xlane.xlu0 %1688
        %v1690 = vsel %vm1499, %v1633, -inf
        %1691 = vmax.xlane.f32.xlu0 %v1690
        %v1692 = vpop.xlane.xlu0 %1691
        %v1693 = vsel %vm1499, %v1679, -inf
        %1694 = vmax.xlane.f32.xlu0 %v1693
        %v1695 = vpop.xlane.xlu0 %1694
        %v1696 = vsub.f32 %v1541, %v1686
        %v1697 = vsub.f32 %v1587, %v1689
        %v1698 = vsub.f32 %v1633, %v1692
        %v1699 = vsub.f32 %v1679, %v1695
        %v1700 = vmul.f32 %v1696, 1.442695
        %v1701 = vpow.pop %v1700
        %v1702 = vmul.f32 %v1697, 1.442695
        %v1703 = vpow.pop %v1702
        %v1704 = vmul.f32 %v1698, 1.442695
        %v1705 = vpow.pop %v1704
        %v1706 = vmul.f32 %v1699, 1.442695
        %v1707 = vpow.pop %v1706
        %v1708 = vsel %vm1499, %v1701, 0.0
        %1709 = vadd.xlane.f32.xlu0 %v1708
        %v1710 = vpop.xlane.xlu0 %1709
        %v1711 = vsel %vm1499, %v1703, 0.0
        %1712 = vadd.xlane.f32.xlu0 %v1711
        %v1713 = vpop.xlane.xlu0 %1712
        %v1714 = vsel %vm1499, %v1705, 0.0
        %1715 = vadd.xlane.f32.xlu0 %v1714
        %v1716 = vpop.xlane.xlu0 %1715
        %v1717 = vsel %vm1499, %v1707, 0.0
        %1718 = vadd.xlane.f32.xlu0 %v1717
        %v1719 = vpop.xlane.xlu0 %1718
        %v1720 = vpack.c.bf16 %v1701, %v1701
        %v1721 = vpack.c.bf16 %v1703, %v1703
        %v1722 = vpack.c.bf16 %v1705, %v1705
        %v1723 = vpack.c.bf16 %v1707, %v1707
        %v1725 = vsel %vm1499, %v1720, 0
        %vm1727 = vcmask 1043456
        %v1729 = vsel %vm1727, %v1495, 0
        %1731 = vmatprep.subr.bf16.mxu0 0
        %1732 = vmatpush1.bf16.msra.mxu0 %v1729
        %1733 = vmatprep.subr.bf16.mxu0 0
        %1734 = vmatpush1.bf16.msra.mxu0 0
        %1735 = vmatprep.subr.bf16.mxu0 0
        %1736 = vmatpush1.bf16.msra.mxu0 0
        %1737 = vmatprep.subr.bf16.mxu0 0
        %1738 = vmatpush1.bf16.msra.mxu0 0
        %1739 = vmatprep.subr.bf16.mxu0 0
        %1740 = vmatpush1.bf16.msra.mxu0 0
        %1741 = vmatprep.subr.bf16.mxu0 0
        %1742 = vmatpush1.bf16.msra.mxu0 0
        %1743 = vmatprep.subr.bf16.mxu0 0
        %1744 = vmatpush1.bf16.msra.mxu0 0
        %1745 = vmatprep.subr.bf16.mxu0 0
        %1746 = vmatpush1.bf16.msra.mxu0 0
        %1747 = vmatprep.subr.bf16.mxu0 0
        %1748 = vmatpush1.bf16.msra.mxu0 0
        %1749 = vmatprep.subr.bf16.mxu0 0
        %1750 = vmatpush1.bf16.msra.mxu0 0
        %1751 = vmatprep.subr.bf16.mxu0 0
        %1752 = vmatpush1.bf16.msra.mxu0 0
        %1753 = vmatprep.subr.bf16.mxu0 0
        %1754 = vmatpush1.bf16.msra.mxu0 0
        %1755 = vmatprep.subr.bf16.mxu0 0
        %1756 = vmatpush1.bf16.msra.mxu0 0
        %1757 = vmatprep.subr.bf16.mxu0 0
        %1758 = vmatpush1.bf16.msra.mxu0 0
        %1759 = vmatprep.subr.bf16.mxu0 0
        %1760 = vmatpush1.bf16.msra.mxu0 0
        %1761 = vmatprep.subr.bf16.mxu0 0
        %1762 = vmatpush1.bf16.msra.mxu0 0
        %1763 = vmatprep.mubr.bf16.mxu0 0
        %1764 = vmatmul.mubr.bf16.gmra.mrb[0].mxu0 %v1725
        %v1765 = vpop.f32.mrb[0].mxu0
        %v1766 = vadd.f32 0.0, %v1765
        %v1767 = vpop.f32.mrb[0].mxu0
        %v1768 = vpop.f32.mrb[0].mxu0
        %v1769 = vpop.f32.mrb[0].mxu0
        %1770 = vdwg.mxu0
        %v1772 = vsel %vm1499, %v1721, 0
        %v1775 = vsel %vm1727, %v1496, 0
        %1777 = vmatprep.subr.bf16.mxu0 0
        %1778 = vmatpush1.bf16.msra.mxu0 %v1775
        %1779 = vmatprep.subr.bf16.mxu0 0
        %1780 = vmatpush1.bf16.msra.mxu0 0
        %1781 = vmatprep.subr.bf16.mxu0 0
        %1782 = vmatpush1.bf16.msra.mxu0 0
        %1783 = vmatprep.subr.bf16.mxu0 0
        %1784 = vmatpush1.bf16.msra.mxu0 0
        %1785 = vmatprep.subr.bf16.mxu0 0
        %1786 = vmatpush1.bf16.msra.mxu0 0
        %1787 = vmatprep.subr.bf16.mxu0 0
        %1788 = vmatpush1.bf16.msra.mxu0 0
        %1789 = vmatprep.subr.bf16.mxu0 0
        %1790 = vmatpush1.bf16.msra.mxu0 0
        %1791 = vmatprep.subr.bf16.mxu0 0
        %1792 = vmatpush1.bf16.msra.mxu0 0
        %1793 = vmatprep.subr.bf16.mxu0 0
        %1794 = vmatpush1.bf16.msra.mxu0 0
        %1795 = vmatprep.subr.bf16.mxu0 0
        %1796 = vmatpush1.bf16.msra.mxu0 0
        %1797 = vmatprep.subr.bf16.mxu0 0
        %1798 = vmatpush1.bf16.msra.mxu0 0
        %1799 = vmatprep.subr.bf16.mxu0 0
        %1800 = vmatpush1.bf16.msra.mxu0 0
        %1801 = vmatprep.subr.bf16.mxu0 0
        %1802 = vmatpush1.bf16.msra.mxu0 0
        %1803 = vmatprep.subr.bf16.mxu0 0
        %1804 = vmatpush1.bf16.msra.mxu0 0
        %1805 = vmatprep.subr.bf16.mxu0 0
        %1806 = vmatpush1.bf16.msra.mxu0 0
        %1807 = vmatprep.subr.bf16.mxu0 0
        %1808 = vmatpush1.bf16.msra.mxu0 0
        %1809 = vmatprep.mubr.bf16.mxu0 0
        %1810 = vmatmul.mubr.bf16.gmra.mrb[0].mxu0 %v1772
        %v1811 = vpop.f32.mrb[0].mxu0
        %v1812 = vadd.f32 0.0, %v1811
        %v1813 = vpop.f32.mrb[0].mxu0
        %v1814 = vpop.f32.mrb[0].mxu0
        %v1815 = vpop.f32.mrb[0].mxu0
        %1816 = vdwg.mxu0
        %v1818 = vsel %vm1499, %v1722, 0
        %v1821 = vsel %vm1727, %v1497, 0
        %1823 = vmatprep.subr.bf16.mxu0 0
        %1824 = vmatpush1.bf16.msra.mxu0 %v1821
        %1825 = vmatprep.subr.bf16.mxu0 0
        %1826 = vmatpush1.bf16.msra.mxu0 0
        %1827 = vmatprep.subr.bf16.mxu0 0
        %1828 = vmatpush1.bf16.msra.mxu0 0
        %1829 = vmatprep.subr.bf16.mxu0 0
        %1830 = vmatpush1.bf16.msra.mxu0 0
        %1831 = vmatprep.subr.bf16.mxu0 0
        %1832 = vmatpush1.bf16.msra.mxu0 0
        %1833 = vmatprep.subr.bf16.mxu0 0
        %1834 = vmatpush1.bf16.msra.mxu0 0
        %1835 = vmatprep.subr.bf16.mxu0 0
        %1836 = vmatpush1.bf16.msra.mxu0 0
        %1837 = vmatprep.subr.bf16.mxu0 0
        %1838 = vmatpush1.bf16.msra.mxu0 0
        %1839 = vmatprep.subr.bf16.mxu0 0
        %1840 = vmatpush1.bf16.msra.mxu0 0
        %1841 = vmatprep.subr.bf16.mxu0 0
        %1842 = vmatpush1.bf16.msra.mxu0 0
        %1843 = vmatprep.subr.bf16.mxu0 0
        %1844 = vmatpush1.bf16.msra.mxu0 0
        %1845 = vmatprep.subr.bf16.mxu0 0
        %1846 = vmatpush1.bf16.msra.mxu0 0
        %1847 = vmatprep.subr.bf16.mxu0 0
        %1848 = vmatpush1.bf16.msra.mxu0 0
        %1849 = vmatprep.subr.bf16.mxu0 0
        %1850 = vmatpush1.bf16.msra.mxu0 0
        %1851 = vmatprep.subr.bf16.mxu0 0
        %1852 = vmatpush1.bf16.msra.mxu0 0
        %1853 = vmatprep.subr.bf16.mxu0 0
        %1854 = vmatpush1.bf16.msra.mxu0 0
        %1855 = vmatprep.mubr.bf16.mxu0 0
        %1856 = vmatmul.mubr.bf16.gmra.mrb[0].mxu0 %v1818
        %v1857 = vpop.f32.mrb[0].mxu0
        %v1858 = vadd.f32 0.0, %v1857
        %v1859 = vpop.f32.mrb[0].mxu0
        %v1860 = vpop.f32.mrb[0].mxu0
        %v1861 = vpop.f32.mrb[0].mxu0
        %1862 = vdwg.mxu0
        %v1864 = vsel %vm1499, %v1723, 0
        %v1867 = vsel %vm1727, %v1498, 0
        %1869 = vmatprep.subr.bf16.mxu0 0
        %1870 = vmatpush1.bf16.msra.mxu0 %v1867
        %1871 = vmatprep.subr.bf16.mxu0 0
        %1872 = vmatpush1.bf16.msra.mxu0 0
        %1873 = vmatprep.subr.bf16.mxu0 0
        %1874 = vmatpush1.bf16.msra.mxu0 0
        %1875 = vmatprep.subr.bf16.mxu0 0
        %1876 = vmatpush1.bf16.msra.mxu0 0
        %1877 = vmatprep.subr.bf16.mxu0 0
        %1878 = vmatpush1.bf16.msra.mxu0 0
        %1879 = vmatprep.subr.bf16.mxu0 0
        %1880 = vmatpush1.bf16.msra.mxu0 0
        %1881 = vmatprep.subr.bf16.mxu0 0
        %1882 = vmatpush1.bf16.msra.mxu0 0
        %1883 = vmatprep.subr.bf16.mxu0 0
        %1884 = vmatpush1.bf16.msra.mxu0 0
        %1885 = vmatprep.subr.bf16.mxu0 0
        %1886 = vmatpush1.bf16.msra.mxu0 0
        %1887 = vmatprep.subr.bf16.mxu0 0
        %1888 = vmatpush1.bf16.msra.mxu0 0
        %1889 = vmatprep.subr.bf16.mxu0 0
        %1890 = vmatpush1.bf16.msra.mxu0 0
        %1891 = vmatprep.subr.bf16.mxu0 0
        %1892 = vmatpush1.bf16.msra.mxu0 0
        %1893 = vmatprep.subr.bf16.mxu0 0
        %1894 = vmatpush1.bf16.msra.mxu0 0
        %1895 = vmatprep.subr.bf16.mxu0 0
        %1896 = vmatpush1.bf16.msra.mxu0 0
        %1897 = vmatprep.subr.bf16.mxu0 0
        %1898 = vmatpush1.bf16.msra.mxu0 0
        %1899 = vmatprep.subr.bf16.mxu0 0
        %1900 = vmatpush1.bf16.msra.mxu0 0
        %1901 = vmatprep.mubr.bf16.mxu0 0
        %1902 = vmatmul.mubr.bf16.gmra.mrb[0].mxu0 %v1864
        %v1903 = vpop.f32.mrb[0].mxu0
        %v1904 = vadd.f32 0.0, %v1903
        %v1905 = vpop.f32.mrb[0].mxu0
        %v1906 = vpop.f32.mrb[0].mxu0
        %v1907 = vpop.f32.mrb[0].mxu0
        %1908 = vdwg.mxu0
        %v1909 = vrcp.pop %v1710
        %v1910 = vrcp.pop %v1713
        %v1911 = vrcp.pop %v1716
        %v1912 = vrcp.pop %v1719
        %v1913 = vmul.f32 %v1766, %v1909
        %v1914 = vmul.f32 %v1812, %v1910
        %v1915 = vmul.f32 %v1858, %v1911
        %v1916 = vmul.f32 %v1904, %v1912
        %v1917 = vcombine.low %v1913, %v1915
        %v1918 = vcombine.high %v1913, %v1915
        %v1920 = vunpack.c.l.s4 1983009808
        %v1921 = vunpack.c.0.s8 %v1920
        %v1922 = vlaneseq
        %v1923 = vshrl.u32 %v1922, 7
        %v1924 = vsub.s32 %v1921, %v1923
        %v1925 = vrot.slane %v1917, %v1924
        %v1927 = vunpack.c.l.s4 1983009808
        %v1928 = vunpack.c.0.s8 %v1927
        %v1929 = vlaneseq
        %v1930 = vshrl.u32 %v1929, 7
        %v1931 = vsub.s32 %v1928, %v1930
        %v1932 = vrot.slane %v1918, %v1931
        %v1933 = vcombine.low %v1914, %v1916
        %v1934 = vcombine.high %v1914, %v1916
        %v1936 = vunpack.c.l.s4 1983009808
        %v1937 = vunpack.c.0.s8 %v1936
        %v1938 = vlaneseq
        %v1939 = vshrl.u32 %v1938, 7
        %v1940 = vsub.s32 %v1937, %v1939
        %v1941 = vrot.slane %v1933, %v1940
        %v1943 = vunpack.c.l.s4 1983009808
        %v1944 = vunpack.c.0.s8 %v1943
        %v1945 = vlaneseq
        %v1946 = vshrl.u32 %v1945, 7
        %v1947 = vsub.s32 %v1944, %v1946
        %v1948 = vrot.slane %v1934, %v1947
        %v1949 = vcombine.low %v1925, %v1941
        %v1950 = vcombine.high %v1925, %v1941
        %v1952 = vunpack.c.l.s4 1934713408
        %v1953 = vunpack.c.0.s8 %v1952
        %v1954 = vlaneseq
        %v1955 = vshrl.u32 %v1954, 7
        %v1956 = vsub.s32 %v1953, %v1955
        %v1957 = vrot.slane %v1949, %v1956
        %v1959 = vunpack.c.l.s4 1934713408
        %v1960 = vunpack.c.0.s8 %v1959
        %v1961 = vlaneseq
        %v1962 = vshrl.u32 %v1961, 7
        %v1963 = vsub.s32 %v1960, %v1962
        %v1964 = vrot.slane %v1950, %v1963
        %v1965 = vcombine.low %v1932, %v1948
        %v1966 = vcombine.high %v1932, %v1948
        %v1968 = vunpack.c.l.s4 1934713408
        %v1969 = vunpack.c.0.s8 %v1968
        %v1970 = vlaneseq
        %v1971 = vshrl.u32 %v1970, 7
        %v1972 = vsub.s32 %v1969, %v1971
        %v1973 = vrot.slane %v1965, %v1972
        %v1975 = vunpack.c.l.s4 1934713408
        %v1976 = vunpack.c.0.s8 %v1975
        %v1977 = vlaneseq
        %v1978 = vshrl.u32 %v1977, 7
        %v1979 = vsub.s32 %v1976, %v1978
        %v1980 = vrot.slane %v1966, %v1979
        %v1981 = vcombine.high %v1957, 0.0
        %v1982 = vcombine.high %v1964, 0.0
        %v1983 = vcombine.high %v1973, 0.0
        %v1984 = vcombine.high %v1980, 0.0
        %v1985 = vcombine.low %v1957, %v1964
        %v1987 = vunpack.c.l.s4 1983009808
        %v1988 = vunpack.c.0.s8 %v1987
        %v1989 = vlaneseq
        %v1990 = vshrl.u32 %v1989, 7
        %v1991 = vsub.s32 %v1988, %v1990
        %v1992 = vrot.slane %v1985, %v1991
        %v1993 = vcombine.low %v1981, %v1982
        %v1995 = vunpack.c.l.s4 1983009808
        %v1996 = vunpack.c.0.s8 %v1995
        %v1997 = vlaneseq
        %v1998 = vshrl.u32 %v1997, 7
        %v1999 = vsub.s32 %v1996, %v1998
        %v2000 = vrot.slane %v1993, %v1999
        %v2001 = vcombine.low %v1973, %v1980
        %v2003 = vunpack.c.l.s4 1983009808
        %v2004 = vunpack.c.0.s8 %v2003
        %v2005 = vlaneseq
        %v2006 = vshrl.u32 %v2005, 7
        %v2007 = vsub.s32 %v2004, %v2006
        %v2008 = vrot.slane %v2001, %v2007
        %v2009 = vcombine.low %v1983, %v1984
        %v2011 = vunpack.c.l.s4 1983009808
        %v2012 = vunpack.c.0.s8 %v2011
        %v2013 = vlaneseq
        %v2014 = vshrl.u32 %v2013, 7
        %v2015 = vsub.s32 %v2012, %v2014
        %v2016 = vrot.slane %v2009, %v2015
        %v2017 = vcombine.low %v1992, %v2000
        %v2018 = vcombine.high %v1992, %v2000
        %v2020 = vunpack.c.l.s4 1934713408
        %v2021 = vunpack.c.0.s8 %v2020
        %v2022 = vlaneseq
        %v2023 = vshrl.u32 %v2022, 7
        %v2024 = vsub.s32 %v2021, %v2023
        %v2025 = vrot.slane %v2017, %v2024
        %v2027 = vunpack.c.l.s4 1934713408
        %v2028 = vunpack.c.0.s8 %v2027
        %v2029 = vlaneseq
        %v2030 = vshrl.u32 %v2029, 7
        %v2031 = vsub.s32 %v2028, %v2030
        %v2032 = vrot.slane %v2018, %v2031
        %v2033 = vcombine.low %v2008, %v2016
        %v2034 = vcombine.high %v2008, %v2016
        %v2036 = vunpack.c.l.s4 1934713408
        %v2037 = vunpack.c.0.s8 %v2036
        %v2038 = vlaneseq
        %v2039 = vshrl.u32 %v2038, 7
        %v2040 = vsub.s32 %v2037, %v2039
        %v2041 = vrot.slane %v2033, %v2040
        %v2043 = vunpack.c.l.s4 1934713408
        %v2044 = vunpack.c.0.s8 %v2043
        %v2045 = vlaneseq
        %v2046 = vshrl.u32 %v2045, 7
        %v2047 = vsub.s32 %v2044, %v2046
        %v2048 = vrot.slane %v2034, %v2047
        %v2049 = vcombine.low %v2025, %v2041
        %v2050 = vcombine.high %v2025, %v2041
        %v2051 = vcombine.low %v2032, %v2048
        %v2052 = vcombine.high %v2032, %v2048
        %2054 = vrot.lane.b32.xlu0 %v2050, 8
        %v2055 = vpop.permute.xlu0 %2054
        %2058 = vrot.lane.b32.xlu0 %v2051, 16
        %v2059 = vpop.permute.xlu0 %2058
        %2062 = vrot.lane.b32.xlu0 %v2052, 24
        %v2063 = vpop.permute.xlu0 %2062
        %v2065 = vsel %vm1499, %v2049, %v2055
        %vm2066 = vcmask 130048
        %v2067 = vsel %vm2066, %v2065, %v2059
        %vm2068 = vcmask 195584
        %v2069 = vsel %vm2068, %v2067, %v2063
        %v2070 = vpack.c.bf16 %v2069, %v2069
        %v2071 = vld [vmem:[#allocation20] sm:$0xf]
        %v2072 = vld [vmem:[#allocation20 + $0x4] sm:$0xf]
        %v2073 = vld [vmem:[#allocation20 + $0x8] sm:$0xf]
        %v2074 = vld [vmem:[#allocation20 + $0xc] sm:$0xf]
        %v2075 = vld [vmem:[#allocation22] sm:$0x1]
        %v2077 = vlaneseq
        %v2078 = vshrl.u32 %v2077, 7
        %v2079 = vsub.s32 0, %v2078
        %v2080 = vrot.slane %v2075, %v2079
        %v2086 = vunpack.c.l.b16 %v2071
        %v2087 = vunpack.c.l.b16 %v2072
        %v2088 = vunpack.c.l.b16 %v2073
        %v2089 = vunpack.c.l.b16 %v2074
        %v2090 = vpack.c.b16 %v2087, %v2086
        %v2091 = vpack.c.b16 %v2089, %v2088
        %v2095 = vsel %vm1297, %v2070, 0
        %2097 = vmatprep.subr.bf16.mxu0 0
        %2098 = vmatpush1.bf16.msra.mxu0 %v2090
        %2099 = vmatprep.subr.bf16.mxu0 0
        %2100 = vmatpush1.bf16.msra.mxu0 %v2091
        %2101 = vmatprep.subr.bf16.mxu0 0
        %2102 = vmatpush1.bf16.msra.mxu0 0
        %2103 = vmatprep.subr.bf16.mxu0 0
        %2104 = vmatpush1.bf16.msra.mxu0 0
        %2105 = vmatprep.subr.bf16.mxu0 0
        %2106 = vmatpush1.bf16.msra.mxu0 0
        %2107 = vmatprep.subr.bf16.mxu0 0
        %2108 = vmatpush1.bf16.msra.mxu0 0
        %2109 = vmatprep.subr.bf16.mxu0 0
        %2110 = vmatpush1.bf16.msra.mxu0 0
        %2111 = vmatprep.subr.bf16.mxu0 0
        %2112 = vmatpush1.bf16.msra.mxu0 0
        %2113 = vmatprep.subr.bf16.mxu0 0
        %2114 = vmatpush1.bf16.msra.mxu0 0
        %2115 = vmatprep.subr.bf16.mxu0 0
        %2116 = vmatpush1.bf16.msra.mxu0 0
        %2117 = vmatprep.subr.bf16.mxu0 0
        %2118 = vmatpush1.bf16.msra.mxu0 0
        %2119 = vmatprep.subr.bf16.mxu0 0
        %2120 = vmatpush1.bf16.msra.mxu0 0
        %2121 = vmatprep.subr.bf16.mxu0 0
        %2122 = vmatpush1.bf16.msra.mxu0 0
        %2123 = vmatprep.subr.bf16.mxu0 0
        %2124 = vmatpush1.bf16.msra.mxu0 0
        %2125 = vmatprep.subr.bf16.mxu0 0
        %2126 = vmatpush1.bf16.msra.mxu0 0
        %2127 = vmatprep.subr.bf16.mxu0 0
        %2128 = vmatpush1.bf16.msra.mxu0 0
        %2129 = vmatprep.mubr.bf16.mxu0 0
        %2130 = vmatmul.mubr.bf16.gmra.mrb[0].mxu0 %v2095
        %v2131 = vpop.f32.mrb[0].mxu0
        %v2132 = vadd.f32 %v2080, %v2131
        %v2133 = vpop.f32.mrb[0].mxu0
        %v2134 = vpop.f32.mrb[0].mxu0
        %v2135 = vpop.f32.mrb[0].mxu0
        %2136 = vdwg.mxu0
        %s2137 = scalar_lea.vmem %s675, %s791 [#allocation5]
        %v2138 = vld [vmem:[%s2137] sm:$0xff]
        %v2139 = vadd.f32 %v2138, %v2132
        %v2140 = vld [vmem:[#allocation23] sm:$0x1]
        %v2141 = vld [vmem:[#allocation25] sm:$0x1]
        %v2142 = vsel %vm1297, %v2139, 0.0
        %2143 = vadd.xlane.f32.xlu0 %v2142
        %v2144 = vpop.xlane.xlu0 %2143
        %v2145 = vrcp.pop 32.0
        %v2146 = vmul.f32 %v2144, %v2145
        %v2147 = vsub.f32 %v2139, %v2146
        %v2148 = vmul.f32 %v2147, %v2147
        %v2149 = vsel %vm1297, %v2148, 0.0
        %2150 = vadd.xlane.f32.xlu0 %v2149
        %v2151 = vpop.xlane.xlu0 %2150
        %v2152 = vmul.f32 %v2151, %v2145
        %v2153 = vadd.f32 %v2152, 1e-05
        %v2154 = vrsqrt.pop %v2153
        %v2155 = vmul.f32 %v2147, %v2154
        %v2157 = vlaneseq
        %v2158 = vshrl.u32 %v2157, 7
        %v2159 = vsub.s32 0, %v2158
        %v2160 = vrot.slane %v2140, %v2159
        %v2162 = vmul.f32 %v2155, %v2160
        %v2164 = vlaneseq
        %v2165 = vshrl.u32 %v2164, 7
        %v2166 = vsub.s32 0, %v2165
        %v2167 = vrot.slane %v2141, %v2166
        %v2169 = vadd.f32 %v2162, %v2167
        %v2170 = vpack.c.bf16 %v2169, %v2169
        %v2171 = vld [vmem:[#allocation26] sm:$0xf]
        %v2172 = vld [vmem:[#allocation26 + $0x4] sm:$0xf]
        %v2173 = vld [vmem:[#allocation26 + $0x8] sm:$0xf]
        %v2174 = vld [vmem:[#allocation26 + $0xc] sm:$0xf]
        %v2175 = vld [vmem:[#allocation28] sm:$0x1]
        %v2177 = vlaneseq
        %v2178 = vshrl.u32 %v2177, 7
        %v2179 = vsub.s32 0, %v2178
        %v2180 = vrot.slane %v2175, %v2179
        %v2186 = vunpack.c.l.b16 %v2171
        %v2187 = vunpack.c.l.b16 %v2172
        %v2188 = vunpack.c.l.b16 %v2173
        %v2189 = vunpack.c.l.b16 %v2174
        %v2190 = vpack.c.b16 %v2187, %v2186
        %v2191 = vpack.c.b16 %v2189, %v2188
        %v2195 = vsel %vm1297, %v2170, 0
        %2197 = vmatprep.subr.bf16.mxu0 0
        %2198 = vmatpush1.bf16.msra.mxu0 %v2190
        %2199 = vmatprep.subr.bf16.mxu0 0
        %2200 = vmatpush1.bf16.msra.mxu0 %v2191
        %2201 = vmatprep.subr.bf16.mxu0 0
        %2202 = vmatpush1.bf16.msra.mxu0 0
        %2203 = vmatprep.subr.bf16.mxu0 0
        %2204 = vmatpush1.bf16.msra.mxu0 0
        %2205 = vmatprep.subr.bf16.mxu0 0
        %2206 = vmatpush1.bf16.msra.mxu0 0
        %2207 = vmatprep.subr.bf16.mxu0 0
        %2208 = vmatpush1.bf16.msra.mxu0 0
        %2209 = vmatprep.subr.bf16.mxu0 0
        %2210 = vmatpush1.bf16.msra.mxu0 0
        %2211 = vmatprep.subr.bf16.mxu0 0
        %2212 = vmatpush1.bf16.msra.mxu0 0
        %2213 = vmatprep.subr.bf16.mxu0 0
        %2214 = vmatpush1.bf16.msra.mxu0 0
        %2215 = vmatprep.subr.bf16.mxu0 0
        %2216 = vmatpush1.bf16.msra.mxu0 0
        %2217 = vmatprep.subr.bf16.mxu0 0
        %2218 = vmatpush1.bf16.msra.mxu0 0
        %2219 = vmatprep.subr.bf16.mxu0 0
        %2220 = vmatpush1.bf16.msra.mxu0 0
        %2221 = vmatprep.subr.bf16.mxu0 0
        %2222 = vmatpush1.bf16.msra.mxu0 0
        %2223 = vmatprep.subr.bf16.mxu0 0
        %2224 = vmatpush1.bf16.msra.mxu0 0
        %2225 = vmatprep.subr.bf16.mxu0 0
        %2226 = vmatpush1.bf16.msra.mxu0 0
        %2227 = vmatprep.subr.bf16.mxu0 0
        %2228 = vmatpush1.bf16.msra.mxu0 0
        %2229 = vmatprep.mubr.bf16.mxu0 0
        %2230 = vmatmul.mubr.bf16.gmra.mrb[0].mxu0 %v2195
        %v2231 = vpop.f32.mrb[0].mxu0
        %v2232 = vadd.f32 %v2180, %v2231
        %v2233 = vpop.f32.mrb[0].mxu0
        %v2234 = vpop.f32.mrb[0].mxu0
        %v2235 = vpop.f32.mrb[0].mxu0
        %2236 = vdwg.mxu0
        %v2237 = vmul.f32 %v2232, 1.702
        %v2238 = vxor.u32 %v2237, 2147483648
        %v2239 = vmul.f32 %v2238, 1.442695
        %v2240 = vpow.pop %v2239
        %v2241 = vadd.f32 %v2240, 1.0
        %v2242 = vrcp.pop %v2241
        %v2243 = vmul.f32 1.0, %v2242
        %v2244 = vmul.f32 %v2232, %v2243
        %v2245 = vpack.c.bf16 %v2244, %v2244
        %v2246 = vld [vmem:[#allocation29] sm:$0xf]
        %v2247 = vld [vmem:[#allocation29 + $0x4] sm:$0xf]
        %v2248 = vld [vmem:[#allocation29 + $0x8] sm:$0xf]
        %v2249 = vld [vmem:[#allocation29 + $0xc] sm:$0xf]
        %v2250 = vld [vmem:[#allocation29 + $0x10] sm:$0xf]
        %v2251 = vld [vmem:[#allocation29 + $0x14] sm:$0xf]
        %v2252 = vld [vmem:[#allocation29 + $0x18] sm:$0xf]
        %v2253 = vld [vmem:[#allocation29 + $0x1c] sm:$0xf]
        %v2254 = vld [vmem:[#allocation29 + $0x20] sm:$0xf]
        %v2255 = vld [vmem:[#allocation29 + $0x24] sm:$0xf]
        %v2256 = vld [vmem:[#allocation29 + $0x28] sm:$0xf]
        %v2257 = vld [vmem:[#allocation29 + $0x2c] sm:$0xf]
        %v2258 = vld [vmem:[#allocation29 + $0x30] sm:$0xf]
        %v2259 = vld [vmem:[#allocation29 + $0x34] sm:$0xf]
        %v2260 = vld [vmem:[#allocation29 + $0x38] sm:$0xf]
        %v2261 = vld [vmem:[#allocation29 + $0x3c] sm:$0xf]
        %v2262 = vld [vmem:[#allocation31] sm:$0x1]
        %v2264 = vlaneseq
        %v2265 = vshrl.u32 %v2264, 7
        %v2266 = vsub.s32 0, %v2265
        %v2267 = vrot.slane %v2262, %v2266
        %v2285 = vunpack.c.l.b16 %v2246
        %v2286 = vunpack.c.l.b16 %v2247
        %v2287 = vunpack.c.l.b16 %v2248
        %v2288 = vunpack.c.l.b16 %v2249
        %v2289 = vunpack.c.l.b16 %v2250
        %v2290 = vunpack.c.l.b16 %v2251
        %v2291 = vunpack.c.l.b16 %v2252
        %v2292 = vunpack.c.l.b16 %v2253
        %v2293 = vunpack.c.l.b16 %v2254
        %v2294 = vunpack.c.l.b16 %v2255
        %v2295 = vunpack.c.l.b16 %v2256
        %v2296 = vunpack.c.l.b16 %v2257
        %v2297 = vunpack.c.l.b16 %v2258
        %v2298 = vunpack.c.l.b16 %v2259
        %v2299 = vunpack.c.l.b16 %v2260
        %v2300 = vunpack.c.l.b16 %v2261
        %v2301 = vpack.c.b16 %v2286, %v2285
        %v2302 = vpack.c.b16 %v2288, %v2287
        %v2303 = vpack.c.b16 %v2290, %v2289
        %v2304 = vpack.c.b16 %v2292, %v2291
        %v2305 = vpack.c.b16 %v2294, %v2293
        %v2306 = vpack.c.b16 %v2296, %v2295
        %v2307 = vpack.c.b16 %v2298, %v2297
        %v2308 = vpack.c.b16 %v2300, %v2299
        %2317 = vmatprep.subr.bf16.mxu0 0
        %2318 = vmatpush1.bf16.msra.mxu0 %v2301
        %2319 = vmatprep.subr.bf16.mxu0 0
        %2320 = vmatpush1.bf16.msra.mxu0 %v2302
        %2321 = vmatprep.subr.bf16.mxu0 0
        %2322 = vmatpush1.bf16.msra.mxu0 %v2303
        %2323 = vmatprep.subr.bf16.mxu0 0
        %2324 = vmatpush1.bf16.msra.mxu0 %v2304
        %2325 = vmatprep.subr.bf16.mxu0 0
        %2326 = vmatpush1.bf16.msra.mxu0 %v2305
        %2327 = vmatprep.subr.bf16.mxu0 0
        %2328 = vmatpush1.bf16.msra.mxu0 %v2306
        %2329 = vmatprep.subr.bf16.mxu0 0
        %2330 = vmatpush1.bf16.msra.mxu0 %v2307
        %2331 = vmatprep.subr.bf16.mxu0 0
        %2332 = vmatpush1.bf16.msra.mxu0 %v2308
        %2333 = vmatprep.subr.bf16.mxu0 0
        %2334 = vmatpush1.bf16.msra.mxu0 0
        %2335 = vmatprep.subr.bf16.mxu0 0
        %2336 = vmatpush1.bf16.msra.mxu0 0
        %2337 = vmatprep.subr.bf16.mxu0 0
        %2338 = vmatpush1.bf16.msra.mxu0 0
        %2339 = vmatprep.subr.bf16.mxu0 0
        %2340 = vmatpush1.bf16.msra.mxu0 0
        %2341 = vmatprep.subr.bf16.mxu0 0
        %2342 = vmatpush1.bf16.msra.mxu0 0
        %2343 = vmatprep.subr.bf16.mxu0 0
        %2344 = vmatpush1.bf16.msra.mxu0 0
        %2345 = vmatprep.subr.bf16.mxu0 0
        %2346 = vmatpush1.bf16.msra.mxu0 0
        %2347 = vmatprep.subr.bf16.mxu0 0
        %2348 = vmatpush1.bf16.msra.mxu0 0
        %2349 = vmatprep.mubr.bf16.mxu0 0
        %2350 = vmatmul.mubr.bf16.gmra.mrb[0].mxu0 %v2245
        %v2351 = vpop.f32.mrb[0].mxu0
        %v2352 = vadd.f32 %v2267, %v2351
        %v2353 = vpop.f32.mrb[0].mxu0
        %v2354 = vpop.f32.mrb[0].mxu0
        %v2355 = vpop.f32.mrb[0].mxu0
        %2356 = vdwg.mxu0
        %v2357 = vadd.f32 %v2139, %v2352
        %2358 = vst.msk [vmem:[%s789] sm:$0xff] %vm1297, %v2357
        %s2359 = sand.u32 %s426, 1
        %s2360 = scalar_lea.sflag [#allocation7], %s2359
        %s2361 = sand.u32 %s426, 1
        %s2362 = smul.addr %s2361, 8
        %s2363 = scalar_lea.vmem [#allocation32], %s2362
        // Predicated region
        $region161: #{tpu_custom_call.1} parent=87 // pred_check
          %p2364 = pneg %p436
        $region162: #{tpu_custom_call.1} parent=87 // pred_check_branch
          %2366 = sbr.rel (%p2364) target = $region164
        $region163: #{tpu_custom_call.1} parent=87 // pred_region
          %s2368 = ssub.s32 128, 128
          %2369 = vsyncadd %s2360, %s2368
          %s2370 = sadd.s32 %s47, %s46
          %s2371 = smul.addr %s2370, 128
          %s2372 = scalar_lea.hbm %s17, %s2371
          %s2374 = sshll.u32 %s2363, 4
          %s2375 = int_to_ptr.vmem [resolvable:$true] %s2374
          %2377 = dma.vmem_to_hbm [thread:$0]  %s2375, 128, %s2372, %s2360
        $region164: #{tpu_custom_call.1} parent=87 // pred_fallthru
          _
      $region88: #{tpu_custom_call.1} parent=5 // pred_fallthru
        _
      %p2378 = scmp.le.s32.totalorder 2, %s37
      // Predicated region
      $region165: #{tpu_custom_call.1} parent=5 // pred_check
        %p2379 = pneg %p2378
      $region166: #{tpu_custom_call.1} parent=5 // pred_check_branch
        %2381 = sbr.rel (%p2379) target = $region168
      $region167: #{tpu_custom_call.1} parent=5 // pred_region
        %s2382 = ssub.s32 %s37, 2
        // Predicated region
        $region169: #{tpu_custom_call.1} parent=167 // pred_check
          %p2383 = pneg %p442
        $region170: #{tpu_custom_call.1} parent=167 // pred_check_branch
          %2385 = sbr.rel (%p2383) target = $region172
        $region171: #{tpu_custom_call.1} parent=167 // pred_region
          %s2386 = sand.u32 %s427, 1
          %s2387 = scalar_lea.sflag [#allocation7], %s2386
          %s2388 = sand.u32 %s427, 1
          %s2389 = smul.addr %s2388, 8
          %s2390 = scalar_lea.vmem [#allocation32], %s2389
          %2391 = dma.done %s2387, 128
        $region172: #{tpu_custom_call.1} parent=167 // pred_fallthru
          _
      $region168: #{tpu_custom_call.1} parent=5 // pred_fallthru
        _
    $region6: #{tpu_custom_call.1} parent=1 // loop_footer
      %s41 = sadd.s32 1, %s37
    $region7: #{tpu_custom_call.1} parent=1 // loop_footer_branch
      %36 = sbr.rel target = $region3
    $region8: #{tpu_custom_call.1} parent=1 // loop_exit
      _
    %2392 = vsyncpa [#allocation6], 1
    %s2393 = scalar_lea.sflag [#allocation6], 1
    %2394 = vsyncpa %s2393, 1
    %2395 = vsyncpa [#allocation9], 1
    %2396 = vsyncpa [#allocation12], 1
    %2397 = vsyncpa [#allocation15], 1
    %2398 = vsyncpa [#allocation18], 1
    %2399 = vsyncpa [#allocation21], 1
    %2400 = vsyncpa [#allocation24], 1
    %2401 = vsyncpa [#allocation27], 1
    %2402 = vsyncpa [#allocation30], 1
    %2403 = vsyncpa [#allocation7], 1
    %s2404 = scalar_lea.sflag [#allocation7], 1
    %2405 = vsyncpa %s2404, 1

// kernel: tpu_custom_call.1
$region0: #{tpu_custom_call.1}
  #allocation0 [shape = 'u32[]', space=smem, size = 0x4, offset = 0x4, fixed_abs, tag = 'smem constant byte address 0x4 - core index']
  #allocation1 [shape = 'u32[144,128]{1,0:T(1,128)}', space=vmem, size = 0x12000, scoped, tag = 'internal scratch']
  #allocation2 [shape = 'bf16[8,32]{1,0:T(8,128)(2,1)}', space=vmem, size = 0x800, scoped, tag = 'scratch operand']
  #allocation3 [shape = 'bf16[4,8,8]{2,1,0:T(8,128)(2,1)}', space=vmem, size = 0x2000, scoped, tag = 'scratch operand']
  #allocation4 [shape = 'bf16[4,8,8]{2,1,0:T(8,128)(2,1)}', space=vmem, size = 0x2000, scoped, tag = 'scratch operand']
  %s0 = inlined_call_operand.hbm [shape: f32[2,8,32], index: 0, kind: input, shape index: {}]
  %s1 = inlined_call_operand.hbm [shape: f32[1,32], index: 1, kind: input, shape index: {}]
  %s2 = inlined_call_operand.hbm [shape: f32[1,32], index: 2, kind: input, shape index: {}]
  %s3 = inlined_call_operand.hbm [shape: bf16[32,32], index: 3, kind: input, shape index: {}]
  %s4 = inlined_call_operand.hbm [shape: f32[1,32], index: 4, kind: input, shape index: {}]
  %s5 = inlined_call_operand.hbm [shape: bf16[32,32], index: 5, kind: input, shape index: {}]
  %s6 = inlined_call_operand.hbm [shape: f32[1,32], index: 6, kind: input, shape index: {}]
  %s7 = inlined_call_operand.hbm [shape: bf16[32,32], index: 7, kind: input, shape index: {}]
  %s8 = inlined_call_operand.hbm [shape: f32[1,32], index: 8, kind: input, shape index: {}]
  %s9 = inlined_call_operand.hbm [shape: bf16[32,32], index: 9, kind: input, shape index: {}]
  %s10 = inlined_call_operand.hbm [shape: f32[1,32], index: 10, kind: input, shape index: {}]
  %s11 = inlined_call_operand.hbm [shape: f32[1,32], index: 11, kind: input, shape index: {}]
  %s12 = inlined_call_operand.hbm [shape: f32[1,32], index: 12, kind: input, shape index: {}]
  %s13 = inlined_call_operand.hbm [shape: bf16[32,128], index: 13, kind: input, shape index: {}]
  %s14 = inlined_call_operand.hbm [shape: f32[1,128], index: 14, kind: input, shape index: {}]
  %s15 = inlined_call_operand.hbm [shape: bf16[128,32], index: 15, kind: input, shape index: {}]
  %s16 = inlined_call_operand.hbm [shape: f32[1,32], index: 16, kind: input, shape index: {}]
  %s17 = inlined_call_operand.hbm [shape: f32[2,8,32], index: 17, kind: output, shape index: {}]
  %s18 = sld [smem:[#allocation0]]
  $region173: #{tpu_custom_call.1} parent=0
    _
  %s20 = ssub.s32 1, %s18
  %s21 = scalar_select 0, %s20, %s18
  $region1: #{tpu_custom_call.1} parent=0
    #allocation5 [shape = 'u8[8192]{0}', space=vmem, size = 0x2000, scoped, tag = 'input window, operand 0']
    #allocation6 [shape = 's32[2]{0}', space=sflag, size = 0x8, scoped, tag = 'scoped memory for tpu_custom_call.1']
    #allocation7 [shape = 's32[2]{0}', space=sflag, size = 0x8, scoped, tag = 'scoped memory for tpu_custom_call.1']
    #allocation8 [shape = 'u8[512]{0}', space=vmem, size = 0x400, scoped, tag = 'input window, operand 1, single buffered']
    #allocation9 [shape = 's32[1]{0}', space=sflag, size = 0x4, scoped, tag = 'scoped memory for tpu_custom_call.1']
    #allocation10 [shape = 'u8[512]{0}', space=vmem, size = 0x400, scoped, tag = 'input window, operand 2, single buffered']
    #allocation11 [shape = 'u8[8192]{0}', space=vmem, size = 0x2000, scoped, tag = 'input window, operand 3, single buffered']
    #allocation12 [shape = 's32[1]{0}', space=sflag, size = 0x4, scoped, tag = 'scoped memory for tpu_custom_call.1']
    #allocation13 [shape = 'u8[512]{0}', space=vmem, size = 0x400, scoped, tag = 'input window, operand 4, single buffered']
    #allocation14 [shape = 'u8[8192]{0}', space=vmem, size = 0x2000, scoped, tag = 'input window, operand 5, single buffered']
    #allocation15 [shape = 's32[1]{0}', space=sflag, size = 0x4, scoped, tag = 'scoped memory for tpu_custom_call.1']
    #allocation16 [shape = 'u8[512]{0}', space=vmem, size = 0x400, scoped, tag = 'input window, operand 6, single buffered']
    #allocation17 [shape = 'u8[8192]{0}', space=vmem, size = 0x2000, scoped, tag = 'input window, operand 7, single buffered']
    #allocation18 [shape = 's32[1]{0}', space=sflag, size = 0x4, scoped, tag = 'scoped memory for tpu_custom_call.1']
    #allocation19 [shape = 'u8[512]{0}', space=vmem, size = 0x400, scoped, tag = 'input window, operand 8, single buffered']
    #allocation20 [shape = 'u8[8192]{0}', space=vmem, size = 0x2000, scoped, tag = 'input window, operand 9, single buffered']
    #allocation21 [shape = 's32[1]{0}', space=sflag, size = 0x4, scoped, tag = 'scoped memory for tpu_custom_call.1']
    #allocation22 [shape = 'u8[512]{0}', space=vmem, size = 0x400, scoped, tag = 'input window, operand 10, single buffered']
    #allocation23 [shape = 'u8[512]{0}', space=vmem, size = 0x400, scoped, tag = 'input window, operand 11, single buffered']
    #allocation24 [shape = 's32[1]{0}', space=sflag, size = 0x4, scoped, tag = 'scoped memory for tpu_custom_call.1']
    #allocation25 [shape = 'u8[512]{0}', space=vmem, size = 0x400, scoped, tag = 'input window, operand 12, single buffered']
    #allocation26 [shape = 'u8[8192]{0}', space=vmem, size = 0x2000, scoped, tag = 'input window, operand 13, single buffered']
    #allocation27 [shape = 's32[1]{0}', space=sflag, size = 0x4, scoped, tag = 'scoped memory for tpu_custom_call.1']
    #allocation28 [shape = 'u8[512]{0}', space=vmem, size = 0x400, scoped, tag = 'input window, operand 14, single buffered']
    #allocation29 [shape = 'u8[32768]{0}', space=vmem, size = 0x8000, scoped, tag = 'input window, operand 15, single buffered']
    #allocation30 [shape = 's32[1]{0}', space=sflag, size = 0x4, scoped, tag = 'scoped memory for tpu_custom_call.1']
    #allocation31 [shape = 'u8[512]{0}', space=vmem, size = 0x400, scoped, tag = 'input window, operand 16, single buffered']
    #allocation32 [shape = 'u8[8192]{0}', space=vmem, size = 0x2000, scoped, tag = 'output window, operand 0']
    %22 = vsyncpa [#allocation6], 0
    %s23 = scalar_lea.sflag [#allocation6], 1
    %24 = vsyncpa %s23, 0
    %25 = vsyncpa [#allocation9], 0
    %26 = vsyncpa [#allocation12], 0
    %27 = vsyncpa [#allocation15], 0
    %28 = vsyncpa [#allocation18], 0
    %29 = vsyncpa [#allocation21], 0
    %30 = vsyncpa [#allocation24], 0
    %31 = vsyncpa [#allocation27], 0
    %32 = vsyncpa [#allocation30], 0
    %33 = vsyncpa [#allocation7], 0
    %s34 = scalar_lea.sflag [#allocation7], 1
    %35 = vsyncpa %s34, 0
    loop: start=0, step=1, limit=4
    $region2: #{tpu_custom_call.1} parent=1 // loop_pre_header
      _
    $region3: #{tpu_custom_call.1} parent=1 // loop_header
      %s37 = sphi 0, %s41
      %p38 = scmp.ge.s32.totalorder %s37, 4
      %s44 = sphi 0, %s56
      %s45 = sphi 0, %s52
      %s46 = sphi 0, %s44
      %s47 = sphi 0, %s45
      %s48 = sphi 0, %s46
      %s49 = sphi 0, %s47
      %s59 = sphi 0, %s61
      %s62 = sphi 0, %s59
      %s63 = sphi 0, %s62
      %s79 = sphi 0, %s63
      %s83 = sphi 0, %s83
      %s85 = sphi 0, %s83
      %s86 = sphi 0, %s85
      %s100 = sphi 0, %s86
      %s104 = sphi 0, %s104
      %s106 = sphi 0, %s104
      %s107 = sphi 0, %s106
      %s121 = sphi 0, %s107
      %s125 = sphi 0, %s125
      %s127 = sphi 0, %s125
      %s128 = sphi 0, %s127
      %s142 = sphi 0, %s128
      %s146 = sphi 0, %s146
      %s148 = sphi 0, %s146
      %s149 = sphi 0, %s148
      %s163 = sphi 0, %s149
      %s167 = sphi 0, %s167
      %s169 = sphi 0, %s167
      %s170 = sphi 0, %s169
      %s184 = sphi 0, %s170
      %s188 = sphi 0, %s188
      %s190 = sphi 0, %s188
      %s191 = sphi 0, %s190
      %s205 = sphi 0, %s191
      %s209 = sphi 0, %s209
      %s211 = sphi 0, %s209
      %s212 = sphi 0, %s211
      %s226 = sphi 0, %s212
      %s230 = sphi 0, %s230
      %s232 = sphi 0, %s230
      %s233 = sphi 0, %s232
      %s247 = sphi 0, %s233
      %s251 = sphi 0, %s251
      %s253 = sphi 0, %s251
      %s254 = sphi 0, %s253
      %s268 = sphi 0, %s254
      %s272 = sphi 0, %s272
      %s274 = sphi 0, %s272
      %s275 = sphi 0, %s274
      %s289 = sphi 0, %s275
      %s293 = sphi 0, %s293
      %s295 = sphi 0, %s293
      %s296 = sphi 0, %s295
      %s310 = sphi 0, %s296
      %s314 = sphi 0, %s314
      %s316 = sphi 0, %s314
      %s317 = sphi 0, %s316
      %s331 = sphi 0, %s317
      %s335 = sphi 0, %s335
      %s337 = sphi 0, %s335
      %s338 = sphi 0, %s337
      %s352 = sphi 0, %s338
      %s356 = sphi 0, %s356
      %s358 = sphi 0, %s356
      %s359 = sphi 0, %s358
      %s373 = sphi 0, %s359
      %s377 = sphi 0, %s377
      %s379 = sphi 0, %s377
      %s380 = sphi 0, %s379
      %s394 = sphi 0, %s380
      %s398 = sphi 0, %s398
      %s400 = sphi 0, %s398
      %s401 = sphi 0, %s400
      %s415 = sphi 0, %s401
      %s423 = sphi 0, %s425
      %s426 = sphi 0, %s423
      %s427 = sphi 0, %s426
      %s443 = sphi 0, %s427
    $region4: #{tpu_custom_call.1} parent=1 // loop_header_branch
      %40 = sbr.rel (%p38) target = $region8
    $region5: #{tpu_custom_call.1} parent=1 // loop_body
      %s42 = ssub.s32 %s37, 1
      %s43 = ssub.s32 %s37, 2
      %s50 = sadd.s32 1, %s45
      %p51 = scmp.ge.s32.totalorder %s50, 1
      %s52 = scalar_select %p51, 0, %s50
      %s53 = sadd.s32 1, %s44
      %s54 = scalar_select %p51, %s53, %s44
      %p55 = scmp.ge.s32.totalorder %s54, 2
      %s56 = scalar_select %p55, 0, %s54
      %s57 = ssub.s32 %s44, %s56
      %p58 = scmp.eq.s32.totalorder %s57, 0
      %s60 = sadd.s32 %s59, 1
      %s61 = scalar_select %p58, %s59, %s60
      %p64 = pneg %p58
      %p65 = scmp.eq.s32.totalorder %s37, 1
      %p66 = por %p64, %p65
      %p67 = scmp.ne.s32.totalorder %s59, %s62
      %p68 = scmp.eq.s32.totalorder %s37, 0
      %p69 = por %p67, %p68
      %p70 = scmp.ne.s32.totalorder %s59, %s62
      %p71 = scmp.eq.s32.totalorder %s42, 1
      %p72 = por %p70, %p71
      %p73 = scmp.ne.s32.totalorder %s62, %s63
      %p74 = scmp.eq.s32.totalorder %s42, 0
      %p75 = por %p73, %p74
      %p76 = scmp.ne.s32.totalorder %s62, %s63
      %p77 = scmp.eq.s32.totalorder %s43, 1
      %p78 = por %p76, %p77
      %p80 = scmp.ne.s32.totalorder %s63, %s79
      %p81 = scmp.eq.s32.totalorder %s43, 0
      %p82 = por %p80, %p81
      %s84 = sadd.s32 %s83, 1
      %p87 = scmp.eq.s32.totalorder %s37, 1
      %p88 = scmp.ne.s32.totalorder %s83, %s85
      %p89 = scmp.eq.s32.totalorder %s37, 0
      %p90 = por %p88, %p89
      %p91 = scmp.ne.s32.totalorder %s83, %s85
      %p92 = scmp.eq.s32.totalorder %s42, 1
      %p93 = por %p91, %p92
      %p94 = scmp.ne.s32.totalorder %s85, %s86
      %p95 = scmp.eq.s32.totalorder %s42, 0
      %p96 = por %p94, %p95
      %p97 = scmp.ne.s32.totalorder %s85, %s86
      %p98 = scmp.eq.s32.totalorder %s43, 1
      %p99 = por %p97, %p98
      %p101 = scmp.ne.s32.totalorder %s86, %s100
      %p102 = scmp.eq.s32.totalorder %s43, 0
      %p103 = por %p101, %p102
      %s105 = sadd.s32 %s104, 1
      %p108 = scmp.eq.s32.totalorder %s37, 1
      %p109 = scmp.ne.s32.totalorder %s104, %s106
      %p110 = scmp.eq.s32.totalorder %s37, 0
      %p111 = por %p109, %p110
      %p112 = scmp.ne.s32.totalorder %s104, %s106
      %p113 = scmp.eq.s32.totalorder %s42, 1
      %p114 = por %p112, %p113
      %p115 = scmp.ne.s32.totalorder %s106, %s107
      %p116 = scmp.eq.s32.totalorder %s42, 0
      %p117 = por %p115, %p116
      %p118 = scmp.ne.s32.totalorder %s106, %s107
      %p119 = scmp.eq.s32.totalorder %s43, 1
      %p120 = por %p118, %p119
      %p122 = scmp.ne.s32.totalorder %s107, %s121
      %p123 = scmp.eq.s32.totalorder %s43, 0
      %p124 = por %p122, %p123
      %s126 = sadd.s32 %s125, 1
      %p129 = scmp.eq.s32.totalorder %s37, 1
      %p130 = scmp.ne.s32.totalorder %s125, %s127
      %p131 = scmp.eq.s32.totalorder %s37, 0
      %p132 = por %p130, %p131
      %p133 = scmp.ne.s32.totalorder %s125, %s127
      %p134 = scmp.eq.s32.totalorder %s42, 1
      %p135 = por %p133, %p134
      %p136 = scmp.ne.s32.totalorder %s127, %s128
      %p137 = scmp.eq.s32.totalorder %s42, 0
      %p138 = por %p136, %p137
      %p139 = scmp.ne.s32.totalorder %s127, %s128
      %p140 = scmp.eq.s32.totalorder %s43, 1
      %p141 = por %p139, %p140
      %p143 = scmp.ne.s32.totalorder %s128, %s142
      %p144 = scmp.eq.s32.totalorder %s43, 0
      %p145 = por %p143, %p144
      %s147 = sadd.s32 %s146, 1
      %p150 = scmp.eq.s32.totalorder %s37, 1
      %p151 = scmp.ne.s32.totalorder %s146, %s148
      %p152 = scmp.eq.s32.totalorder %s37, 0
      %p153 = por %p151, %p152
      %p154 = scmp.ne.s32.totalorder %s146, %s148
      %p155 = scmp.eq.s32.totalorder %s42, 1
      %p156 = por %p154, %p155
      %p157 = scmp.ne.s32.totalorder %s148, %s149
      %p158 = scmp.eq.s32.totalorder %s42, 0
      %p159 = por %p157, %p158
      %p160 = scmp.ne.s32.totalorder %s148, %s149
      %p161 = scmp.eq.s32.totalorder %s43, 1
      %p162 = por %p160, %p161
      %p164 = scmp.ne.s32.totalorder %s149, %s163
      %p165 = scmp.eq.s32.totalorder %s43, 0
      %p166 = por %p164, %p165
      %s168 = sadd.s32 %s167, 1
      %p171 = scmp.eq.s32.totalorder %s37, 1
      %p172 = scmp.ne.s32.totalorder %s167, %s169
      %p173 = scmp.eq.s32.totalorder %s37, 0
      %p174 = por %p172, %p173
      %p175 = scmp.ne.s32.totalorder %s167, %s169
      %p176 = scmp.eq.s32.totalorder %s42, 1
      %p177 = por %p175, %p176
      %p178 = scmp.ne.s32.totalorder %s169, %s170
      %p179 = scmp.eq.s32.totalorder %s42, 0
      %p180 = por %p178, %p179
      %p181 = scmp.ne.s32.totalorder %s169, %s170
      %p182 = scmp.eq.s32.totalorder %s43, 1
      %p183 = por %p181, %p182
      %p185 = scmp.ne.s32.totalorder %s170, %s184
      %p186 = scmp.eq.s32.totalorder %s43, 0
      %p187 = por %p185, %p186
      %s189 = sadd.s32 %s188, 1
      %p192 = scmp.eq.s32.totalorder %s37, 1
      %p193 = scmp.ne.s32.totalorder %s188, %s190
      %p194 = scmp.eq.s32.totalorder %s37, 0
      %p195 = por %p193, %p194
      %p196 = scmp.ne.s32.totalorder %s188, %s190
      %p197 = scmp.eq.s32.totalorder %s42, 1
      %p198 = por %p196, %p197
      %p199 = scmp.ne.s32.totalorder %s190, %s191
      %p200 = scmp.eq.s32.totalorder %s42, 0
      %p201 = por %p199, %p200
      %p202 = scmp.ne.s32.totalorder %s190, %s191
      %p203 = scmp.eq.s32.totalorder %s43, 1
      %p204 = por %p202, %p203
      %p206 = scmp.ne.s32.totalorder %s191, %s205
      %p207 = scmp.eq.s32.totalorder %s43, 0
      %p208 = por %p206, %p207
      %s210 = sadd.s32 %s209, 1
      %p213 = scmp.eq.s32.totalorder %s37, 1
      %p214 = scmp.ne.s32.totalorder %s209, %s211
      %p215 = scmp.eq.s32.totalorder %s37, 0
      %p216 = por %p214, %p215
      %p217 = scmp.ne.s32.totalorder %s209, %s211
      %p218 = scmp.eq.s32.totalorder %s42, 1
      %p219 = por %p217, %p218
      %p220 = scmp.ne.s32.totalorder %s211, %s212
      %p221 = scmp.eq.s32.totalorder %s42, 0
      %p222 = por %p220, %p221
      %p223 = scmp.ne.s32.totalorder %s211, %s212
      %p224 = scmp.eq.s32.totalorder %s43, 1
      %p225 = por %p223, %p224
      %p227 = scmp.ne.s32.totalorder %s212, %s226
      %p228 = scmp.eq.s32.totalorder %s43, 0
      %p229 = por %p227, %p228
      %s231 = sadd.s32 %s230, 1
      %p234 = scmp.eq.s32.totalorder %s37, 1
      %p235 = scmp.ne.s32.totalorder %s230, %s232
      %p236 = scmp.eq.s32.totalorder %s37, 0
      %p237 = por %p235, %p236
      %p238 = scmp.ne.s32.totalorder %s230, %s232
      %p239 = scmp.eq.s32.totalorder %s42, 1
      %p240 = por %p238, %p239
      %p241 = scmp.ne.s32.totalorder %s232, %s233
      %p242 = scmp.eq.s32.totalorder %s42, 0
      %p243 = por %p241, %p242
      %p244 = scmp.ne.s32.totalorder %s232, %s233
      %p245 = scmp.eq.s32.totalorder %s43, 1
      %p246 = por %p244, %p245
      %p248 = scmp.ne.s32.totalorder %s233, %s247
      %p249 = scmp.eq.s32.totalorder %s43, 0
      %p250 = por %p248, %p249
      %s252 = sadd.s32 %s251, 1
      %p255 = scmp.eq.s32.totalorder %s37, 1
      %p256 = scmp.ne.s32.totalorder %s251, %s253
      %p257 = scmp.eq.s32.totalorder %s37, 0
      %p258 = por %p256, %p257
      %p259 = scmp.ne.s32.totalorder %s251, %s253
      %p260 = scmp.eq.s32.totalorder %s42, 1
      %p261 = por %p259, %p260
      %p262 = scmp.ne.s32.totalorder %s253, %s254
      %p263 = scmp.eq.s32.totalorder %s42, 0
      %p264 = por %p262, %p263
      %p265 = scmp.ne.s32.totalorder %s253, %s254
      %p266 = scmp.eq.s32.totalorder %s43, 1
      %p267 = por %p265, %p266
      %p269 = scmp.ne.s32.totalorder %s254, %s268
      %p270 = scmp.eq.s32.totalorder %s43, 0
      %p271 = por %p269, %p270
      %s273 = sadd.s32 %s272, 1
      %p276 = scmp.eq.s32.totalorder %s37, 1
      %p277 = scmp.ne.s32.totalorder %s272, %s274
      %p278 = scmp.eq.s32.totalorder %s37, 0
      %p279 = por %p277, %p278
      %p280 = scmp.ne.s32.totalorder %s272, %s274
      %p281 = scmp.eq.s32.totalorder %s42, 1
      %p282 = por %p280, %p281
      %p283 = scmp.ne.s32.totalorder %s274, %s275
      %p284 = scmp.eq.s32.totalorder %s42, 0
      %p285 = por %p283, %p284
      %p286 = scmp.ne.s32.totalorder %s274, %s275
      %p287 = scmp.eq.s32.totalorder %s43, 1
      %p288 = por %p286, %p287
      %p290 = scmp.ne.s32.totalorder %s275, %s289
      %p291 = scmp.eq.s32.totalorder %s43, 0
      %p292 = por %p290, %p291
      %s294 = sadd.s32 %s293, 1
      %p297 = scmp.eq.s32.totalorder %s37, 1
      %p298 = scmp.ne.s32.totalorder %s293, %s295
      %p299 = scmp.eq.s32.totalorder %s37, 0
      %p300 = por %p298, %p299
      %p301 = scmp.ne.s32.totalorder %s293, %s295
      %p302 = scmp.eq.s32.totalorder %s42, 1
      %p303 = por %p301, %p302
      %p304 = scmp.ne.s32.totalorder %s295, %s296
      %p305 = scmp.eq.s32.totalorder %s42, 0
      %p306 = por %p304, %p305
      %p307 = scmp.ne.s32.totalorder %s295, %s296
      %p308 = scmp.eq.s32.totalorder %s43, 1
      %p309 = por %p307, %p308
      %p311 = scmp.ne.s32.totalorder %s296, %s310
      %p312 = scmp.eq.s32.totalorder %s43, 0
      %p313 = por %p311, %p312
      %s315 = sadd.s32 %s314, 1
      %p318 = scmp.eq.s32.totalorder %s37, 1
      %p319 = scmp.ne.s32.totalorder %s314, %s316
      %p320 = scmp.eq.s32.totalorder %s37, 0
      %p321 = por %p319, %p320
      %p322 = scmp.ne.s32.totalorder %s314, %s316
      %p323 = scmp.eq.s32.totalorder %s42, 1
      %p324 = por %p322, %p323
      %p325 = scmp.ne.s32.totalorder %s316, %s317
      %p326 = scmp.eq.s32.totalorder %s42, 0
      %p327 = por %p325, %p326
      %p328 = scmp.ne.s32.totalorder %s316, %s317
      %p329 = scmp.eq.s32.totalorder %s43, 1
      %p330 = por %p328, %p329
      %p332 = scmp.ne.s32.totalorder %s317, %s331
      %p333 = scmp.eq.s32.totalorder %s43, 0
      %p334 = por %p332, %p333
      %s336 = sadd.s32 %s335, 1
      %p339 = scmp.eq.s32.totalorder %s37, 1
      %p340 = scmp.ne.s32.totalorder %s335, %s337
      %p341 = scmp.eq.s32.totalorder %s37, 0
      %p342 = por %p340, %p341
      %p343 = scmp.ne.s32.totalorder %s335, %s337
      %p344 = scmp.eq.s32.totalorder %s42, 1
      %p345 = por %p343, %p344
      %p346 = scmp.ne.s32.totalorder %s337, %s338
      %p347 = scmp.eq.s32.totalorder %s42, 0
      %p348 = por %p346, %p347
      %p349 = scmp.ne.s32.totalorder %s337, %s338
      %p350 = scmp.eq.s32.totalorder %s43, 1
      %p351 = por %p349, %p350
      %p353 = scmp.ne.s32.totalorder %s338, %s352
      %p354 = scmp.eq.s32.totalorder %s43, 0
      %p355 = por %p353, %p354
      %s357 = sadd.s32 %s356, 1
      %p360 = scmp.eq.s32.totalorder %s37, 1
      %p361 = scmp.ne.s32.totalorder %s356, %s358
      %p362 = scmp.eq.s32.totalorder %s37, 0
      %p363 = por %p361, %p362
      %p364 = scmp.ne.s32.totalorder %s356, %s358
      %p365 = scmp.eq.s32.totalorder %s42, 1
      %p366 = por %p364, %p365
      %p367 = scmp.ne.s32.totalorder %s358, %s359
      %p368 = scmp.eq.s32.totalorder %s42, 0
      %p369 = por %p367, %p368
      %p370 = scmp.ne.s32.totalorder %s358, %s359
      %p371 = scmp.eq.s32.totalorder %s43, 1
      %p372 = por %p370, %p371
      %p374 = scmp.ne.s32.totalorder %s359, %s373
      %p375 = scmp.eq.s32.totalorder %s43, 0
      %p376 = por %p374, %p375
      %s378 = sadd.s32 %s377, 1
      %p381 = scmp.eq.s32.totalorder %s37, 1
      %p382 = scmp.ne.s32.totalorder %s377, %s379
      %p383 = scmp.eq.s32.totalorder %s37, 0
      %p384 = por %p382, %p383
      %p385 = scmp.ne.s32.totalorder %s377, %s379
      %p386 = scmp.eq.s32.totalorder %s42, 1
      %p387 = por %p385, %p386
      %p388 = scmp.ne.s32.totalorder %s379, %s380
      %p389 = scmp.eq.s32.totalorder %s42, 0
      %p390 = por %p388, %p389
      %p391 = scmp.ne.s32.totalorder %s379, %s380
      %p392 = scmp.eq.s32.totalorder %s43, 1
      %p393 = por %p391, %p392
      %p395 = scmp.ne.s32.totalorder %s380, %s394
      %p396 = scmp.eq.s32.totalorder %s43, 0
      %p397 = por %p395, %p396
      %s399 = sadd.s32 %s398, 1
      %p402 = scmp.eq.s32.totalorder %s37, 1
      %p403 = scmp.ne.s32.totalorder %s398, %s400
      %p404 = scmp.eq.s32.totalorder %s37, 0
      %p405 = por %p403, %p404
      %p406 = scmp.ne.s32.totalorder %s398, %s400
      %p407 = scmp.eq.s32.totalorder %s42, 1
      %p408 = por %p406, %p407
      %p409 = scmp.ne.s32.totalorder %s400, %s401
      %p410 = scmp.eq.s32.totalorder %s42, 0
      %p411 = por %p409, %p410
      %p412 = scmp.ne.s32.totalorder %s400, %s401
      %p413 = scmp.eq.s32.totalorder %s43, 1
      %p414 = por %p412, %p413
      %p416 = scmp.ne.s32.totalorder %s401, %s415
      %p417 = scmp.eq.s32.totalorder %s43, 0
      %p418 = por %p416, %p417
      %s419 = ssub.s32 %s44, %s56
      %s420 = ssub.s32 %s45, %s52
      %s421 = sor.u32 %s419, %s420
      %p422 = scmp.eq.s32.totalorder %s421, 0
      %s424 = sadd.s32 %s423, 1
      %s425 = scalar_select %p422, %s423, %s424
      %p428 = pneg %p422
      %p429 = scmp.eq.s32.totalorder %s37, 1
      %p430 = por %p428, %p429
      %p431 = scmp.ne.s32.totalorder %s423, %s426
      %p432 = scmp.eq.s32.totalorder %s37, 0
      %p433 = por %p431, %p432
      %p434 = scmp.ne.s32.totalorder %s423, %s426
      %p435 = scmp.eq.s32.totalorder %s42, 1
      %p436 = por %p434, %p435
      %p437 = scmp.ne.s32.totalorder %s426, %s427
      %p438 = scmp.eq.s32.totalorder %s42, 0
      %p439 = por %p437, %p438
      %p440 = scmp.ne.s32.totalorder %s426, %s427
      %p441 = scmp.eq.s32.totalorder %s43, 1
      %p442 = por %p440, %p441
      %p444 = scmp.ne.s32.totalorder %s427, %s443
      %p445 = scmp.eq.s32.totalorder %s43, 0
      %p446 = por %p444, %p445
      %p447 = scmp.le.s32.totalorder 1, %s37
      %p448 = scmp.lt.s32.totalorder %s37, 3
      %p449 = pnand %p447, %p448
      %p450 = pneg %p449
      // Predicated region
      $region9: #{tpu_custom_call.1} parent=5 // pred_check
        _
      $region10: #{tpu_custom_call.1} parent=5 // pred_check_branch
        %452 = sbr.rel (%p449) target = $region12
      $region11: #{tpu_custom_call.1} parent=5 // pred_region
        %s453 = ssub.s32 %s37, 1
        // Predicated region
        $region13: #{tpu_custom_call.1} parent=11 // pred_check
          %p454 = pneg %p96
        $region14: #{tpu_custom_call.1} parent=11 // pred_check_branch
          %456 = sbr.rel (%p454) target = $region16
        $region15: #{tpu_custom_call.1} parent=11 // pred_region
          %s458 = ssub.s32 16, 16
          %459 = vsyncadd [#allocation9], %s458
          %s461 = sshll.u32 [#allocation8], 4
          %s462 = int_to_ptr.vmem [resolvable:$true] %s461
          %464 = dma.hbm_to_vmem [thread:$0]  %s1, 16, %s462, [#allocation9]
        $region16: #{tpu_custom_call.1} parent=11 // pred_fallthru
          _
        // Predicated region
        $region17: #{tpu_custom_call.1} parent=11 // pred_check
          %p465 = pneg %p117
        $region18: #{tpu_custom_call.1} parent=11 // pred_check_branch
          %467 = sbr.rel (%p465) target = $region20
        $region19: #{tpu_custom_call.1} parent=11 // pred_region
          %s469 = ssub.s32 16, 16
          %470 = vsyncadd [#allocation9], %s469
          %s472 = sshll.u32 [#allocation10], 4
          %s473 = int_to_ptr.vmem [resolvable:$true] %s472
          %475 = dma.hbm_to_vmem [thread:$0]  %s2, 16, %s473, [#allocation9]
        $region20: #{tpu_custom_call.1} parent=11 // pred_fallthru
          _
        // Predicated region
        $region21: #{tpu_custom_call.1} parent=11 // pred_check
          %p476 = pneg %p138
        $region22: #{tpu_custom_call.1} parent=11 // pred_check_branch
          %478 = sbr.rel (%p476) target = $region24
        $region23: #{tpu_custom_call.1} parent=11 // pred_region
          %s480 = ssub.s32 256, 256
          %481 = vsyncadd [#allocation12], %s480
          %s482 = sshll.u32 [#allocation11], 4
          %s483 = int_to_ptr.vmem [resolvable:$true] %s482
          %488 = dma.hbm_to_vmem [thread:$0]  %s3, 256, %s483, [#allocation12], 64, 64, 4
        $region24: #{tpu_custom_call.1} parent=11 // pred_fallthru
          _
        // Predicated region
        $region25: #{tpu_custom_call.1} parent=11 // pred_check
          %p489 = pneg %p159
        $region26: #{tpu_custom_call.1} parent=11 // pred_check_branch
          %491 = sbr.rel (%p489) target = $region28
        $region27: #{tpu_custom_call.1} parent=11 // pred_region
          %s493 = ssub.s32 16, 16
          %494 = vsyncadd [#allocation12], %s493
          %s496 = sshll.u32 [#allocation13], 4
          %s497 = int_to_ptr.vmem [resolvable:$true] %s496
          %499 = dma.hbm_to_vmem [thread:$0]  %s4, 16, %s497, [#allocation12]
        $region28: #{tpu_custom_call.1} parent=11 // pred_fallthru
          _
        // Predicated region
        $region29: #{tpu_custom_call.1} parent=11 // pred_check
          %p500 = pneg %p180
        $region30: #{tpu_custom_call.1} parent=11 // pred_check_branch
          %502 = sbr.rel (%p500) target = $region32
        $region31: #{tpu_custom_call.1} parent=11 // pred_region
          %s504 = ssub.s32 256, 256
          %505 = vsyncadd [#allocation15], %s504
          %s506 = sshll.u32 [#allocation14], 4
          %s507 = int_to_ptr.vmem [resolvable:$true] %s506
          %512 = dma.hbm_to_vmem [thread:$0]  %s5, 256, %s507, [#allocation15], 64, 64, 4
        $region32: #{tpu_custom_call.1} parent=11 // pred_fallthru
          _
        // Predicated region
        $region33: #{tpu_custom_call.1} parent=11 // pred_check
          %p513 = pneg %p201
        $region34: #{tpu_custom_call.1} parent=11 // pred_check_branch
          %515 = sbr.rel (%p513) target = $region36
        $region35: #{tpu_custom_call.1} parent=11 // pred_region
          %s517 = ssub.s32 16, 16
          %518 = vsyncadd [#allocation15], %s517
          %s520 = sshll.u32 [#allocation16], 4
          %s521 = int_to_ptr.vmem [resolvable:$true] %s520
          %523 = dma.hbm_to_vmem [thread:$0]  %s6, 16, %s521, [#allocation15]
        $region36: #{tpu_custom_call.1} parent=11 // pred_fallthru
          _
        // Predicated region
        $region37: #{tpu_custom_call.1} parent=11 // pred_check
          %p524 = pneg %p222
        $region38: #{tpu_custom_call.1} parent=11 // pred_check_branch
          %526 = sbr.rel (%p524) target = $region40
        $region39: #{tpu_custom_call.1} parent=11 // pred_region
          %s528 = ssub.s32 256, 256
          %529 = vsyncadd [#allocation18], %s528
          %s530 = sshll.u32 [#allocation17], 4
          %s531 = int_to_ptr.vmem [resolvable:$true] %s530
          %536 = dma.hbm_to_vmem [thread:$0]  %s7, 256, %s531, [#allocation18], 64, 64, 4
        $region40: #{tpu_custom_call.1} parent=11 // pred_fallthru
          _
        // Predicated region
        $region41: #{tpu_custom_call.1} parent=11 // pred_check
          %p537 = pneg %p243
        $region42: #{tpu_custom_call.1} parent=11 // pred_check_branch
          %539 = sbr.rel (%p537) target = $region44
        $region43: #{tpu_custom_call.1} parent=11 // pred_region
          %s541 = ssub.s32 16, 16
          %542 = vsyncadd [#allocation18], %s541
          %s544 = sshll.u32 [#allocation19], 4
          %s545 = int_to_ptr.vmem [resolvable:$true] %s544
          %547 = dma.hbm_to_vmem [thread:$0]  %s8, 16, %s545, [#allocation18]
        $region44: #{tpu_custom_call.1} parent=11 // pred_fallthru
          _
        // Predicated region
        $region45: #{tpu_custom_call.1} parent=11 // pred_check
          %p548 = pneg %p264
        $region46: #{tpu_custom_call.1} parent=11 // pred_check_branch
          %550 = sbr.rel (%p548) target = $region48
        $region47: #{tpu_custom_call.1} parent=11 // pred_region
          %s552 = ssub.s32 256, 256
          %553 = vsyncadd [#allocation21], %s552
          %s554 = sshll.u32 [#allocation20], 4
          %s555 = int_to_ptr.vmem [resolvable:$true] %s554
          %560 = dma.hbm_to_vmem [thread:$0]  %s9, 256, %s555, [#allocation21], 64, 64, 4
        $region48: #{tpu_custom_call.1} parent=11 // pred_fallthru
          _
        // Predicated region
        $region49: #{tpu_custom_call.1} parent=11 // pred_check
          %p561 = pneg %p285
        $region50: #{tpu_custom_call.1} parent=11 // pred_check_branch
          %563 = sbr.rel (%p561) target = $region52
        $region51: #{tpu_custom_call.1} parent=11 // pred_region
          %s565 = ssub.s32 16, 16
          %566 = vsyncadd [#allocation21], %s565
          %s568 = sshll.u32 [#allocation22], 4
          %s569 = int_to_ptr.vmem [resolvable:$true] %s568
          %571 = dma.hbm_to_vmem [thread:$0]  %s10, 16, %s569, [#allocation21]
        $region52: #{tpu_custom_call.1} parent=11 // pred_fallthru
          _
        // Predicated region
        $region53: #{tpu_custom_call.1} parent=11 // pred_check
          %p572 = pneg %p306
        $region54: #{tpu_custom_call.1} parent=11 // pred_check_branch
          %574 = sbr.rel (%p572) target = $region56
        $region55: #{tpu_custom_call.1} parent=11 // pred_region
          %s576 = ssub.s32 16, 16
          %577 = vsyncadd [#allocation24], %s576
          %s579 = sshll.u32 [#allocation23], 4
          %s580 = int_to_ptr.vmem [resolvable:$true] %s579
          %582 = dma.hbm_to_vmem [thread:$0]  %s11, 16, %s580, [#allocation24]
        $region56: #{tpu_custom_call.1} parent=11 // pred_fallthru
          _
        // Predicated region
        $region57: #{tpu_custom_call.1} parent=11 // pred_check
          %p583 = pneg %p327
        $region58: #{tpu_custom_call.1} parent=11 // pred_check_branch
          %585 = sbr.rel (%p583) target = $region60
        $region59: #{tpu_custom_call.1} parent=11 // pred_region
          %s587 = ssub.s32 16, 16
          %588 = vsyncadd [#allocation24], %s587
          %s590 = sshll.u32 [#allocation25], 4
          %s591 = int_to_ptr.vmem [resolvable:$true] %s590
          %593 = dma.hbm_to_vmem [thread:$0]  %s12, 16, %s591, [#allocation24]
        $region60: #{tpu_custom_call.1} parent=11 // pred_fallthru
          _
        // Predicated region
        $region61: #{tpu_custom_call.1} parent=11 // pred_check
          %p594 = pneg %p348
        $region62: #{tpu_custom_call.1} parent=11 // pred_check_branch
          %596 = sbr.rel (%p594) target = $region64
        $region63: #{tpu_custom_call.1} parent=11 // pred_region
          %s598 = ssub.s32 256, 256
          %599 = vsyncadd [#allocation27], %s598
          %s600 = sshll.u32 [#allocation26], 4
          %s601 = int_to_ptr.vmem [resolvable:$true] %s600
          %606 = dma.hbm_to_vmem [thread:$0]  %s13, 256, %s601, [#allocation27], 64, 64, 4
        $region64: #{tpu_custom_call.1} parent=11 // pred_fallthru
          _
        // Predicated region
        $region65: #{tpu_custom_call.1} parent=11 // pred_check
          %p607 = pneg %p369
        $region66: #{tpu_custom_call.1} parent=11 // pred_check_branch
          %609 = sbr.rel (%p607) target = $region68
        $region67: #{tpu_custom_call.1} parent=11 // pred_region
          %s611 = ssub.s32 16, 16
          %612 = vsyncadd [#allocation27], %s611
          %s614 = sshll.u32 [#allocation28], 4
          %s615 = int_to_ptr.vmem [resolvable:$true] %s614
          %617 = dma.hbm_to_vmem [thread:$0]  %s14, 16, %s615, [#allocation27]
        $region68: #{tpu_custom_call.1} parent=11 // pred_fallthru
          _
        // Predicated region
        $region69: #{tpu_custom_call.1} parent=11 // pred_check
          %p618 = pneg %p390
        $region70: #{tpu_custom_call.1} parent=11 // pred_check_branch
          %620 = sbr.rel (%p618) target = $region72
        $region71: #{tpu_custom_call.1} parent=11 // pred_region
          %s622 = ssub.s32 1024, 1024
          %623 = vsyncadd [#allocation30], %s622
          %s624 = sshll.u32 [#allocation29], 4
          %s625 = int_to_ptr.vmem [resolvable:$true] %s624
          %630 = dma.hbm_to_vmem [thread:$0]  %s15, 1024, %s625, [#allocation30], 64, 64, 4
        $region72: #{tpu_custom_call.1} parent=11 // pred_fallthru
          _
        // Predicated region
        $region73: #{tpu_custom_call.1} parent=11 // pred_check
          %p631 = pneg %p411
        $region74: #{tpu_custom_call.1} parent=11 // pred_check_branch
          %633 = sbr.rel (%p631) target = $region76
        $region75: #{tpu_custom_call.1} parent=11 // pred_region
          %s635 = ssub.s32 16, 16
          %636 = vsyncadd [#allocation30], %s635
          %s638 = sshll.u32 [#allocation31], 4
          %s639 = int_to_ptr.vmem [resolvable:$true] %s638
          %641 = dma.hbm_to_vmem [thread:$0]  %s16, 16, %s639, [#allocation30]
        $region76: #{tpu_custom_call.1} parent=11 // pred_fallthru
          _
      $region12: #{tpu_custom_call.1} parent=5 // pred_fallthru
        _
      %p642 = scmp.lt.s32.totalorder %s37, 2
      // Predicated region
      $region77: #{tpu_custom_call.1} parent=5 // pred_check
        %p643 = pneg %p642
      $region78: #{tpu_custom_call.1} parent=5 // pred_check_branch
        %645 = sbr.rel (%p643) target = $region80
      $region79: #{tpu_custom_call.1} parent=5 // pred_region
        // Predicated region
        $region81: #{tpu_custom_call.1} parent=79 // pred_check
          %p646 = pneg %p69
        $region82: #{tpu_custom_call.1} parent=79 // pred_check_branch
          %648 = sbr.rel (%p646) target = $region84
        $region83: #{tpu_custom_call.1} parent=79 // pred_region
          %s649 = sand.u32 %s59, 1
          %s650 = scalar_lea.sflag [#allocation6], %s649
          %s651 = sand.u32 %s59, 1
          %s652 = smul.addr %s651, 8
          %s653 = scalar_lea.vmem [#allocation5], %s652
          %s655 = ssub.s32 128, 128
          %656 = vsyncadd %s650, %s655
          %s657 = smul.addr %s44, 128
          %s658 = scalar_lea.hbm %s0, %s657
          %s660 = sshll.u32 %s653, 4
          %s661 = int_to_ptr.vmem [resolvable:$true] %s660
          %663 = dma.hbm_to_vmem [thread:$0]  %s658, 128, %s661, %s650
        $region84: #{tpu_custom_call.1} parent=79 // pred_fallthru
          _
      $region80: #{tpu_custom_call.1} parent=5 // pred_fallthru
        _
      %p664 = scmp.le.s32.totalorder 1, %s37
      %p665 = scmp.lt.s32.totalorder %s37, 3
      %p666 = pnand %p664, %p665
      %p667 = pneg %p666
      // Predicated region
      $region85: #{tpu_custom_call.1} parent=5 // pred_check
        _
      $region86: #{tpu_custom_call.1} parent=5 // pred_check_branch
        %669 = sbr.rel (%p666) target = $region88
      $region87: #{tpu_custom_call.1} parent=5 // pred_region
        %s670 = ssub.s32 %s37, 1
        %s671 = sand.u32 %s62, 1
        %s672 = scalar_lea.sflag [#allocation6], %s671
        %s673 = sand.u32 %s62, 1
        %s674 = smul.addr %s673, 8
        %s675 = scalar_lea.vmem [#allocation5], %s674
        // Predicated region
        $region89: #{tpu_custom_call.1} parent=87 // pred_check
          %p676 = pneg %p75
        $region90: #{tpu_custom_call.1} parent=87 // pred_check_branch
          %678 = sbr.rel (%p676) target = $region92
        $region91: #{tpu_custom_call.1} parent=87 // pred_region
          %679 = dma.done %s672, 128
        $region92: #{tpu_custom_call.1} parent=87 // pred_fallthru
          _
        // Predicated region
        $region93: #{tpu_custom_call.1} parent=87 // pred_check
          %p680 = pneg %p96
        $region94: #{tpu_custom_call.1} parent=87 // pred_check_branch
          %682 = sbr.rel (%p680) target = $region96
        $region95: #{tpu_custom_call.1} parent=87 // pred_region
          %683 = dma.done [#allocation9], 16
        $region96: #{tpu_custom_call.1} parent=87 // pred_fallthru
          _
        // Predicated region
        $region97: #{tpu_custom_call.1} parent=87 // pred_check
          %p684 = pneg %p117
        $region98: #{tpu_custom_call.1} parent=87 // pred_check_branch
          %686 = sbr.rel (%p684) target = $region100
        $region99: #{tpu_custom_call.1} parent=87 // pred_region
          %687 = dma.done [#allocation9], 16
        $region100: #{tpu_custom_call.1} parent=87 // pred_fallthru
          _
        // Predicated region
        $region101: #{tpu_custom_call.1} parent=87 // pred_check
          %p688 = pneg %p138
        $region102: #{tpu_custom_call.1} parent=87 // pred_check_branch
          %690 = sbr.rel (%p688) target = $region104
        $region103: #{tpu_custom_call.1} parent=87 // pred_region
          %691 = dma.done [#allocation12], 256
        $region104: #{tpu_custom_call.1} parent=87 // pred_fallthru
          _
        // Predicated region
        $region105: #{tpu_custom_call.1} parent=87 // pred_check
          %p692 = pneg %p159
        $region106: #{tpu_custom_call.1} parent=87 // pred_check_branch
          %694 = sbr.rel (%p692) target = $region108
        $region107: #{tpu_custom_call.1} parent=87 // pred_region
          %695 = dma.done [#allocation12], 16
        $region108: #{tpu_custom_call.1} parent=87 // pred_fallthru
          _
        // Predicated region
        $region109: #{tpu_custom_call.1} parent=87 // pred_check
          %p696 = pneg %p180
        $region110: #{tpu_custom_call.1} parent=87 // pred_check_branch
          %698 = sbr.rel (%p696) target = $region112
        $region111: #{tpu_custom_call.1} parent=87 // pred_region
          %699 = dma.done [#allocation15], 256
        $region112: #{tpu_custom_call.1} parent=87 // pred_fallthru
          _
        // Predicated region
        $region113: #{tpu_custom_call.1} parent=87 // pred_check
          %p700 = pneg %p201
        $region114: #{tpu_custom_call.1} parent=87 // pred_check_branch
          %702 = sbr.rel (%p700) target = $region116
        $region115: #{tpu_custom_call.1} parent=87 // pred_region
          %703 = dma.done [#allocation15], 16
        $region116: #{tpu_custom_call.1} parent=87 // pred_fallthru
          _
        // Predicated region
        $region117: #{tpu_custom_call.1} parent=87 // pred_check
          %p704 = pneg %p222
        $region118: #{tpu_custom_call.1} parent=87 // pred_check_branch
          %706 = sbr.rel (%p704) target = $region120
        $region119: #{tpu_custom_call.1} parent=87 // pred_region
          %707 = dma.done [#allocation18], 256
        $region120: #{tpu_custom_call.1} parent=87 // pred_fallthru
          _
        // Predicated region
        $region121: #{tpu_custom_call.1} parent=87 // pred_check
          %p708 = pneg %p243
        $region122: #{tpu_custom_call.1} parent=87 // pred_check_branch
          %710 = sbr.rel (%p708) target = $region124
        $region123: #{tpu_custom_call.1} parent=87 // pred_region
          %711 = dma.done [#allocation18], 16
        $region124: #{tpu_custom_call.1} parent=87 // pred_fallthru
          _
        // Predicated region
        $region125: #{tpu_custom_call.1} parent=87 // pred_check
          %p712 = pneg %p264
        $region126: #{tpu_custom_call.1} parent=87 // pred_check_branch
          %714 = sbr.rel (%p712) target = $region128
        $region127: #{tpu_custom_call.1} parent=87 // pred_region
          %715 = dma.done [#allocation21], 256
        $region128: #{tpu_custom_call.1} parent=87 // pred_fallthru
          _
        // Predicated region
        $region129: #{tpu_custom_call.1} parent=87 // pred_check
          %p716 = pneg %p285
        $region130: #{tpu_custom_call.1} parent=87 // pred_check_branch
          %718 = sbr.rel (%p716) target = $region132
        $region131: #{tpu_custom_call.1} parent=87 // pred_region
          %719 = dma.done [#allocation21], 16
        $region132: #{tpu_custom_call.1} parent=87 // pred_fallthru
          _
        // Predicated region
        $region133: #{tpu_custom_call.1} parent=87 // pred_check
          %p720 = pneg %p306
        $region134: #{tpu_custom_call.1} parent=87 // pred_check_branch
          %722 = sbr.rel (%p720) target = $region136
        $region135: #{tpu_custom_call.1} parent=87 // pred_region
          %723 = dma.done [#allocation24], 16
        $region136: #{tpu_custom_call.1} parent=87 // pred_fallthru
          _
        // Predicated region
        $region137: #{tpu_custom_call.1} parent=87 // pred_check
          %p724 = pneg %p327
        $region138: #{tpu_custom_call.1} parent=87 // pred_check_branch
          %726 = sbr.rel (%p724) target = $region140
        $region139: #{tpu_custom_call.1} parent=87 // pred_region
          %727 = dma.done [#allocation24], 16
        $region140: #{tpu_custom_call.1} parent=87 // pred_fallthru
          _
        // Predicated region
        $region141: #{tpu_custom_call.1} parent=87 // pred_check
          %p728 = pneg %p348
        $region142: #{tpu_custom_call.1} parent=87 // pred_check_branch
          %730 = sbr.rel (%p728) target = $region144
        $region143: #{tpu_custom_call.1} parent=87 // pred_region
          %731 = dma.done [#allocation27], 256
        $region144: #{tpu_custom_call.1} parent=87 // pred_fallthru
          _
        // Predicated region
        $region145: #{tpu_custom_call.1} parent=87 // pred_check
          %p732 = pneg %p369
        $region146: #{tpu_custom_call.1} parent=87 // pred_check_branch
          %734 = sbr.rel (%p732) target = $region148
        $region147: #{tpu_custom_call.1} parent=87 // pred_region
          %735 = dma.done [#allocation27], 16
        $region148: #{tpu_custom_call.1} parent=87 // pred_fallthru
          _
        // Predicated region
        $region149: #{tpu_custom_call.1} parent=87 // pred_check
          %p736 = pneg %p390
        $region150: #{tpu_custom_call.1} parent=87 // pred_check_branch
          %738 = sbr.rel (%p736) target = $region152
        $region151: #{tpu_custom_call.1} parent=87 // pred_region
          %739 = dma.done [#allocation30], 1024
        $region152: #{tpu_custom_call.1} parent=87 // pred_fallthru
          _
        // Predicated region
        $region153: #{tpu_custom_call.1} parent=87 // pred_check
          %p740 = pneg %p411
        $region154: #{tpu_custom_call.1} parent=87 // pred_check_branch
          %742 = sbr.rel (%p740) target = $region156
        $region155: #{tpu_custom_call.1} parent=87 // pred_region
          %743 = dma.done [#allocation30], 16
        $region156: #{tpu_custom_call.1} parent=87 // pred_fallthru
          _
        %s744 = sand.u32 %s62, 1
        %s745 = scalar_lea.sflag [#allocation6], %s744
        %s746 = sand.u32 %s62, 1
        %s747 = smul.addr %s746, 8
        %s748 = scalar_lea.vmem [#allocation5], %s747
        %p749 = pneg %p75
        %p750 = pneg %p72
        %p751 = pneg %p96
        %p752 = pneg %p93
        %p753 = pneg %p117
        %p754 = pneg %p114
        %p755 = pneg %p138
        %p756 = pneg %p135
        %p757 = pneg %p159
        %p758 = pneg %p156
        %p759 = pneg %p180
        %p760 = pneg %p177
        %p761 = pneg %p201
        %p762 = pneg %p198
        %p763 = pneg %p222
        %p764 = pneg %p219
        %p765 = pneg %p243
        %p766 = pneg %p240
        %p767 = pneg %p264
        %p768 = pneg %p261
        %p769 = pneg %p285
        %p770 = pneg %p282
        %p771 = pneg %p306
        %p772 = pneg %p303
        %p773 = pneg %p327
        %p774 = pneg %p324
        %p775 = pneg %p348
        %p776 = pneg %p345
        %p777 = pneg %p369
        %p778 = pneg %p366
        %p779 = pneg %p390
        %p780 = pneg %p387
        %p781 = pneg %p411
        %p782 = pneg %p408
        %p783 = pneg %p439
        %p784 = pneg %p436
        %s785 = sand.u32 %s426, 1
        %s786 = scalar_lea.sflag [#allocation7], %s785
        %s787 = sand.u32 %s426, 1
        %s788 = smul.addr %s787, 8
        %s789 = scalar_lea.vmem [#allocation32], %s788
        %s791 = smul.u32 %s47, 8
        %p792 = scmp.eq.s32.totalorder %s47, 0
        // Predicated region
        $region157: #{tpu_custom_call.1} parent=87 // pred_check
          %p793 = pneg %p792
        $region158: #{tpu_custom_call.1} parent=87 // pred_check_branch
          %795 = sbr.rel (%p793) target = $region160
        $region159: #{tpu_custom_call.1} parent=87 // pred_region
          %v796 = vld [vmem:[%s675] sm:$0xff]
          %v797 = vld [vmem:[#allocation8] sm:$0x1]
          %v798 = vld [vmem:[#allocation10] sm:$0x1]
          %vm799 = vcmask 261120
          %v800 = vsel %vm799, %v796, 0.0
          %801 = vadd.xlane.f32.xlu0 %v800
          %v802 = vpop.xlane.xlu0 %801
          %v803 = vrcp.pop 32.0
          %v804 = vmul.f32 %v802, %v803
          %v805 = vsub.f32 %v796, %v804
          %v806 = vmul.f32 %v805, %v805
          %v807 = vsel %vm799, %v806, 0.0
          %808 = vadd.xlane.f32.xlu0 %v807
          %v809 = vpop.xlane.xlu0 %808
          %v810 = vmul.f32 %v809, %v803
          %v811 = vadd.f32 %v810, 1e-05
          %v812 = vrsqrt.pop %v811
          %v813 = vmul.f32 %v805, %v812
          %v815 = vlaneseq
          %v816 = vshrl.u32 %v815, 7
          %v817 = vsub.s32 0, %v816
          %v818 = vrot.slane %v797, %v817
          %v820 = vmul.f32 %v813, %v818
          %v822 = vlaneseq
          %v823 = vshrl.u32 %v822, 7
          %v824 = vsub.s32 0, %v823
          %v825 = vrot.slane %v798, %v824
          %v827 = vadd.f32 %v820, %v825
          %v828 = vpack.c.bf16 %v827, %v827
          %vm829 = vcmask 257024
          %830 = vst.msk [vmem:[#allocation2] sm:$0xf] %vm829, %v828
          %v831 = vld [vmem:[#allocation14] sm:$0xf]
          %v832 = vld [vmem:[#allocation14 + $0x4] sm:$0xf]
          %v833 = vld [vmem:[#allocation14 + $0x8] sm:$0xf]
          %v834 = vld [vmem:[#allocation14 + $0xc] sm:$0xf]
          %v835 = vld [vmem:[#allocation16] sm:$0x1]
          %v837 = vlaneseq
          %v838 = vshrl.u32 %v837, 7
          %v839 = vsub.s32 0, %v838
          %v840 = vrot.slane %v835, %v839
          %v846 = vunpack.c.l.b16 %v831
          %v847 = vunpack.c.l.b16 %v832
          %v848 = vunpack.c.l.b16 %v833
          %v849 = vunpack.c.l.b16 %v834
          %v850 = vpack.c.b16 %v847, %v846
          %v851 = vpack.c.b16 %v849, %v848
          %v855 = vsel %vm799, %v828, 0
          %857 = vmatprep.subr.bf16.mxu0 0
          %858 = vmatpush1.bf16.msra.mxu0 %v850
          %859 = vmatprep.subr.bf16.mxu0 0
          %860 = vmatpush1.bf16.msra.mxu0 %v851
          %861 = vmatprep.subr.bf16.mxu0 0
          %862 = vmatpush1.bf16.msra.mxu0 0
          %863 = vmatprep.subr.bf16.mxu0 0
          %864 = vmatpush1.bf16.msra.mxu0 0
          %865 = vmatprep.subr.bf16.mxu0 0
          %866 = vmatpush1.bf16.msra.mxu0 0
          %867 = vmatprep.subr.bf16.mxu0 0
          %868 = vmatpush1.bf16.msra.mxu0 0
          %869 = vmatprep.subr.bf16.mxu0 0
          %870 = vmatpush1.bf16.msra.mxu0 0
          %871 = vmatprep.subr.bf16.mxu0 0
          %872 = vmatpush1.bf16.msra.mxu0 0
          %873 = vmatprep.subr.bf16.mxu0 0
          %874 = vmatpush1.bf16.msra.mxu0 0
          %875 = vmatprep.subr.bf16.mxu0 0
          %876 = vmatpush1.bf16.msra.mxu0 0
          %877 = vmatprep.subr.bf16.mxu0 0
          %878 = vmatpush1.bf16.msra.mxu0 0
          %879 = vmatprep.subr.bf16.mxu0 0
          %880 = vmatpush1.bf16.msra.mxu0 0
          %881 = vmatprep.subr.bf16.mxu0 0
          %882 = vmatpush1.bf16.msra.mxu0 0
          %883 = vmatprep.subr.bf16.mxu0 0
          %884 = vmatpush1.bf16.msra.mxu0 0
          %885 = vmatprep.subr.bf16.mxu0 0
          %886 = vmatpush1.bf16.msra.mxu0 0
          %887 = vmatprep.subr.bf16.mxu0 0
          %888 = vmatpush1.bf16.msra.mxu0 0
          %889 = vmatprep.mubr.bf16.mxu0 0
          %890 = vmatmul.mubr.bf16.gmra.mrb[0].mxu0 %v855
          %v891 = vpop.f32.mrb[0].mxu0
          %v892 = vadd.f32 %v840, %v891
          %v893 = vpop.f32.mrb[0].mxu0
          %v894 = vpop.f32.mrb[0].mxu0
          %v895 = vpop.f32.mrb[0].mxu0
          %896 = vdwg.mxu0
          %v897 = vld [vmem:[#allocation17] sm:$0xf]
          %v898 = vld [vmem:[#allocation17 + $0x4] sm:$0xf]
          %v899 = vld [vmem:[#allocation17 + $0x8] sm:$0xf]
          %v900 = vld [vmem:[#allocation17 + $0xc] sm:$0xf]
          %v901 = vld [vmem:[#allocation19] sm:$0x1]
          %v903 = vlaneseq
          %v904 = vshrl.u32 %v903, 7
          %v905 = vsub.s32 0, %v904
          %v906 = vrot.slane %v901, %v905
          %v912 = vunpack.c.l.b16 %v897
          %v913 = vunpack.c.l.b16 %v898
          %v914 = vunpack.c.l.b16 %v899
          %v915 = vunpack.c.l.b16 %v900
          %v916 = vpack.c.b16 %v913, %v912
          %v917 = vpack.c.b16 %v915, %v914
          %920 = vmatprep.subr.bf16.mxu0 0
          %921 = vmatpush1.bf16.msra.mxu0 %v916
          %922 = vmatprep.subr.bf16.mxu0 0
          %923 = vmatpush1.bf16.msra.mxu0 %v917
          %924 = vmatprep.subr.bf16.mxu0 0
          %925 = vmatpush1.bf16.msra.mxu0 0
          %926 = vmatprep.subr.bf16.mxu0 0
          %927 = vmatpush1.bf16.msra.mxu0 0
          %928 = vmatprep.subr.bf16.mxu0 0
          %929 = vmatpush1.bf16.msra.mxu0 0
          %930 = vmatprep.subr.bf16.mxu0 0
          %931 = vmatpush1.bf16.msra.mxu0 0
          %932 = vmatprep.subr.bf16.mxu0 0
          %933 = vmatpush1.bf16.msra.mxu0 0
          %934 = vmatprep.subr.bf16.mxu0 0
          %935 = vmatpush1.bf16.msra.mxu0 0
          %936 = vmatprep.subr.bf16.mxu0 0
          %937 = vmatpush1.bf16.msra.mxu0 0
          %938 = vmatprep.subr.bf16.mxu0 0
          %939 = vmatpush1.bf16.msra.mxu0 0
          %940 = vmatprep.subr.bf16.mxu0 0
          %941 = vmatpush1.bf16.msra.mxu0 0
          %942 = vmatprep.subr.bf16.mxu0 0
          %943 = vmatpush1.bf16.msra.mxu0 0
          %944 = vmatprep.subr.bf16.mxu0 0
          %945 = vmatpush1.bf16.msra.mxu0 0
          %946 = vmatprep.subr.bf16.mxu0 0
          %947 = vmatpush1.bf16.msra.mxu0 0
          %948 = vmatprep.subr.bf16.mxu0 0
          %949 = vmatpush1.bf16.msra.mxu0 0
          %950 = vmatprep.subr.bf16.mxu0 0
          %951 = vmatpush1.bf16.msra.mxu0 0
          %952 = vmatprep.mubr.bf16.mxu0 0
          %953 = vmatmul.mubr.bf16.gmra.mrb[0].mxu0 %v855
          %v954 = vpop.f32.mrb[0].mxu0
          %v955 = vadd.f32 %v906, %v954
          %v956 = vpop.f32.mrb[0].mxu0
          %v957 = vpop.f32.mrb[0].mxu0
          %v958 = vpop.f32.mrb[0].mxu0
          %959 = vdwg.mxu0
          %961 = vrot.lane.b32.xlu0 %v892, 120
          %v962 = vpop.permute.xlu0 %961
          %964 = vrot.lane.b32.xlu0 %v892, 112
          %v965 = vpop.permute.xlu0 %964
          %967 = vrot.lane.b32.xlu0 %v892, 104
          %v968 = vpop.permute.xlu0 %967
          %v970 = vcombine.low %v892, %v965
          %v971 = vcombine.high %v892, %v965
          %v973 = vunpack.c.l.s4 1983009808
          %v974 = vunpack.c.0.s8 %v973
          %v975 = vlaneseq
          %v976 = vshrl.u32 %v975, 7
          %v977 = vsub.s32 %v974, %v976
          %v978 = vrot.slane %v970, %v977
          %v980 = vunpack.c.l.s4 1983009808
          %v981 = vunpack.c.0.s8 %v980
          %v982 = vlaneseq
          %v983 = vshrl.u32 %v982, 7
          %v984 = vsub.s32 %v981, %v983
          %v985 = vrot.slane %v971, %v984
          %v986 = vcombine.low %v962, %v968
          %v987 = vcombine.high %v962, %v968
          %v989 = vunpack.c.l.s4 1983009808
          %v990 = vunpack.c.0.s8 %v989
          %v991 = vlaneseq
          %v992 = vshrl.u32 %v991, 7
          %v993 = vsub.s32 %v990, %v992
          %v994 = vrot.slane %v986, %v993
          %v996 = vunpack.c.l.s4 1983009808
          %v997 = vunpack.c.0.s8 %v996
          %v998 = vlaneseq
          %v999 = vshrl.u32 %v998, 7
          %v1000 = vsub.s32 %v997, %v999
          %v1001 = vrot.slane %v987, %v1000
          %v1002 = vcombine.low %v978, %v994
          %v1003 = vcombine.high %v978, %v994
          %v1005 = vunpack.c.l.s4 1934713408
          %v1006 = vunpack.c.0.s8 %v1005
          %v1007 = vlaneseq
          %v1008 = vshrl.u32 %v1007, 7
          %v1009 = vsub.s32 %v1006, %v1008
          %v1010 = vrot.slane %v1002, %v1009
          %v1012 = vunpack.c.l.s4 1934713408
          %v1013 = vunpack.c.0.s8 %v1012
          %v1014 = vlaneseq
          %v1015 = vshrl.u32 %v1014, 7
          %v1016 = vsub.s32 %v1013, %v1015
          %v1017 = vrot.slane %v1003, %v1016
          %v1018 = vcombine.low %v985, %v1001
          %v1019 = vcombine.high %v985, %v1001
          %v1021 = vunpack.c.l.s4 1934713408
          %v1022 = vunpack.c.0.s8 %v1021
          %v1023 = vlaneseq
          %v1024 = vshrl.u32 %v1023, 7
          %v1025 = vsub.s32 %v1022, %v1024
          %v1026 = vrot.slane %v1018, %v1025
          %v1028 = vunpack.c.l.s4 1934713408
          %v1029 = vunpack.c.0.s8 %v1028
          %v1030 = vlaneseq
          %v1031 = vshrl.u32 %v1030, 7
          %v1032 = vsub.s32 %v1029, %v1031
          %v1033 = vrot.slane %v1019, %v1032
          %v1034 = vcombine.high %v1010, 0.0
          %v1035 = vcombine.high %v1017, 0.0
          %v1036 = vcombine.high %v1026, 0.0
          %v1037 = vcombine.high %v1033, 0.0
          %v1038 = vcombine.low %v1010, %v1017
          %v1040 = vunpack.c.l.s4 1983009808
          %v1041 = vunpack.c.0.s8 %v1040
          %v1042 = vlaneseq
          %v1043 = vshrl.u32 %v1042, 7
          %v1044 = vsub.s32 %v1041, %v1043
          %v1045 = vrot.slane %v1038, %v1044
          %v1046 = vcombine.low %v1034, %v1035
          %v1048 = vunpack.c.l.s4 1983009808
          %v1049 = vunpack.c.0.s8 %v1048
          %v1050 = vlaneseq
          %v1051 = vshrl.u32 %v1050, 7
          %v1052 = vsub.s32 %v1049, %v1051
          %v1053 = vrot.slane %v1046, %v1052
          %v1054 = vcombine.low %v1026, %v1033
          %v1056 = vunpack.c.l.s4 1983009808
          %v1057 = vunpack.c.0.s8 %v1056
          %v1058 = vlaneseq
          %v1059 = vshrl.u32 %v1058, 7
          %v1060 = vsub.s32 %v1057, %v1059
          %v1061 = vrot.slane %v1054, %v1060
          %v1062 = vcombine.low %v1036, %v1037
          %v1064 = vunpack.c.l.s4 1983009808
          %v1065 = vunpack.c.0.s8 %v1064
          %v1066 = vlaneseq
          %v1067 = vshrl.u32 %v1066, 7
          %v1068 = vsub.s32 %v1065, %v1067
          %v1069 = vrot.slane %v1062, %v1068
          %v1070 = vcombine.low %v1045, %v1053
          %v1071 = vcombine.high %v1045, %v1053
          %v1073 = vunpack.c.l.s4 1934713408
          %v1074 = vunpack.c.0.s8 %v1073
          %v1075 = vlaneseq
          %v1076 = vshrl.u32 %v1075, 7
          %v1077 = vsub.s32 %v1074, %v1076
          %v1078 = vrot.slane %v1070, %v1077
          %v1080 = vunpack.c.l.s4 1934713408
          %v1081 = vunpack.c.0.s8 %v1080
          %v1082 = vlaneseq
          %v1083 = vshrl.u32 %v1082, 7
          %v1084 = vsub.s32 %v1081, %v1083
          %v1085 = vrot.slane %v1071, %v1084
          %v1086 = vcombine.low %v1061, %v1069
          %v1087 = vcombine.high %v1061, %v1069
          %v1089 = vunpack.c.l.s4 1934713408
          %v1090 = vunpack.c.0.s8 %v1089
          %v1091 = vlaneseq
          %v1092 = vshrl.u32 %v1091, 7
          %v1093 = vsub.s32 %v1090, %v1092
          %v1094 = vrot.slane %v1086, %v1093
          %v1096 = vunpack.c.l.s4 1934713408
          %v1097 = vunpack.c.0.s8 %v1096
          %v1098 = vlaneseq
          %v1099 = vshrl.u32 %v1098, 7
          %v1100 = vsub.s32 %v1097, %v1099
          %v1101 = vrot.slane %v1087, %v1100
          %v1102 = vcombine.low %v1078, %v1094
          %v1103 = vcombine.high %v1078, %v1094
          %v1104 = vcombine.low %v1085, %v1101
          %v1105 = vcombine.high %v1085, %v1101
          %v1106 = vpack.c.bf16 %v1102, %v1102
          %v1107 = vpack.c.bf16 %v1103, %v1103
          %v1108 = vpack.c.bf16 %v1104, %v1104
          %v1109 = vpack.c.bf16 %v1105, %v1105
          %vm1110 = vcmask 60416
          %1111 = vst.msk [vmem:[#allocation3] sm:$0xf] %vm1110, %v1106
          %1112 = vst.msk [vmem:[#allocation3 + $0x4] sm:$0xf] %vm1110, %v1107
          %1113 = vst.msk [vmem:[#allocation3 + $0x8] sm:$0xf] %vm1110, %v1108
          %1114 = vst.msk [vmem:[#allocation3 + $0xc] sm:$0xf] %vm1110, %v1109
          %1116 = vrot.lane.b32.xlu0 %v955, 120
          %v1117 = vpop.permute.xlu0 %1116
          %1119 = vrot.lane.b32.xlu0 %v955, 112
          %v1120 = vpop.permute.xlu0 %1119
          %1122 = vrot.lane.b32.xlu0 %v955, 104
          %v1123 = vpop.permute.xlu0 %1122
          %v1125 = vcombine.low %v955, %v1120
          %v1126 = vcombine.high %v955, %v1120
          %v1128 = vunpack.c.l.s4 1983009808
          %v1129 = vunpack.c.0.s8 %v1128
          %v1130 = vlaneseq
          %v1131 = vshrl.u32 %v1130, 7
          %v1132 = vsub.s32 %v1129, %v1131
          %v1133 = vrot.slane %v1125, %v1132
          %v1135 = vunpack.c.l.s4 1983009808
          %v1136 = vunpack.c.0.s8 %v1135
          %v1137 = vlaneseq
          %v1138 = vshrl.u32 %v1137, 7
          %v1139 = vsub.s32 %v1136, %v1138
          %v1140 = vrot.slane %v1126, %v1139
          %v1141 = vcombine.low %v1117, %v1123
          %v1142 = vcombine.high %v1117, %v1123
          %v1144 = vunpack.c.l.s4 1983009808
          %v1145 = vunpack.c.0.s8 %v1144
          %v1146 = vlaneseq
          %v1147 = vshrl.u32 %v1146, 7
          %v1148 = vsub.s32 %v1145, %v1147
          %v1149 = vrot.slane %v1141, %v1148
          %v1151 = vunpack.c.l.s4 1983009808
          %v1152 = vunpack.c.0.s8 %v1151
          %v1153 = vlaneseq
          %v1154 = vshrl.u32 %v1153, 7
          %v1155 = vsub.s32 %v1152, %v1154
          %v1156 = vrot.slane %v1142, %v1155
          %v1157 = vcombine.low %v1133, %v1149
          %v1158 = vcombine.high %v1133, %v1149
          %v1160 = vunpack.c.l.s4 1934713408
          %v1161 = vunpack.c.0.s8 %v1160
          %v1162 = vlaneseq
          %v1163 = vshrl.u32 %v1162, 7
          %v1164 = vsub.s32 %v1161, %v1163
          %v1165 = vrot.slane %v1157, %v1164
          %v1167 = vunpack.c.l.s4 1934713408
          %v1168 = vunpack.c.0.s8 %v1167
          %v1169 = vlaneseq
          %v1170 = vshrl.u32 %v1169, 7
          %v1171 = vsub.s32 %v1168, %v1170
          %v1172 = vrot.slane %v1158, %v1171
          %v1173 = vcombine.low %v1140, %v1156
          %v1174 = vcombine.high %v1140, %v1156
          %v1176 = vunpack.c.l.s4 1934713408
          %v1177 = vunpack.c.0.s8 %v1176
          %v1178 = vlaneseq
          %v1179 = vshrl.u32 %v1178, 7
          %v1180 = vsub.s32 %v1177, %v1179
          %v1181 = vrot.slane %v1173, %v1180
          %v1183 = vunpack.c.l.s4 1934713408
          %v1184 = vunpack.c.0.s8 %v1183
          %v1185 = vlaneseq
          %v1186 = vshrl.u32 %v1185, 7
          %v1187 = vsub.s32 %v1184, %v1186
          %v1188 = vrot.slane %v1174, %v1187
          %v1189 = vcombine.high %v1165, 0.0
          %v1190 = vcombine.high %v1172, 0.0
          %v1191 = vcombine.high %v1181, 0.0
          %v1192 = vcombine.high %v1188, 0.0
          %v1193 = vcombine.low %v1165, %v1172
          %v1195 = vunpack.c.l.s4 1983009808
          %v1196 = vunpack.c.0.s8 %v1195
          %v1197 = vlaneseq
          %v1198 = vshrl.u32 %v1197, 7
          %v1199 = vsub.s32 %v1196, %v1198
          %v1200 = vrot.slane %v1193, %v1199
          %v1201 = vcombine.low %v1189, %v1190
          %v1203 = vunpack.c.l.s4 1983009808
          %v1204 = vunpack.c.0.s8 %v1203
          %v1205 = vlaneseq
          %v1206 = vshrl.u32 %v1205, 7
          %v1207 = vsub.s32 %v1204, %v1206
          %v1208 = vrot.slane %v1201, %v1207
          %v1209 = vcombine.low %v1181, %v1188
          %v1211 = vunpack.c.l.s4 1983009808
          %v1212 = vunpack.c.0.s8 %v1211
          %v1213 = vlaneseq
          %v1214 = vshrl.u32 %v1213, 7
          %v1215 = vsub.s32 %v1212, %v1214
          %v1216 = vrot.slane %v1209, %v1215
          %v1217 = vcombine.low %v1191, %v1192
          %v1219 = vunpack.c.l.s4 1983009808
          %v1220 = vunpack.c.0.s8 %v1219
          %v1221 = vlaneseq
          %v1222 = vshrl.u32 %v1221, 7
          %v1223 = vsub.s32 %v1220, %v1222
          %v1224 = vrot.slane %v1217, %v1223
          %v1225 = vcombine.low %v1200, %v1208
          %v1226 = vcombine.high %v1200, %v1208
          %v1228 = vunpack.c.l.s4 1934713408
          %v1229 = vunpack.c.0.s8 %v1228
          %v1230 = vlaneseq
          %v1231 = vshrl.u32 %v1230, 7
          %v1232 = vsub.s32 %v1229, %v1231
          %v1233 = vrot.slane %v1225, %v1232
          %v1235 = vunpack.c.l.s4 1934713408
          %v1236 = vunpack.c.0.s8 %v1235
          %v1237 = vlaneseq
          %v1238 = vshrl.u32 %v1237, 7
          %v1239 = vsub.s32 %v1236, %v1238
          %v1240 = vrot.slane %v1226, %v1239
          %v1241 = vcombine.low %v1216, %v1224
          %v1242 = vcombine.high %v1216, %v1224
          %v1244 = vunpack.c.l.s4 1934713408
          %v1245 = vunpack.c.0.s8 %v1244
          %v1246 = vlaneseq
          %v1247 = vshrl.u32 %v1246, 7
          %v1248 = vsub.s32 %v1245, %v1247
          %v1249 = vrot.slane %v1241, %v1248
          %v1251 = vunpack.c.l.s4 1934713408
          %v1252 = vunpack.c.0.s8 %v1251
          %v1253 = vlaneseq
          %v1254 = vshrl.u32 %v1253, 7
          %v1255 = vsub.s32 %v1252, %v1254
          %v1256 = vrot.slane %v1242, %v1255
          %v1257 = vcombine.low %v1233, %v1249
          %v1258 = vcombine.high %v1233, %v1249
          %v1259 = vcombine.low %v1240, %v1256
          %v1260 = vcombine.high %v1240, %v1256
          %v1261 = vpack.c.bf16 %v1257, %v1257
          %v1262 = vpack.c.bf16 %v1258, %v1258
          %v1263 = vpack.c.bf16 %v1259, %v1259
          %v1264 = vpack.c.bf16 %v1260, %v1260
          %1265 = vst.msk [vmem:[#allocation4] sm:$0xf] %vm1110, %v1261
          %1266 = vst.msk [vmem:[#allocation4 + $0x4] sm:$0xf] %vm1110, %v1262
          %1267 = vst.msk [vmem:[#allocation4 + $0x8] sm:$0xf] %vm1110, %v1263
          %1268 = vst.msk [vmem:[#allocation4 + $0xc] sm:$0xf] %vm1110, %v1264
        $region160: #{tpu_custom_call.1} parent=87 // pred_fallthru
          _
        %s1269 = sshra.s32 %s791, 3
        %s1270 = sand.u32 %s791, 7
        %s1271 = smul.addr %s1269, 4
        %s1272 = scalar_lea.vmem [#allocation2], %s1271
        %v1273 = vld [vmem:[%s1272] sm:$0xf]
        %v1274 = vld [vmem:[#allocation11] sm:$0xf]
        %v1275 = vld [vmem:[#allocation11 + $0x4] sm:$0xf]
        %v1276 = vld [vmem:[#allocation11 + $0x8] sm:$0xf]
        %v1277 = vld [vmem:[#allocation11 + $0xc] sm:$0xf]
        %v1278 = vld [vmem:[#allocation13] sm:$0x1]
        %v1280 = vlaneseq
        %v1281 = vshrl.u32 %v1280, 7
        %v1282 = vsub.s32 0, %v1281
        %v1283 = vrot.slane %v1278, %v1282
        %v1289 = vunpack.c.l.b16 %v1274
        %v1290 = vunpack.c.l.b16 %v1275
        %v1291 = vunpack.c.l.b16 %v1276
        %v1292 = vunpack.c.l.b16 %v1277
        %v1293 = vpack.c.b16 %v1290, %v1289
        %v1294 = vpack.c.b16 %v1292, %v1291
        %vm1297 = vcmask 261120
        %v1299 = vsel %vm1297, %v1273, 0
        %1301 = vmatprep.subr.bf16.mxu0 0
        %1302 = vmatpush1.bf16.msra.mxu0 %v1293
        %1303 = vmatprep.subr.bf16.mxu0 0
        %1304 = vmatpush1.bf16.msra.mxu0 %v1294
        %1305 = vmatprep.subr.bf16.mxu0 0
        %1306 = vmatpush1.bf16.msra.mxu0 0
        %1307 = vmatprep.subr.bf16.mxu0 0
        %1308 = vmatpush1.bf16.msra.mxu0 0
        %1309 = vmatprep.subr.bf16.mxu0 0
        %1310 = vmatpush1.bf16.msra.mxu0 0
        %1311 = vmatprep.subr.bf16.mxu0 0
        %1312 = vmatpush1.bf16.msra.mxu0 0
        %1313 = vmatprep.subr.bf16.mxu0 0
        %1314 = vmatpush1.bf16.msra.mxu0 0
        %1315 = vmatprep.subr.bf16.mxu0 0
        %1316 = vmatpush1.bf16.msra.mxu0 0
        %1317 = vmatprep.subr.bf16.mxu0 0
        %1318 = vmatpush1.bf16.msra.mxu0 0
        %1319 = vmatprep.subr.bf16.mxu0 0
        %1320 = vmatpush1.bf16.msra.mxu0 0
        %1321 = vmatprep.subr.bf16.mxu0 0
        %1322 = vmatpush1.bf16.msra.mxu0 0
        %1323 = vmatprep.subr.bf16.mxu0 0
        %1324 = vmatpush1.bf16.msra.mxu0 0
        %1325 = vmatprep.subr.bf16.mxu0 0
        %1326 = vmatpush1.bf16.msra.mxu0 0
        %1327 = vmatprep.subr.bf16.mxu0 0
        %1328 = vmatpush1.bf16.msra.mxu0 0
        %1329 = vmatprep.subr.bf16.mxu0 0
        %1330 = vmatpush1.bf16.msra.mxu0 0
        %1331 = vmatprep.subr.bf16.mxu0 0
        %1332 = vmatpush1.bf16.msra.mxu0 0
        %1333 = vmatprep.mubr.bf16.mxu0 0
        %1334 = vmatmul.mubr.bf16.gmra.mrb[0].mxu0 %v1299
        %v1335 = vpop.f32.mrb[0].mxu0
        %v1336 = vadd.f32 %v1283, %v1335
        %v1337 = vpop.f32.mrb[0].mxu0
        %v1338 = vpop.f32.mrb[0].mxu0
        %v1339 = vpop.f32.mrb[0].mxu0
        %1340 = vdwg.mxu0
        %1342 = vrot.lane.b32.xlu0 %v1336, 120
        %v1343 = vpop.permute.xlu0 %1342
        %1345 = vrot.lane.b32.xlu0 %v1336, 112
        %v1346 = vpop.permute.xlu0 %1345
        %1348 = vrot.lane.b32.xlu0 %v1336, 104
        %v1349 = vpop.permute.xlu0 %1348
        %v1351 = vcombine.low %v1336, %v1346
        %v1352 = vcombine.high %v1336, %v1346
        %v1354 = vunpack.c.l.s4 1983009808
        %v1355 = vunpack.c.0.s8 %v1354
        %v1356 = vlaneseq
        %v1357 = vshrl.u32 %v1356, 7
        %v1358 = vsub.s32 %v1355, %v1357
        %v1359 = vrot.slane %v1351, %v1358
        %v1361 = vunpack.c.l.s4 1983009808
        %v1362 = vunpack.c.0.s8 %v1361
        %v1363 = vlaneseq
        %v1364 = vshrl.u32 %v1363, 7
        %v1365 = vsub.s32 %v1362, %v1364
        %v1366 = vrot.slane %v1352, %v1365
        %v1367 = vcombine.low %v1343, %v1349
        %v1368 = vcombine.high %v1343, %v1349
        %v1370 = vunpack.c.l.s4 1983009808
        %v1371 = vunpack.c.0.s8 %v1370
        %v1372 = vlaneseq
        %v1373 = vshrl.u32 %v1372, 7
        %v1374 = vsub.s32 %v1371, %v1373
        %v1375 = vrot.slane %v1367, %v1374
        %v1377 = vunpack.c.l.s4 1983009808
        %v1378 = vunpack.c.0.s8 %v1377
        %v1379 = vlaneseq
        %v1380 = vshrl.u32 %v1379, 7
        %v1381 = vsub.s32 %v1378, %v1380
        %v1382 = vrot.slane %v1368, %v1381
        %v1383 = vcombine.low %v1359, %v1375
        %v1384 = vcombine.high %v1359, %v1375
        %v1386 = vunpack.c.l.s4 1934713408
        %v1387 = vunpack.c.0.s8 %v1386
        %v1388 = vlaneseq
        %v1389 = vshrl.u32 %v1388, 7
        %v1390 = vsub.s32 %v1387, %v1389
        %v1391 = vrot.slane %v1383, %v1390
        %v1393 = vunpack.c.l.s4 1934713408
        %v1394 = vunpack.c.0.s8 %v1393
        %v1395 = vlaneseq
        %v1396 = vshrl.u32 %v1395, 7
        %v1397 = vsub.s32 %v1394, %v1396
        %v1398 = vrot.slane %v1384, %v1397
        %v1399 = vcombine.low %v1366, %v1382
        %v1400 = vcombine.high %v1366, %v1382
        %v1402 = vunpack.c.l.s4 1934713408
        %v1403 = vunpack.c.0.s8 %v1402
        %v1404 = vlaneseq
        %v1405 = vshrl.u32 %v1404, 7
        %v1406 = vsub.s32 %v1403, %v1405
        %v1407 = vrot.slane %v1399, %v1406
        %v1409 = vunpack.c.l.s4 1934713408
        %v1410 = vunpack.c.0.s8 %v1409
        %v1411 = vlaneseq
        %v1412 = vshrl.u32 %v1411, 7
        %v1413 = vsub.s32 %v1410, %v1412
        %v1414 = vrot.slane %v1400, %v1413
        %v1415 = vcombine.high %v1391, 0.0
        %v1416 = vcombine.high %v1398, 0.0
        %v1417 = vcombine.high %v1407, 0.0
        %v1418 = vcombine.high %v1414, 0.0
        %v1419 = vcombine.low %v1391, %v1398
        %v1421 = vunpack.c.l.s4 1983009808
        %v1422 = vunpack.c.0.s8 %v1421
        %v1423 = vlaneseq
        %v1424 = vshrl.u32 %v1423, 7
        %v1425 = vsub.s32 %v1422, %v1424
        %v1426 = vrot.slane %v1419, %v1425
        %v1427 = vcombine.low %v1415, %v1416
        %v1429 = vunpack.c.l.s4 1983009808
        %v1430 = vunpack.c.0.s8 %v1429
        %v1431 = vlaneseq
        %v1432 = vshrl.u32 %v1431, 7
        %v1433 = vsub.s32 %v1430, %v1432
        %v1434 = vrot.slane %v1427, %v1433
        %v1435 = vcombine.low %v1407, %v1414
        %v1437 = vunpack.c.l.s4 1983009808
        %v1438 = vunpack.c.0.s8 %v1437
        %v1439 = vlaneseq
        %v1440 = vshrl.u32 %v1439, 7
        %v1441 = vsub.s32 %v1438, %v1440
        %v1442 = vrot.slane %v1435, %v1441
        %v1443 = vcombine.low %v1417, %v1418
        %v1445 = vunpack.c.l.s4 1983009808
        %v1446 = vunpack.c.0.s8 %v1445
        %v1447 = vlaneseq
        %v1448 = vshrl.u32 %v1447, 7
        %v1449 = vsub.s32 %v1446, %v1448
        %v1450 = vrot.slane %v1443, %v1449
        %v1451 = vcombine.low %v1426, %v1434
        %v1452 = vcombine.high %v1426, %v1434
        %v1454 = vunpack.c.l.s4 1934713408
        %v1455 = vunpack.c.0.s8 %v1454
        %v1456 = vlaneseq
        %v1457 = vshrl.u32 %v1456, 7
        %v1458 = vsub.s32 %v1455, %v1457
        %v1459 = vrot.slane %v1451, %v1458
        %v1461 = vunpack.c.l.s4 1934713408
        %v1462 = vunpack.c.0.s8 %v1461
        %v1463 = vlaneseq
        %v1464 = vshrl.u32 %v1463, 7
        %v1465 = vsub.s32 %v1462, %v1464
        %v1466 = vrot.slane %v1452, %v1465
        %v1467 = vcombine.low %v1442, %v1450
        %v1468 = vcombine.high %v1442, %v1450
        %v1470 = vunpack.c.l.s4 1934713408
        %v1471 = vunpack.c.0.s8 %v1470
        %v1472 = vlaneseq
        %v1473 = vshrl.u32 %v1472, 7
        %v1474 = vsub.s32 %v1471, %v1473
        %v1475 = vrot.slane %v1467, %v1474
        %v1477 = vunpack.c.l.s4 1934713408
        %v1478 = vunpack.c.0.s8 %v1477
        %v1479 = vlaneseq
        %v1480 = vshrl.u32 %v1479, 7
        %v1481 = vsub.s32 %v1478, %v1480
        %v1482 = vrot.slane %v1468, %v1481
        %v1483 = vcombine.low %v1459, %v1475
        %v1484 = vcombine.high %v1459, %v1475
        %v1485 = vcombine.low %v1466, %v1482
        %v1486 = vcombine.high %v1466, %v1482
        %v1487 = vpack.c.bf16 %v1483, %v1483
        %v1488 = vpack.c.bf16 %v1484, %v1484
        %v1489 = vpack.c.bf16 %v1485, %v1485
        %v1490 = vpack.c.bf16 %v1486, %v1486
        %v1491 = vld [vmem:[#allocation3] sm:$0xf]
        %v1492 = vld [vmem:[#allocation3 + $0x4] sm:$0xf]
        %v1493 = vld [vmem:[#allocation3 + $0x8] sm:$0xf]
        %v1494 = vld [vmem:[#allocation3 + $0xc] sm:$0xf]
        %v1495 = vld [vmem:[#allocation4] sm:$0xf]
        %v1496 = vld [vmem:[#allocation4 + $0x4] sm:$0xf]
        %v1497 = vld [vmem:[#allocation4 + $0x8] sm:$0xf]
        %v1498 = vld [vmem:[#allocation4 + $0xc] sm:$0xf]
        %vm1499 = vcmask 64512
        %v1501 = vsel %vm1499, %v1487, 0
        %v1504 = vsel %vm1499, %v1491, 0
        %1506 = vmatprep.subr.bf16.mxu0 0
        %1507 = vmatpush1.bf16.xpose.msra.mxu0 %v1504
        %1508 = vmatprep.subr.bf16.mxu0 0
        %1509 = vmatpush1.bf16.xpose.msra.mxu0 0
        %1510 = vmatprep.subr.bf16.mxu0 0
        %1511 = vmatpush1.bf16.xpose.msra.mxu0 0
        %1512 = vmatprep.subr.bf16.mxu0 0
        %1513 = vmatpush1.bf16.xpose.msra.mxu0 0
        %1514 = vmatprep.subr.bf16.mxu0 0
        %1515 = vmatpush1.bf16.xpose.msra.mxu0 0
        %1516 = vmatprep.subr.bf16.mxu0 0
        %1517 = vmatpush1.bf16.xpose.msra.mxu0 0
        %1518 = vmatprep.subr.bf16.mxu0 0
        %1519 = vmatpush1.bf16.xpose.msra.mxu0 0
        %1520 = vmatprep.subr.bf16.mxu0 0
        %1521 = vmatpush1.bf16.xpose.msra.mxu0 0
        %1522 = vmatprep.subr.bf16.mxu0 0
        %1523 = vmatpush1.bf16.xpose.msra.mxu0 0
        %1524 = vmatprep.subr.bf16.mxu0 0
        %1525 = vmatpush1.bf16.xpose.msra.mxu0 0
        %1526 = vmatprep.subr.bf16.mxu0 0
        %1527 = vmatpush1.bf16.xpose.msra.mxu0 0
        %1528 = vmatprep.subr.bf16.mxu0 0
        %1529 = vmatpush1.bf16.xpose.msra.mxu0 0
        %1530 = vmatprep.subr.bf16.mxu0 0
        %1531 = vmatpush1.bf16.xpose.msra.mxu0 0
        %1532 = vmatprep.subr.bf16.mxu0 0
        %1533 = vmatpush1.bf16.xpose.msra.mxu0 0
        %1534 = vmatprep.subr.bf16.mxu0 0
        %1535 = vmatpush1.bf16.xpose.msra.mxu0 0
        %1536 = vmatprep.subr.bf16.mxu0 0
        %1537 = vmatpush1.bf16.xpose.msra.mxu0 0
        %1538 = vmatprep.mubr.bf16.mxu0 0
        %1539 = vmatmul.mubr.bf16.gmra.mrb[0].mxu0 %v1501
        %v1540 = vpop.f32.mrb[0].mxu0
        %v1541 = vadd.f32 0.0, %v1540
        %v1542 = vpop.f32.mrb[0].mxu0
        %v1543 = vpop.f32.mrb[0].mxu0
        %v1544 = vpop.f32.mrb[0].mxu0
        %1545 = vdwg.mxu0
        %v1547 = vsel %vm1499, %v1488, 0
        %v1550 = vsel %vm1499, %v1492, 0
        %1552 = vmatprep.subr.bf16.mxu0 0
        %1553 = vmatpush1.bf16.xpose.msra.mxu0 %v1550
        %1554 = vmatprep.subr.bf16.mxu0 0
        %1555 = vmatpush1.bf16.xpose.msra.mxu0 0
        %1556 = vmatprep.subr.bf16.mxu0 0
        %1557 = vmatpush1.bf16.xpose.msra.mxu0 0
        %1558 = vmatprep.subr.bf16.mxu0 0
        %1559 = vmatpush1.bf16.xpose.msra.mxu0 0
        %1560 = vmatprep.subr.bf16.mxu0 0
        %1561 = vmatpush1.bf16.xpose.msra.mxu0 0
        %1562 = vmatprep.subr.bf16.mxu0 0
        %1563 = vmatpush1.bf16.xpose.msra.mxu0 0
        %1564 = vmatprep.subr.bf16.mxu0 0
        %1565 = vmatpush1.bf16.xpose.msra.mxu0 0
        %1566 = vmatprep.subr.bf16.mxu0 0
        %1567 = vmatpush1.bf16.xpose.msra.mxu0 0
        %1568 = vmatprep.subr.bf16.mxu0 0
        %1569 = vmatpush1.bf16.xpose.msra.mxu0 0
        %1570 = vmatprep.subr.bf16.mxu0 0
        %1571 = vmatpush1.bf16.xpose.msra.mxu0 0
        %1572 = vmatprep.subr.bf16.mxu0 0
        %1573 = vmatpush1.bf16.xpose.msra.mxu0 0
        %1574 = vmatprep.subr.bf16.mxu0 0
        %1575 = vmatpush1.bf16.xpose.msra.mxu0 0
        %1576 = vmatprep.subr.bf16.mxu0 0
        %1577 = vmatpush1.bf16.xpose.msra.mxu0 0
        %1578 = vmatprep.subr.bf16.mxu0 0
        %1579 = vmatpush1.bf16.xpose.msra.mxu0 0
        %1580 = vmatprep.subr.bf16.mxu0 0
        %1581 = vmatpush1.bf16.xpose.msra.mxu0 0
        %1582 = vmatprep.subr.bf16.mxu0 0
        %1583 = vmatpush1.bf16.xpose.msra.mxu0 0
        %1584 = vmatprep.mubr.bf16.mxu0 0
        %1585 = vmatmul.mubr.bf16.gmra.mrb[0].mxu0 %v1547
        %v1586 = vpop.f32.mrb[0].mxu0
        %v1587 = vadd.f32 0.0, %v1586
        %v1588 = vpop.f32.mrb[0].mxu0
        %v1589 = vpop.f32.mrb[0].mxu0
        %v1590 = vpop.f32.mrb[0].mxu0
        %1591 = vdwg.mxu0
        %v1593 = vsel %vm1499, %v1489, 0
        %v1596 = vsel %vm1499, %v1493, 0
        %1598 = vmatprep.subr.bf16.mxu0 0
        %1599 = vmatpush1.bf16.xpose.msra.mxu0 %v1596
        %1600 = vmatprep.subr.bf16.mxu0 0
        %1601 = vmatpush1.bf16.xpose.msra.mxu0 0
        %1602 = vmatprep.subr.bf16.mxu0 0
        %1603 = vmatpush1.bf16.xpose.msra.mxu0 0
        %1604 = vmatprep.subr.bf16.mxu0 0
        %1605 = vmatpush1.bf16.xpose.msra.mxu0 0
        %1606 = vmatprep.subr.bf16.mxu0 0
        %1607 = vmatpush1.bf16.xpose.msra.mxu0 0
        %1608 = vmatprep.subr.bf16.mxu0 0
        %1609 = vmatpush1.bf16.xpose.msra.mxu0 0
        %1610 = vmatprep.subr.bf16.mxu0 0
        %1611 = vmatpush1.bf16.xpose.msra.mxu0 0
        %1612 = vmatprep.subr.bf16.mxu0 0
        %1613 = vmatpush1.bf16.xpose.msra.mxu0 0
        %1614 = vmatprep.subr.bf16.mxu0 0
        %1615 = vmatpush1.bf16.xpose.msra.mxu0 0
        %1616 = vmatprep.subr.bf16.mxu0 0
        %1617 = vmatpush1.bf16.xpose.msra.mxu0 0
        %1618 = vmatprep.subr.bf16.mxu0 0
        %1619 = vmatpush1.bf16.xpose.msra.mxu0 0
        %1620 = vmatprep.subr.bf16.mxu0 0
        %1621 = vmatpush1.bf16.xpose.msra.mxu0 0
        %1622 = vmatprep.subr.bf16.mxu0 0
        %1623 = vmatpush1.bf16.xpose.msra.mxu0 0
        %1624 = vmatprep.subr.bf16.mxu0 0
        %1625 = vmatpush1.bf16.xpose.msra.mxu0 0
        %1626 = vmatprep.subr.bf16.mxu0 0
        %1627 = vmatpush1.bf16.xpose.msra.mxu0 0
        %1628 = vmatprep.subr.bf16.mxu0 0
        %1629 = vmatpush1.bf16.xpose.msra.mxu0 0
        %1630 = vmatprep.mubr.bf16.mxu0 0
        %1631 = vmatmul.mubr.bf16.gmra.mrb[0].mxu0 %v1593
        %v1632 = vpop.f32.mrb[0].mxu0
        %v1633 = vadd.f32 0.0, %v1632
        %v1634 = vpop.f32.mrb[0].mxu0
        %v1635 = vpop.f32.mrb[0].mxu0
        %v1636 = vpop.f32.mrb[0].mxu0
        %1637 = vdwg.mxu0
        %v1639 = vsel %vm1499, %v1490, 0
        %v1642 = vsel %vm1499, %v1494, 0
        %1644 = vmatprep.subr.bf16.mxu0 0
        %1645 = vmatpush1.bf16.xpose.msra.mxu0 %v1642
        %1646 = vmatprep.subr.bf16.mxu0 0
        %1647 = vmatpush1.bf16.xpose.msra.mxu0 0
        %1648 = vmatprep.subr.bf16.mxu0 0
        %1649 = vmatpush1.bf16.xpose.msra.mxu0 0
        %1650 = vmatprep.subr.bf16.mxu0 0
        %1651 = vmatpush1.bf16.xpose.msra.mxu0 0
        %1652 = vmatprep.subr.bf16.mxu0 0
        %1653 = vmatpush1.bf16.xpose.msra.mxu0 0
        %1654 = vmatprep.subr.bf16.mxu0 0
        %1655 = vmatpush1.bf16.xpose.msra.mxu0 0
        %1656 = vmatprep.subr.bf16.mxu0 0
        %1657 = vmatpush1.bf16.xpose.msra.mxu0 0
        %1658 = vmatprep.subr.bf16.mxu0 0
        %1659 = vmatpush1.bf16.xpose.msra.mxu0 0
        %1660 = vmatprep.subr.bf16.mxu0 0
        %1661 = vmatpush1.bf16.xpose.msra.mxu0 0
        %1662 = vmatprep.subr.bf16.mxu0 0
        %1663 = vmatpush1.bf16.xpose.msra.mxu0 0
        %1664 = vmatprep.subr.bf16.mxu0 0
        %1665 = vmatpush1.bf16.xpose.msra.mxu0 0
        %1666 = vmatprep.subr.bf16.mxu0 0
        %1667 = vmatpush1.bf16.xpose.msra.mxu0 0
        %1668 = vmatprep.subr.bf16.mxu0 0
        %1669 = vmatpush1.bf16.xpose.msra.mxu0 0
        %1670 = vmatprep.subr.bf16.mxu0 0
        %1671 = vmatpush1.bf16.xpose.msra.mxu0 0
        %1672 = vmatprep.subr.bf16.mxu0 0
        %1673 = vmatpush1.bf16.xpose.msra.mxu0 0
        %1674 = vmatprep.subr.bf16.mxu0 0
        %1675 = vmatpush1.bf16.xpose.msra.mxu0 0
        %1676 = vmatprep.mubr.bf16.mxu0 0
        %1677 = vmatmul.mubr.bf16.gmra.mrb[0].mxu0 %v1639
        %v1678 = vpop.f32.mrb[0].mxu0
        %v1679 = vadd.f32 0.0, %v1678
        %v1680 = vpop.f32.mrb[0].mxu0
        %v1681 = vpop.f32.mrb[0].mxu0
        %v1682 = vpop.f32.mrb[0].mxu0
        %1683 = vdwg.mxu0
        %v1684 = vsel %vm1499, %v1541, -inf
        %1685 = vmax.xlane.f32.xlu0 %v1684
        %v1686 = vpop.xlane.xlu0 %1685
        %v1687 = vsel %vm1499, %v1587, -inf
        %1688 = vmax.xlane.f32.xlu0 %v1687
        %v1689 = vpop.xlane.xlu0 %1688
        %v1690 = vsel %vm1499, %v1633, -inf
        %1691 = vmax.xlane.f32.xlu0 %v1690
        %v1692 = vpop.xlane.xlu0 %1691
        %v1693 = vsel %vm1499, %v1679, -inf
        %1694 = vmax.xlane.f32.xlu0 %v1693
        %v1695 = vpop.xlane.xlu0 %1694
        %v1696 = vsub.f32 %v1541, %v1686
        %v1697 = vsub.f32 %v1587, %v1689
        %v1698 = vsub.f32 %v1633, %v1692
        %v1699 = vsub.f32 %v1679, %v1695
        %v1700 = vmul.f32 %v1696, 1.442695
        %v1701 = vpow.pop %v1700
        %v1702 = vmul.f32 %v1697, 1.442695
        %v1703 = vpow.pop %v1702
        %v1704 = vmul.f32 %v1698, 1.442695
        %v1705 = vpow.pop %v1704
        %v1706 = vmul.f32 %v1699, 1.442695
        %v1707 = vpow.pop %v1706
        %v1708 = vsel %vm1499, %v1701, 0.0
        %1709 = vadd.xlane.f32.xlu0 %v1708
        %v1710 = vpop.xlane.xlu0 %1709
        %v1711 = vsel %vm1499, %v1703, 0.0
        %1712 = vadd.xlane.f32.xlu0 %v1711
        %v1713 = vpop.xlane.xlu0 %1712
        %v1714 = vsel %vm1499, %v1705, 0.0
        %1715 = vadd.xlane.f32.xlu0 %v1714
        %v1716 = vpop.xlane.xlu0 %1715
        %v1717 = vsel %vm1499, %v1707, 0.0
        %1718 = vadd.xlane.f32.xlu0 %v1717
        %v1719 = vpop.xlane.xlu0 %1718
        %v1720 = vpack.c.bf16 %v1701, %v1701
        %v1721 = vpack.c.bf16 %v1703, %v1703
        %v1722 = vpack.c.bf16 %v1705, %v1705
        %v1723 = vpack.c.bf16 %v1707, %v1707
        %v1725 = vsel %vm1499, %v1720, 0
        %vm1727 = vcmask 1043456
        %v1729 = vsel %vm1727, %v1495, 0
        %1731 = vmatprep.subr.bf16.mxu0 0
        %1732 = vmatpush1.bf16.msra.mxu0 %v1729
        %1733 = vmatprep.subr.bf16.mxu0 0
        %1734 = vmatpush1.bf16.msra.mxu0 0
        %1735 = vmatprep.subr.bf16.mxu0 0
        %1736 = vmatpush1.bf16.msra.mxu0 0
        %1737 = vmatprep.subr.bf16.mxu0 0
        %1738 = vmatpush1.bf16.msra.mxu0 0
        %1739 = vmatprep.subr.bf16.mxu0 0
        %1740 = vmatpush1.bf16.msra.mxu0 0
        %1741 = vmatprep.subr.bf16.mxu0 0
        %1742 = vmatpush1.bf16.msra.mxu0 0
        %1743 = vmatprep.subr.bf16.mxu0 0
        %1744 = vmatpush1.bf16.msra.mxu0 0
        %1745 = vmatprep.subr.bf16.mxu0 0
        %1746 = vmatpush1.bf16.msra.mxu0 0
        %1747 = vmatprep.subr.bf16.mxu0 0
        %1748 = vmatpush1.bf16.msra.mxu0 0
        %1749 = vmatprep.subr.bf16.mxu0 0
        %1750 = vmatpush1.bf16.msra.mxu0 0
        %1751 = vmatprep.subr.bf16.mxu0 0
        %1752 = vmatpush1.bf16.msra.mxu0 0
        %1753 = vmatprep.subr.bf16.mxu0 0
        %1754 = vmatpush1.bf16.msra.mxu0 0
        %1755 = vmatprep.subr.bf16.mxu0 0
        %1756 = vmatpush1.bf16.msra.mxu0 0
        %1757 = vmatprep.subr.bf16.mxu0 0
        %1758 = vmatpush1.bf16.msra.mxu0 0
        %1759 = vmatprep.subr.bf16.mxu0 0
        %1760 = vmatpush1.bf16.msra.mxu0 0
        %1761 = vmatprep.subr.bf16.mxu0 0
        %1762 = vmatpush1.bf16.msra.mxu0 0
        %1763 = vmatprep.mubr.bf16.mxu0 0
        %1764 = vmatmul.mubr.bf16.gmra.mrb[0].mxu0 %v1725
        %v1765 = vpop.f32.mrb[0].mxu0
        %v1766 = vadd.f32 0.0, %v1765
        %v1767 = vpop.f32.mrb[0].mxu0
        %v1768 = vpop.f32.mrb[0].mxu0
        %v1769 = vpop.f32.mrb[0].mxu0
        %1770 = vdwg.mxu0
        %v1772 = vsel %vm1499, %v1721, 0
        %v1775 = vsel %vm1727, %v1496, 0
        %1777 = vmatprep.subr.bf16.mxu0 0
        %1778 = vmatpush1.bf16.msra.mxu0 %v1775
        %1779 = vmatprep.subr.bf16.mxu0 0
        %1780 = vmatpush1.bf16.msra.mxu0 0
        %1781 = vmatprep.subr.bf16.mxu0 0
        %1782 = vmatpush1.bf16.msra.mxu0 0
        %1783 = vmatprep.subr.bf16.mxu0 0
        %1784 = vmatpush1.bf16.msra.mxu0 0
        %1785 = vmatprep.subr.bf16.mxu0 0
        %1786 = vmatpush1.bf16.msra.mxu0 0
        %1787 = vmatprep.subr.bf16.mxu0 0
        %1788 = vmatpush1.bf16.msra.mxu0 0
        %1789 = vmatprep.subr.bf16.mxu0 0
        %1790 = vmatpush1.bf16.msra.mxu0 0
        %1791 = vmatprep.subr.bf16.mxu0 0
        %1792 = vmatpush1.bf16.msra.mxu0 0
        %1793 = vmatprep.subr.bf16.mxu0 0
        %1794 = vmatpush1.bf16.msra.mxu0 0
        %1795 = vmatprep.subr.bf16.mxu0 0
        %1796 = vmatpush1.bf16.msra.mxu0 0
        %1797 = vmatprep.subr.bf16.mxu0 0
        %1798 = vmatpush1.bf16.msra.mxu0 0
        %1799 = vmatprep.subr.bf16.mxu0 0
        %1800 = vmatpush1.bf16.msra.mxu0 0
        %1801 = vmatprep.subr.bf16.mxu0 0
        %1802 = vmatpush1.bf16.msra.mxu0 0
        %1803 = vmatprep.subr.bf16.mxu0 0
        %1804 = vmatpush1.bf16.msra.mxu0 0
        %1805 = vmatprep.subr.bf16.mxu0 0
        %1806 = vmatpush1.bf16.msra.mxu0 0
        %1807 = vmatprep.subr.bf16.mxu0 0
        %1808 = vmatpush1.bf16.msra.mxu0 0
        %1809 = vmatprep.mubr.bf16.mxu0 0
        %1810 = vmatmul.mubr.bf16.gmra.mrb[0].mxu0 %v1772
        %v1811 = vpop.f32.mrb[0].mxu0
        %v1812 = vadd.f32 0.0, %v1811
        %v1813 = vpop.f32.mrb[0].mxu0
        %v1814 = vpop.f32.mrb[0].mxu0
        %v1815 = vpop.f32.mrb[0].mxu0
        %1816 = vdwg.mxu0
        %v1818 = vsel %vm1499, %v1722, 0
        %v1821 = vsel %vm1727, %v1497, 0
        %1823 = vmatprep.subr.bf16.mxu0 0
        %1824 = vmatpush1.bf16.msra.mxu0 %v1821
        %1825 = vmatprep.subr.bf16.mxu0 0
        %1826 = vmatpush1.bf16.msra.mxu0 0
        %1827 = vmatprep.subr.bf16.mxu0 0
        %1828 = vmatpush1.bf16.msra.mxu0 0
        %1829 = vmatprep.subr.bf16.mxu0 0
        %1830 = vmatpush1.bf16.msra.mxu0 0
        %1831 = vmatprep.subr.bf16.mxu0 0
        %1832 = vmatpush1.bf16.msra.mxu0 0
        %1833 = vmatprep.subr.bf16.mxu0 0
        %1834 = vmatpush1.bf16.msra.mxu0 0
        %1835 = vmatprep.subr.bf16.mxu0 0
        %1836 = vmatpush1.bf16.msra.mxu0 0
        %1837 = vmatprep.subr.bf16.mxu0 0
        %1838 = vmatpush1.bf16.msra.mxu0 0
        %1839 = vmatprep.subr.bf16.mxu0 0
        %1840 = vmatpush1.bf16.msra.mxu0 0
        %1841 = vmatprep.subr.bf16.mxu0 0
        %1842 = vmatpush1.bf16.msra.mxu0 0
        %1843 = vmatprep.subr.bf16.mxu0 0
        %1844 = vmatpush1.bf16.msra.mxu0 0
        %1845 = vmatprep.subr.bf16.mxu0 0
        %1846 = vmatpush1.bf16.msra.mxu0 0
        %1847 = vmatprep.subr.bf16.mxu0 0
        %1848 = vmatpush1.bf16.msra.mxu0 0
        %1849 = vmatprep.subr.bf16.mxu0 0
        %1850 = vmatpush1.bf16.msra.mxu0 0
        %1851 = vmatprep.subr.bf16.mxu0 0
        %1852 = vmatpush1.bf16.msra.mxu0 0
        %1853 = vmatprep.subr.bf16.mxu0 0
        %1854 = vmatpush1.bf16.msra.mxu0 0
        %1855 = vmatprep.mubr.bf16.mxu0 0
        %1856 = vmatmul.mubr.bf16.gmra.mrb[0].mxu0 %v1818
        %v1857 = vpop.f32.mrb[0].mxu0
        %v1858 = vadd.f32 0.0, %v1857
        %v1859 = vpop.f32.mrb[0].mxu0
        %v1860 = vpop.f32.mrb[0].mxu0
        %v1861 = vpop.f32.mrb[0].mxu0
        %1862 = vdwg.mxu0
        %v1864 = vsel %vm1499, %v1723, 0
        %v1867 = vsel %vm1727, %v1498, 0
        %1869 = vmatprep.subr.bf16.mxu0 0
        %1870 = vmatpush1.bf16.msra.mxu0 %v1867
        %1871 = vmatprep.subr.bf16.mxu0 0
        %1872 = vmatpush1.bf16.msra.mxu0 0
        %1873 = vmatprep.subr.bf16.mxu0 0
        %1874 = vmatpush1.bf16.msra.mxu0 0
        %1875 = vmatprep.subr.bf16.mxu0 0
        %1876 = vmatpush1.bf16.msra.mxu0 0
        %1877 = vmatprep.subr.bf16.mxu0 0
        %1878 = vmatpush1.bf16.msra.mxu0 0
        %1879 = vmatprep.subr.bf16.mxu0 0
        %1880 = vmatpush1.bf16.msra.mxu0 0
        %1881 = vmatprep.subr.bf16.mxu0 0
        %1882 = vmatpush1.bf16.msra.mxu0 0
        %1883 = vmatprep.subr.bf16.mxu0 0
        %1884 = vmatpush1.bf16.msra.mxu0 0
        %1885 = vmatprep.subr.bf16.mxu0 0
        %1886 = vmatpush1.bf16.msra.mxu0 0
        %1887 = vmatprep.subr.bf16.mxu0 0
        %1888 = vmatpush1.bf16.msra.mxu0 0
        %1889 = vmatprep.subr.bf16.mxu0 0
        %1890 = vmatpush1.bf16.msra.mxu0 0
        %1891 = vmatprep.subr.bf16.mxu0 0
        %1892 = vmatpush1.bf16.msra.mxu0 0
        %1893 = vmatprep.subr.bf16.mxu0 0
        %1894 = vmatpush1.bf16.msra.mxu0 0
        %1895 = vmatprep.subr.bf16.mxu0 0
        %1896 = vmatpush1.bf16.msra.mxu0 0
        %1897 = vmatprep.subr.bf16.mxu0 0
        %1898 = vmatpush1.bf16.msra.mxu0 0
        %1899 = vmatprep.subr.bf16.mxu0 0
        %1900 = vmatpush1.bf16.msra.mxu0 0
        %1901 = vmatprep.mubr.bf16.mxu0 0
        %1902 = vmatmul.mubr.bf16.gmra.mrb[0].mxu0 %v1864
        %v1903 = vpop.f32.mrb[0].mxu0
        %v1904 = vadd.f32 0.0, %v1903
        %v1905 = vpop.f32.mrb[0].mxu0
        %v1906 = vpop.f32.mrb[0].mxu0
        %v1907 = vpop.f32.mrb[0].mxu0
        %1908 = vdwg.mxu0
        %v1909 = vrcp.pop %v1710
        %v1910 = vrcp.pop %v1713
        %v1911 = vrcp.pop %v1716
        %v1912 = vrcp.pop %v1719
        %v1913 = vmul.f32 %v1766, %v1909
        %v1914 = vmul.f32 %v1812, %v1910
        %v1915 = vmul.f32 %v1858, %v1911
        %v1916 = vmul.f32 %v1904, %v1912
        %v1917 = vcombine.low %v1913, %v1915
        %v1918 = vcombine.high %v1913, %v1915
        %v1920 = vunpack.c.l.s4 1983009808
        %v1921 = vunpack.c.0.s8 %v1920
        %v1922 = vlaneseq
        %v1923 = vshrl.u32 %v1922, 7
        %v1924 = vsub.s32 %v1921, %v1923
        %v1925 = vrot.slane %v1917, %v1924
        %v1927 = vunpack.c.l.s4 1983009808
        %v1928 = vunpack.c.0.s8 %v1927
        %v1929 = vlaneseq
        %v1930 = vshrl.u32 %v1929, 7
        %v1931 = vsub.s32 %v1928, %v1930
        %v1932 = vrot.slane %v1918, %v1931
        %v1933 = vcombine.low %v1914, %v1916
        %v1934 = vcombine.high %v1914, %v1916
        %v1936 = vunpack.c.l.s4 1983009808
        %v1937 = vunpack.c.0.s8 %v1936
        %v1938 = vlaneseq
        %v1939 = vshrl.u32 %v1938, 7
        %v1940 = vsub.s32 %v1937, %v1939
        %v1941 = vrot.slane %v1933, %v1940
        %v1943 = vunpack.c.l.s4 1983009808
        %v1944 = vunpack.c.0.s8 %v1943
        %v1945 = vlaneseq
        %v1946 = vshrl.u32 %v1945, 7
        %v1947 = vsub.s32 %v1944, %v1946
        %v1948 = vrot.slane %v1934, %v1947
        %v1949 = vcombine.low %v1925, %v1941
        %v1950 = vcombine.high %v1925, %v1941
        %v1952 = vunpack.c.l.s4 1934713408
        %v1953 = vunpack.c.0.s8 %v1952
        %v1954 = vlaneseq
        %v1955 = vshrl.u32 %v1954, 7
        %v1956 = vsub.s32 %v1953, %v1955
        %v1957 = vrot.slane %v1949, %v1956
        %v1959 = vunpack.c.l.s4 1934713408
        %v1960 = vunpack.c.0.s8 %v1959
        %v1961 = vlaneseq
        %v1962 = vshrl.u32 %v1961, 7
        %v1963 = vsub.s32 %v1960, %v1962
        %v1964 = vrot.slane %v1950, %v1963
        %v1965 = vcombine.low %v1932, %v1948
        %v1966 = vcombine.high %v1932, %v1948
        %v1968 = vunpack.c.l.s4 1934713408
        %v1969 = vunpack.c.0.s8 %v1968
        %v1970 = vlaneseq
        %v1971 = vshrl.u32 %v1970, 7
        %v1972 = vsub.s32 %v1969, %v1971
        %v1973 = vrot.slane %v1965, %v1972
        %v1975 = vunpack.c.l.s4 1934713408
        %v1976 = vunpack.c.0.s8 %v1975
        %v1977 = vlaneseq
        %v1978 = vshrl.u32 %v1977, 7
        %v1979 = vsub.s32 %v1976, %v1978
        %v1980 = vrot.slane %v1966, %v1979
        %v1981 = vcombine.high %v1957, 0.0
        %v1982 = vcombine.high %v1964, 0.0
        %v1983 = vcombine.high %v1973, 0.0
        %v1984 = vcombine.high %v1980, 0.0
        %v1985 = vcombine.low %v1957, %v1964
        %v1987 = vunpack.c.l.s4 1983009808
        %v1988 = vunpack.c.0.s8 %v1987
        %v1989 = vlaneseq
        %v1990 = vshrl.u32 %v1989, 7
        %v1991 = vsub.s32 %v1988, %v1990
        %v1992 = vrot.slane %v1985, %v1991
        %v1993 = vcombine.low %v1981, %v1982
        %v1995 = vunpack.c.l.s4 1983009808
        %v1996 = vunpack.c.0.s8 %v1995
        %v1997 = vlaneseq
        %v1998 = vshrl.u32 %v1997, 7
        %v1999 = vsub.s32 %v1996, %v1998
        %v2000 = vrot.slane %v1993, %v1999
        %v2001 = vcombine.low %v1973, %v1980
        %v2003 = vunpack.c.l.s4 1983009808
        %v2004 = vunpack.c.0.s8 %v2003
        %v2005 = vlaneseq
        %v2006 = vshrl.u32 %v2005, 7
        %v2007 = vsub.s32 %v2004, %v2006
        %v2008 = vrot.slane %v2001, %v2007
        %v2009 = vcombine.low %v1983, %v1984
        %v2011 = vunpack.c.l.s4 1983009808
        %v2012 = vunpack.c.0.s8 %v2011
        %v2013 = vlaneseq
        %v2014 = vshrl.u32 %v2013, 7
        %v2015 = vsub.s32 %v2012, %v2014
        %v2016 = vrot.slane %v2009, %v2015
        %v2017 = vcombine.low %v1992, %v2000
        %v2018 = vcombine.high %v1992, %v2000
        %v2020 = vunpack.c.l.s4 1934713408
        %v2021 = vunpack.c.0.s8 %v2020
        %v2022 = vlaneseq
        %v2023 = vshrl.u32 %v2022, 7
        %v2024 = vsub.s32 %v2021, %v2023
        %v2025 = vrot.slane %v2017, %v2024
        %v2027 = vunpack.c.l.s4 1934713408
        %v2028 = vunpack.c.0.s8 %v2027
        %v2029 = vlaneseq
        %v2030 = vshrl.u32 %v2029, 7
        %v2031 = vsub.s32 %v2028, %v2030
        %v2032 = vrot.slane %v2018, %v2031
        %v2033 = vcombine.low %v2008, %v2016
        %v2034 = vcombine.high %v2008, %v2016
        %v2036 = vunpack.c.l.s4 1934713408
        %v2037 = vunpack.c.0.s8 %v2036
        %v2038 = vlaneseq
        %v2039 = vshrl.u32 %v2038, 7
        %v2040 = vsub.s32 %v2037, %v2039
        %v2041 = vrot.slane %v2033, %v2040
        %v2043 = vunpack.c.l.s4 1934713408
        %v2044 = vunpack.c.0.s8 %v2043
        %v2045 = vlaneseq
        %v2046 = vshrl.u32 %v2045, 7
        %v2047 = vsub.s32 %v2044, %v2046
        %v2048 = vrot.slane %v2034, %v2047
        %v2049 = vcombine.low %v2025, %v2041
        %v2050 = vcombine.high %v2025, %v2041
        %v2051 = vcombine.low %v2032, %v2048
        %v2052 = vcombine.high %v2032, %v2048
        %2054 = vrot.lane.b32.xlu0 %v2050, 8
        %v2055 = vpop.permute.xlu0 %2054
        %2058 = vrot.lane.b32.xlu0 %v2051, 16
        %v2059 = vpop.permute.xlu0 %2058
        %2062 = vrot.lane.b32.xlu0 %v2052, 24
        %v2063 = vpop.permute.xlu0 %2062
        %v2065 = vsel %vm1499, %v2049, %v2055
        %vm2066 = vcmask 130048
        %v2067 = vsel %vm2066, %v2065, %v2059
        %vm2068 = vcmask 195584
        %v2069 = vsel %vm2068, %v2067, %v2063
        %v2070 = vpack.c.bf16 %v2069, %v2069
        %v2071 = vld [vmem:[#allocation20] sm:$0xf]
        %v2072 = vld [vmem:[#allocation20 + $0x4] sm:$0xf]
        %v2073 = vld [vmem:[#allocation20 + $0x8] sm:$0xf]
        %v2074 = vld [vmem:[#allocation20 + $0xc] sm:$0xf]
        %v2075 = vld [vmem:[#allocation22] sm:$0x1]
        %v2077 = vlaneseq
        %v2078 = vshrl.u32 %v2077, 7
        %v2079 = vsub.s32 0, %v2078
        %v2080 = vrot.slane %v2075, %v2079
        %v2086 = vunpack.c.l.b16 %v2071
        %v2087 = vunpack.c.l.b16 %v2072
        %v2088 = vunpack.c.l.b16 %v2073
        %v2089 = vunpack.c.l.b16 %v2074
        %v2090 = vpack.c.b16 %v2087, %v2086
        %v2091 = vpack.c.b16 %v2089, %v2088
        %v2095 = vsel %vm1297, %v2070, 0
        %2097 = vmatprep.subr.bf16.mxu0 0
        %2098 = vmatpush1.bf16.msra.mxu0 %v2090
        %2099 = vmatprep.subr.bf16.mxu0 0
        %2100 = vmatpush1.bf16.msra.mxu0 %v2091
        %2101 = vmatprep.subr.bf16.mxu0 0
        %2102 = vmatpush1.bf16.msra.mxu0 0
        %2103 = vmatprep.subr.bf16.mxu0 0
        %2104 = vmatpush1.bf16.msra.mxu0 0
        %2105 = vmatprep.subr.bf16.mxu0 0
        %2106 = vmatpush1.bf16.msra.mxu0 0
        %2107 = vmatprep.subr.bf16.mxu0 0
        %2108 = vmatpush1.bf16.msra.mxu0 0
        %2109 = vmatprep.subr.bf16.mxu0 0
        %2110 = vmatpush1.bf16.msra.mxu0 0
        %2111 = vmatprep.subr.bf16.mxu0 0
        %2112 = vmatpush1.bf16.msra.mxu0 0
        %2113 = vmatprep.subr.bf16.mxu0 0
        %2114 = vmatpush1.bf16.msra.mxu0 0
        %2115 = vmatprep.subr.bf16.mxu0 0
        %2116 = vmatpush1.bf16.msra.mxu0 0
        %2117 = vmatprep.subr.bf16.mxu0 0
        %2118 = vmatpush1.bf16.msra.mxu0 0
        %2119 = vmatprep.subr.bf16.mxu0 0
        %2120 = vmatpush1.bf16.msra.mxu0 0
        %2121 = vmatprep.subr.bf16.mxu0 0
        %2122 = vmatpush1.bf16.msra.mxu0 0
        %2123 = vmatprep.subr.bf16.mxu0 0
        %2124 = vmatpush1.bf16.msra.mxu0 0
        %2125 = vmatprep.subr.bf16.mxu0 0
        %2126 = vmatpush1.bf16.msra.mxu0 0
        %2127 = vmatprep.subr.bf16.mxu0 0
        %2128 = vmatpush1.bf16.msra.mxu0 0
        %2129 = vmatprep.mubr.bf16.mxu0 0
        %2130 = vmatmul.mubr.bf16.gmra.mrb[0].mxu0 %v2095
        %v2131 = vpop.f32.mrb[0].mxu0
        %v2132 = vadd.f32 %v2080, %v2131
        %v2133 = vpop.f32.mrb[0].mxu0
        %v2134 = vpop.f32.mrb[0].mxu0
        %v2135 = vpop.f32.mrb[0].mxu0
        %2136 = vdwg.mxu0
        %s2137 = scalar_lea.vmem %s675, %s791 [#allocation5]
        %v2138 = vld [vmem:[%s2137] sm:$0xff]
        %v2139 = vadd.f32 %v2138, %v2132
        %v2140 = vld [vmem:[#allocation23] sm:$0x1]
        %v2141 = vld [vmem:[#allocation25] sm:$0x1]
        %v2142 = vsel %vm1297, %v2139, 0.0
        %2143 = vadd.xlane.f32.xlu0 %v2142
        %v2144 = vpop.xlane.xlu0 %2143
        %v2145 = vrcp.pop 32.0
        %v2146 = vmul.f32 %v2144, %v2145
        %v2147 = vsub.f32 %v2139, %v2146
        %v2148 = vmul.f32 %v2147, %v2147
        %v2149 = vsel %vm1297, %v2148, 0.0
        %2150 = vadd.xlane.f32.xlu0 %v2149
        %v2151 = vpop.xlane.xlu0 %2150
        %v2152 = vmul.f32 %v2151, %v2145
        %v2153 = vadd.f32 %v2152, 1e-05
        %v2154 = vrsqrt.pop %v2153
        %v2155 = vmul.f32 %v2147, %v2154
        %v2157 = vlaneseq
        %v2158 = vshrl.u32 %v2157, 7
        %v2159 = vsub.s32 0, %v2158
        %v2160 = vrot.slane %v2140, %v2159
        %v2162 = vmul.f32 %v2155, %v2160
        %v2164 = vlaneseq
        %v2165 = vshrl.u32 %v2164, 7
        %v2166 = vsub.s32 0, %v2165
        %v2167 = vrot.slane %v2141, %v2166
        %v2169 = vadd.f32 %v2162, %v2167
        %v2170 = vpack.c.bf16 %v2169, %v2169
        %v2171 = vld [vmem:[#allocation26] sm:$0xf]
        %v2172 = vld [vmem:[#allocation26 + $0x4] sm:$0xf]
        %v2173 = vld [vmem:[#allocation26 + $0x8] sm:$0xf]
        %v2174 = vld [vmem:[#allocation26 + $0xc] sm:$0xf]
        %v2175 = vld [vmem:[#allocation28] sm:$0x1]
        %v2177 = vlaneseq
        %v2178 = vshrl.u32 %v2177, 7
        %v2179 = vsub.s32 0, %v2178
        %v2180 = vrot.slane %v2175, %v2179
        %v2186 = vunpack.c.l.b16 %v2171
        %v2187 = vunpack.c.l.b16 %v2172
        %v2188 = vunpack.c.l.b16 %v2173
        %v2189 = vunpack.c.l.b16 %v2174
        %v2190 = vpack.c.b16 %v2187, %v2186
        %v2191 = vpack.c.b16 %v2189, %v2188
        %v2195 = vsel %vm1297, %v2170, 0
        %2197 = vmatprep.subr.bf16.mxu0 0
        %2198 = vmatpush1.bf16.msra.mxu0 %v2190
        %2199 = vmatprep.subr.bf16.mxu0 0
        %2200 = vmatpush1.bf16.msra.mxu0 %v2191
        %2201 = vmatprep.subr.bf16.mxu0 0
        %2202 = vmatpush1.bf16.msra.mxu0 0
        %2203 = vmatprep.subr.bf16.mxu0 0
        %2204 = vmatpush1.bf16.msra.mxu0 0
        %2205 = vmatprep.subr.bf16.mxu0 0
        %2206 = vmatpush1.bf16.msra.mxu0 0
        %2207 = vmatprep.subr.bf16.mxu0 0
        %2208 = vmatpush1.bf16.msra.mxu0 0
        %2209 = vmatprep.subr.bf16.mxu0 0
        %2210 = vmatpush1.bf16.msra.mxu0 0
        %2211 = vmatprep.subr.bf16.mxu0 0
        %2212 = vmatpush1.bf16.msra.mxu0 0
        %2213 = vmatprep.subr.bf16.mxu0 0
        %2214 = vmatpush1.bf16.msra.mxu0 0
        %2215 = vmatprep.subr.bf16.mxu0 0
        %2216 = vmatpush1.bf16.msra.mxu0 0
        %2217 = vmatprep.subr.bf16.mxu0 0
        %2218 = vmatpush1.bf16.msra.mxu0 0
        %2219 = vmatprep.subr.bf16.mxu0 0
        %2220 = vmatpush1.bf16.msra.mxu0 0
        %2221 = vmatprep.subr.bf16.mxu0 0
        %2222 = vmatpush1.bf16.msra.mxu0 0
        %2223 = vmatprep.subr.bf16.mxu0 0
        %2224 = vmatpush1.bf16.msra.mxu0 0
        %2225 = vmatprep.subr.bf16.mxu0 0
        %2226 = vmatpush1.bf16.msra.mxu0 0
        %2227 = vmatprep.subr.bf16.mxu0 0
        %2228 = vmatpush1.bf16.msra.mxu0 0
        %2229 = vmatprep.mubr.bf16.mxu0 0
        %2230 = vmatmul.mubr.bf16.gmra.mrb[0].mxu0 %v2195
        %v2231 = vpop.f32.mrb[0].mxu0
        %v2232 = vadd.f32 %v2180, %v2231
        %v2233 = vpop.f32.mrb[0].mxu0
        %v2234 = vpop.f32.mrb[0].mxu0
        %v2235 = vpop.f32.mrb[0].mxu0
        %2236 = vdwg.mxu0
        %v2237 = vmul.f32 %v2232, 1.702
        %v2238 = vxor.u32 %v2237, 2147483648
        %v2239 = vmul.f32 %v2238, 1.442695
        %v2240 = vpow.pop %v2239
        %v2241 = vadd.f32 %v2240, 1.0
        %v2242 = vrcp.pop %v2241
        %v2243 = vmul.f32 1.0, %v2242
        %v2244 = vmul.f32 %v2232, %v2243
        %v2245 = vpack.c.bf16 %v2244, %v2244
        %v2246 = vld [vmem:[#allocation29] sm:$0xf]
        %v2247 = vld [vmem:[#allocation29 + $0x4] sm:$0xf]
        %v2248 = vld [vmem:[#allocation29 + $0x8] sm:$0xf]
        %v2249 = vld [vmem:[#allocation29 + $0xc] sm:$0xf]
        %v2250 = vld [vmem:[#allocation29 + $0x10] sm:$0xf]
        %v2251 = vld [vmem:[#allocation29 + $0x14] sm:$0xf]
        %v2252 = vld [vmem:[#allocation29 + $0x18] sm:$0xf]
        %v2253 = vld [vmem:[#allocation29 + $0x1c] sm:$0xf]
        %v2254 = vld [vmem:[#allocation29 + $0x20] sm:$0xf]
        %v2255 = vld [vmem:[#allocation29 + $0x24] sm:$0xf]
        %v2256 = vld [vmem:[#allocation29 + $0x28] sm:$0xf]
        %v2257 = vld [vmem:[#allocation29 + $0x2c] sm:$0xf]
        %v2258 = vld [vmem:[#allocation29 + $0x30] sm:$0xf]
        %v2259 = vld [vmem:[#allocation29 + $0x34] sm:$0xf]
        %v2260 = vld [vmem:[#allocation29 + $0x38] sm:$0xf]
        %v2261 = vld [vmem:[#allocation29 + $0x3c] sm:$0xf]
        %v2262 = vld [vmem:[#allocation31] sm:$0x1]
        %v2264 = vlaneseq
        %v2265 = vshrl.u32 %v2264, 7
        %v2266 = vsub.s32 0, %v2265
        %v2267 = vrot.slane %v2262, %v2266
        %v2285 = vunpack.c.l.b16 %v2246
        %v2286 = vunpack.c.l.b16 %v2247
        %v2287 = vunpack.c.l.b16 %v2248
        %v2288 = vunpack.c.l.b16 %v2249
        %v2289 = vunpack.c.l.b16 %v2250
        %v2290 = vunpack.c.l.b16 %v2251
        %v2291 = vunpack.c.l.b16 %v2252
        %v2292 = vunpack.c.l.b16 %v2253
        %v2293 = vunpack.c.l.b16 %v2254
        %v2294 = vunpack.c.l.b16 %v2255
        %v2295 = vunpack.c.l.b16 %v2256
        %v2296 = vunpack.c.l.b16 %v2257
        %v2297 = vunpack.c.l.b16 %v2258
        %v2298 = vunpack.c.l.b16 %v2259
        %v2299 = vunpack.c.l.b16 %v2260
        %v2300 = vunpack.c.l.b16 %v2261
        %v2301 = vpack.c.b16 %v2286, %v2285
        %v2302 = vpack.c.b16 %v2288, %v2287
        %v2303 = vpack.c.b16 %v2290, %v2289
        %v2304 = vpack.c.b16 %v2292, %v2291
        %v2305 = vpack.c.b16 %v2294, %v2293
        %v2306 = vpack.c.b16 %v2296, %v2295
        %v2307 = vpack.c.b16 %v2298, %v2297
        %v2308 = vpack.c.b16 %v2300, %v2299
        %2317 = vmatprep.subr.bf16.mxu0 0
        %2318 = vmatpush1.bf16.msra.mxu0 %v2301
        %2319 = vmatprep.subr.bf16.mxu0 0
        %2320 = vmatpush1.bf16.msra.mxu0 %v2302
        %2321 = vmatprep.subr.bf16.mxu0 0
        %2322 = vmatpush1.bf16.msra.mxu0 %v2303
        %2323 = vmatprep.subr.bf16.mxu0 0
        %2324 = vmatpush1.bf16.msra.mxu0 %v2304
        %2325 = vmatprep.subr.bf16.mxu0 0
        %2326 = vmatpush1.bf16.msra.mxu0 %v2305
        %2327 = vmatprep.subr.bf16.mxu0 0
        %2328 = vmatpush1.bf16.msra.mxu0 %v2306
        %2329 = vmatprep.subr.bf16.mxu0 0
        %2330 = vmatpush1.bf16.msra.mxu0 %v2307
        %2331 = vmatprep.subr.bf16.mxu0 0
        %2332 = vmatpush1.bf16.msra.mxu0 %v2308
        %2333 = vmatprep.subr.bf16.mxu0 0
        %2334 = vmatpush1.bf16.msra.mxu0 0
        %2335 = vmatprep.subr.bf16.mxu0 0
        %2336 = vmatpush1.bf16.msra.mxu0 0
        %2337 = vmatprep.subr.bf16.mxu0 0
        %2338 = vmatpush1.bf16.msra.mxu0 0
        %2339 = vmatprep.subr.bf16.mxu0 0
        %2340 = vmatpush1.bf16.msra.mxu0 0
        %2341 = vmatprep.subr.bf16.mxu0 0
        %2342 = vmatpush1.bf16.msra.mxu0 0
        %2343 = vmatprep.subr.bf16.mxu0 0
        %2344 = vmatpush1.bf16.msra.mxu0 0
        %2345 = vmatprep.subr.bf16.mxu0 0
        %2346 = vmatpush1.bf16.msra.mxu0 0
        %2347 = vmatprep.subr.bf16.mxu0 0
        %2348 = vmatpush1.bf16.msra.mxu0 0
        %2349 = vmatprep.mubr.bf16.mxu0 0
        %2350 = vmatmul.mubr.bf16.gmra.mrb[0].mxu0 %v2245
        %v2351 = vpop.f32.mrb[0].mxu0
        %v2352 = vadd.f32 %v2267, %v2351
        %v2353 = vpop.f32.mrb[0].mxu0
        %v2354 = vpop.f32.mrb[0].mxu0
        %v2355 = vpop.f32.mrb[0].mxu0
        %2356 = vdwg.mxu0
        %v2357 = vadd.f32 %v2139, %v2352
        %2358 = vst.msk [vmem:[%s789] sm:$0xff] %vm1297, %v2357
        %s2359 = sand.u32 %s426, 1
        %s2360 = scalar_lea.sflag [#allocation7], %s2359
        %s2361 = sand.u32 %s426, 1
        %s2362 = smul.addr %s2361, 8
        %s2363 = scalar_lea.vmem [#allocation32], %s2362
        // Predicated region
        $region161: #{tpu_custom_call.1} parent=87 // pred_check
          %p2364 = pneg %p436
        $region162: #{tpu_custom_call.1} parent=87 // pred_check_branch
          %2366 = sbr.rel (%p2364) target = $region164
        $region163: #{tpu_custom_call.1} parent=87 // pred_region
          %s2368 = ssub.s32 128, 128
          %2369 = vsyncadd %s2360, %s2368
          %s2370 = sadd.s32 %s47, %s46
          %s2371 = smul.addr %s2370, 128
          %s2372 = scalar_lea.hbm %s17, %s2371
          %s2374 = sshll.u32 %s2363, 4
          %s2375 = int_to_ptr.vmem [resolvable:$true] %s2374
          %2377 = dma.vmem_to_hbm [thread:$0]  %s2375, 128, %s2372, %s2360
        $region164: #{tpu_custom_call.1} parent=87 // pred_fallthru
          _
      $region88: #{tpu_custom_call.1} parent=5 // pred_fallthru
        _
      %p2378 = scmp.le.s32.totalorder 2, %s37
      // Predicated region
      $region165: #{tpu_custom_call.1} parent=5 // pred_check
        %p2379 = pneg %p2378
      $region166: #{tpu_custom_call.1} parent=5 // pred_check_branch
        %2381 = sbr.rel (%p2379) target = $region168
      $region167: #{tpu_custom_call.1} parent=5 // pred_region
        %s2382 = ssub.s32 %s37, 2
        // Predicated region
        $region169: #{tpu_custom_call.1} parent=167 // pred_check
          %p2383 = pneg %p442
        $region170: #{tpu_custom_call.1} parent=167 // pred_check_branch
          %2385 = sbr.rel (%p2383) target = $region172
        $region171: #{tpu_custom_call.1} parent=167 // pred_region
          %s2386 = sand.u32 %s427, 1
          %s2387 = scalar_lea.sflag [#allocation7], %s2386
          %s2388 = sand.u32 %s427, 1
          %s2389 = smul.addr %s2388, 8
          %s2390 = scalar_lea.vmem [#allocation32], %s2389
          %2391 = dma.done %s2387, 128
        $region172: #{tpu_custom_call.1} parent=167 // pred_fallthru
          _
      $region168: #{tpu_custom_call.1} parent=5 // pred_fallthru
        _
    $region6: #{tpu_custom_call.1} parent=1 // loop_footer
      %s41 = sadd.s32 1, %s37
    $region7: #{tpu_custom_call.1} parent=1 // loop_footer_branch
      %36 = sbr.rel target = $region3
    $region8: #{tpu_custom_call.1} parent=1 // loop_exit
      _
    %2392 = vsyncpa [#allocation6], 1
    %s2393 = scalar_lea.sflag [#allocation6], 1
    %2394 = vsyncpa %s2393, 1
    %2395 = vsyncpa [#allocation9], 1
    %2396 = vsyncpa [#allocation12], 1
    %2397 = vsyncpa [#allocation15], 1
    %2398 = vsyncpa [#allocation18], 1
    %2399 = vsyncpa [#allocation21], 1
    %2400 = vsyncpa [#allocation24], 1
    %2401 = vsyncpa [#allocation27], 1
    %2402 = vsyncpa [#allocation30], 1
    %2403 = vsyncpa [#allocation7], 1
    %s2404 = scalar_lea.sflag [#allocation7], 1
    %2405 = vsyncpa %s2404, 1

</llo_original>
